<compile_context>
chip_gen: v7x
topology: tpu7x:2x2x1
jax: 0.10.0
libtpu: 0.0.40
codegen_flags: <defaults>
</compile_context>

<pallas_src>
import math

import jax
import jax.numpy as jnp
from jax import lax
from jax.experimental import pallas as pl
from jax.experimental.pallas import tpu as pltpu

# ----------------------------- model config (small, synthetic) --------------
B = 2           # batch
S = 8           # sequence length
T = B * S       # flattened token axis used inside the kernel
VOCAB = 64      # vocab size
H = 32          # hidden dim
N_HEADS = 4
HEAD_DIM = H // N_HEADS
FFN = 64        # intermediate dim
N_LAYERS = 2
LN_EPS = 1e-12  # DistilBERT layer-norm eps
NEG_INF = -1e9


# ----------------------------- in-kernel helpers -----------------------------
def _layernorm(x, g, b):
    mu = jnp.mean(x, axis=-1, keepdims=True)
    var = jnp.mean((x - mu) * (x - mu), axis=-1, keepdims=True)
    return (x - mu) * lax.rsqrt(var + LN_EPS) * g + b


def _gelu(x):
    # TODO(synk): DistilBERT uses exact erf GELU; tanh approximation is used
    # here since erf is not guaranteed to lower in Mosaic.
    c = math.sqrt(2.0 / math.pi)
    return 0.5 * x * (1.0 + jnp.tanh(c * (x + 0.044715 * x * x * x)))


# ----------------------------- fused encoder kernel --------------------------
def _encoder_kernel(emb_ref, bias_ref, embg_ref, embb_ref,
                    wq_ref, bq_ref, wkv_ref, bkv_ref, wo_ref, bo_ref,
                    ln1g_ref, ln1b_ref, w1_ref, b1_ref, w2_ref, b2_ref,
                    ln2g_ref, ln2b_ref, out_ref):
    scale = 1.0 / math.sqrt(HEAD_DIM)
    bias = bias_ref[...]                                         # (T, T) additive mask
    # embedding LayerNorm
    x = _layernorm(emb_ref[...], embg_ref[...], embb_ref[...])   # (T, H) f32

    # static unroll over layers: all weights already resident in VMEM, the
    # whole 2-layer body is visible to the scheduler (no grid-step boundary).
    for l in range(N_LAYERS):
        xb = x.astype(jnp.bfloat16)

        # ---- Q projection, token-major (T, H); 1/sqrt(d) folded in once ----
        q = (jnp.dot(xb, wq_ref[l], preferred_element_type=jnp.float32)
             + bq_ref[l]) * scale                                # (T, H) f32

        # ---- fused K/V projection in TRANSPOSED layout: (2H, T) -------------
        # NT matmul: Wkv (2H, H) . x^T  -> per-head slices below are
        # sublane-aligned 8-row selects instead of width-8 lane slices.
        kvT = lax.dot_general(wkv_ref[l], xb, (((1,), (1,)), ((), ())),
                              preferred_element_type=jnp.float32) + bkv_ref[l]

        # ---- multi-head attention over the flattened token axis ------------
        attn = jnp.zeros((T, H), jnp.float32)
        for h in range(N_HEADS):                       # static, tiny head count
            lo = h * HEAD_DIM
            q_h = q[:, lo:lo + HEAD_DIM].astype(jnp.bfloat16)            # (T, HD)
            kT_h = kvT[lo:lo + HEAD_DIM, :].astype(jnp.bfloat16)         # (HD, T)
            vT_h = kvT[H + lo:H + lo + HEAD_DIM, :].astype(jnp.bfloat16)  # (HD, T)

            # scores: (T, HD) @ (HD, T) -> (T, T), block-diagonal mask added
            s = jnp.dot(q_h, kT_h, preferred_element_type=jnp.float32) + bias
            s = s - jnp.max(s, axis=-1, keepdims=True)
            p = jnp.exp(s)
            p = p / jnp.sum(p, axis=-1, keepdims=True)

            # context: NT matmul p (T,T) . v_h -> (T, HD)
            ctx = lax.dot_general(p.astype(jnp.bfloat16), vT_h,
                                  (((1,), (1,)), ((), ())),
                                  preferred_element_type=jnp.float32)
            # accumulate through this head's Wo row-block (pre-split per head
            # in the wrapper -> no in-kernel slicing of Wo, no lane concat).
            attn = attn + jnp.dot(ctx.astype(jnp.bfloat16), wo_ref[l, h],
                                  preferred_element_type=jnp.float32)
        attn = attn + bo_ref[l]

        # ---- residual + LayerNorm ----
        h1 = _layernorm(x + attn, ln1g_ref[l], ln1b_ref[l])

        # ---- GELU FFN (bf16 MXU operands, f32 accumulation) ----
        f = jnp.dot(h1.astype(jnp.bfloat16), w1_ref[l],
                    preferred_element_type=jnp.float32) + b1_ref[l]
        f = _gelu(f)
        f = jnp.dot(f.astype(jnp.bfloat16), w2_ref[l],
                    preferred_element_type=jnp.float32) + b2_ref[l]

        # ---- residual + LayerNorm ----
        x = _layernorm(h1 + f, ln2g_ref[l], ln2b_ref[l])

    # ---- CLS extraction: two static row copies (rows 0 and S) --------------
    for b in range(B):
        out_ref[b:b + 1, :] = x[b * S:b * S + 1, :]


# ----------------------------- wrapper ---------------------------------------
def encoder_forward_fused(emb, bias2d, p):
    n_inputs = 18
    in_specs = [pl.BlockSpec(memory_space=pltpu.MemorySpace.VMEM)
                for _ in range(n_inputs)]
    # Total resident state (weights + activations) is << 1 MiB, so everything
    # (all layers) lives in VMEM on v5e/v6e/v7x; no grid, no vmem_limit needed.
    # TODO(synk): at real DistilBERT sizes (H=768, FFN=3072) stream per-layer
    # bf16 weights on a layer grid axis and set vmem_limit_bytes for v7x.
    return pl.pallas_call(
        _encoder_kernel,
        out_shape=jax.ShapeDtypeStruct((B, H), jnp.float32),
        in_specs=in_specs,
        out_specs=pl.BlockSpec(memory_space=pltpu.MemorySpace.VMEM),
    )(emb, bias2d,
      p['emb_ln_g'], p['emb_ln_b'],
      p['wq'], p['bq'], p['wkv'], p['bkv'], p['wo'], p['bo'],
      p['ln1_g'], p['ln1_b'], p['w1'], p['b1'], p['w2'], p['b2'],
      p['ln2_g'], p['ln2_b'])


@jax.jit
def text_encoder_forward(input_ids, attention_mask, params):
    """Returns last_hidden_state[:, 0, :]  -- shape (B, H), float32."""
    bsz, seq = input_ids.shape
    # Embedding gather + position add: plain-JAX glue, flattened to (T, H).
    word = params['word_emb'][input_ids]                    # (B, S, H)
    pos = params['pos_emb'][:seq][None]                     # (1, S, H)
    emb = (word + pos).astype(jnp.float32).reshape(bsz * seq, H)

    # Block-diagonal additive attention bias over the flattened token axis:
    # 0 where (same batch AND key not padded), -1e9 elsewhere. Computed ONCE.
    tok_batch = jnp.repeat(jnp.arange(bsz), seq)            # (T,)
    same_batch = tok_batch[:, None] == tok_batch[None, :]   # (T, T)
    key_valid = attention_mask.reshape(-1) > 0              # (T,)
    bias2d = jnp.where(same_batch & key_valid[None, :], 0.0, NEG_INF
                       ).astype(jnp.float32)                # (T, T)
    return encoder_forward_fused(emb, bias2d, params)


# ----------------------------- deterministic init -----------------------------
def init_params(key):
    def normal(k, shape, std=0.02, dtype=jnp.bfloat16):
        return (std * jax.random.normal(k, shape)).astype(dtype)

    keys = jax.random.split(key, 8)
    return {
        # embeddings / LN stay f32 (elementwise path)
        'word_emb': normal(keys[0], (VOCAB, H), dtype=jnp.float32),
        'pos_emb': normal(keys[1], (S, H), dtype=jnp.float32),
        'emb_ln_g': jnp.ones((1, H), jnp.float32),
        'emb_ln_b': jnp.zeros((1, H), jnp.float32),
        # per-layer weights stacked on a leading (N_LAYERS, ...) axis, bf16 for MXU.
        'wq':  normal(keys[2], (N_LAYERS, H, H)),                     # (in, out)
        'bq':  jnp.zeros((N_LAYERS, 1, H), jnp.float32),
        'wkv': normal(keys[3], (N_LAYERS, 2 * H, H)),                 # (out, in) fused K|V
        'bkv': jnp.zeros((N_LAYERS, 2 * H, 1), jnp.float32),          # column bias for (2H, T)
        'wo':  normal(keys[4], (N_LAYERS, N_HEADS, HEAD_DIM, H)),     # pre-split per head
        'bo':  jnp.zeros((N_LAYERS, 1, H), jnp.float32),
        'ln1_g': jnp.ones((N_LAYERS, 1, H), jnp.float32),
        'ln1_b': jnp.zeros((N_LAYERS, 1, H), jnp.float32),
        'w1': normal(keys[5], (N_LAYERS, H, FFN)),
        'b1': jnp.zeros((N_LAYERS, 1, FFN), jnp.float32),
        'w2': normal(keys[6], (N_LAYERS, FFN, H)),
        'b2': jnp.zeros((N_LAYERS, 1, H), jnp.float32),
        'ln2_g': jnp.ones((N_LAYERS, 1, H), jnp.float32),
        'ln2_b': jnp.zeros((N_LAYERS, 1, H), jnp.float32),
    }


# ----------------------------- main -------------------------------------------
if __name__ == "__main__":
    key = jax.random.PRNGKey(0)
    pkey, ikey = jax.random.split(key)
    params = init_params(pkey)

    input_ids = jax.random.randint(ikey, (B, S), 0, VOCAB, dtype=jnp.int32)
    # second example has last 3 tokens padded out (CLS token always unmasked)
    attention_mask = jnp.array(
        [[1] * S, [1] * (S - 3) + [0] * 3], dtype=jnp.int32)

    out = text_encoder_forward(input_ids, attention_mask, params)
    out = jax.block_until_ready(out)
    assert out.shape == (B, H) and out.dtype == jnp.float32
    assert bool(jnp.all(jnp.isfinite(out)))
    print("KERNEL_OK")
</pallas_src>

<mosaic_0001>
module attributes {stable_mosaic.version = 11 : i64} {
  func.func @_encoder_kernel(%arg0: memref<16x32xf32, #tpu.memory_space<vmem>>, %arg1: memref<16x16xf32, #tpu.memory_space<vmem>>, %arg2: memref<1x32xf32, #tpu.memory_space<vmem>>, %arg3: memref<1x32xf32, #tpu.memory_space<vmem>>, %arg4: memref<2x32x32xbf16, #tpu.memory_space<vmem>>, %arg5: memref<2x1x32xf32, #tpu.memory_space<vmem>>, %arg6: memref<2x64x32xbf16, #tpu.memory_space<vmem>>, %arg7: memref<2x64x1xf32, #tpu.memory_space<vmem>>, %arg8: memref<2x4x8x32xbf16, #tpu.memory_space<vmem>>, %arg9: memref<2x1x32xf32, #tpu.memory_space<vmem>>, %arg10: memref<2x1x32xf32, #tpu.memory_space<vmem>>, %arg11: memref<2x1x32xf32, #tpu.memory_space<vmem>>, %arg12: memref<2x32x64xbf16, #tpu.memory_space<vmem>>, %arg13: memref<2x1x64xf32, #tpu.memory_space<vmem>>, %arg14: memref<2x64x32xbf16, #tpu.memory_space<vmem>>, %arg15: memref<2x1x32xf32, #tpu.memory_space<vmem>>, %arg16: memref<2x1x32xf32, #tpu.memory_space<vmem>>, %arg17: memref<2x1x32xf32, #tpu.memory_space<vmem>>, %arg18: memref<2x32xf32, #tpu.memory_space<vmem>>) attributes {dimension_semantics = [], scalar_prefetch = 0 : i64, scratch_operands = 0 : i64, tpu.core_type = #tpu.core_type<tc>} {
    %c0 = arith.constant 0 : index
    %c0_0 = arith.constant 0 : index
    %0 = vector.load %arg1[%c0, %c0_0] : memref<16x16xf32, #tpu.memory_space<vmem>>, vector<16x16xf32>
    %c0_1 = arith.constant 0 : index
    %c0_2 = arith.constant 0 : index
    %1 = vector.load %arg0[%c0_1, %c0_2] : memref<16x32xf32, #tpu.memory_space<vmem>>, vector<16x32xf32>
    %c0_3 = arith.constant 0 : index
    %c0_4 = arith.constant 0 : index
    %2 = vector.load %arg2[%c0_3, %c0_4] : memref<1x32xf32, #tpu.memory_space<vmem>>, vector<1x32xf32>
    %c0_5 = arith.constant 0 : index
    %c0_6 = arith.constant 0 : index
    %3 = vector.load %arg3[%c0_5, %c0_6] : memref<1x32xf32, #tpu.memory_space<vmem>>, vector<1x32xf32>
    %cst = arith.constant dense<0.000000e+00> : vector<16xf32>
    %4 = vector.multi_reduction <add>, %1, %cst [1] : vector<16x32xf32> to vector<16xf32>
    %5 = vector.shape_cast %4 : vector<16xf32> to vector<16x1xf32>
    %cst_7 = arith.constant 3.200000e+01 : f32
    %6 = vector.broadcast %cst_7 : f32 to vector<16x1xf32>
    %7 = arith.divf %5, %6 : vector<16x1xf32>
    %8 = vector.broadcast %7 : vector<16x1xf32> to vector<16x32xf32>
    %9 = arith.subf %1, %8 : vector<16x32xf32>
    %10 = vector.broadcast %7 : vector<16x1xf32> to vector<16x32xf32>
    %11 = arith.subf %1, %10 : vector<16x32xf32>
    %12 = arith.mulf %9, %11 : vector<16x32xf32>
    %cst_8 = arith.constant dense<0.000000e+00> : vector<16xf32>
    %13 = vector.multi_reduction <add>, %12, %cst_8 [1] : vector<16x32xf32> to vector<16xf32>
    %14 = vector.shape_cast %13 : vector<16xf32> to vector<16x1xf32>
    %cst_9 = arith.constant 3.200000e+01 : f32
    %15 = vector.broadcast %cst_9 : f32 to vector<16x1xf32>
    %16 = arith.divf %14, %15 : vector<16x1xf32>
    %17 = vector.broadcast %7 : vector<16x1xf32> to vector<16x32xf32>
    %18 = arith.subf %1, %17 : vector<16x32xf32>
    %cst_10 = arith.constant 9.99999996E-13 : f32
    %19 = vector.broadcast %cst_10 : f32 to vector<16x1xf32>
    %20 = arith.addf %16, %19 : vector<16x1xf32>
    %21 = math.rsqrt %20 : vector<16x1xf32>
    %22 = vector.broadcast %21 : vector<16x1xf32> to vector<16x32xf32>
    %23 = arith.mulf %18, %22 : vector<16x32xf32>
    %24 = vector.broadcast %2 : vector<1x32xf32> to vector<16x32xf32>
    %25 = arith.mulf %23, %24 : vector<16x32xf32>
    %26 = vector.broadcast %3 : vector<1x32xf32> to vector<16x32xf32>
    %27 = arith.addf %25, %26 : vector<16x32xf32>
    %28 = arith.truncf %27 : vector<16x32xf32> to vector<16x32xbf16>
    %c0_11 = arith.constant 0 : index
    %c0_12 = arith.constant 0 : index
    %c0_13 = arith.constant 0 : index
    %29 = vector.load %arg4[%c0_11, %c0_12, %c0_13] : memref<2x32x32xbf16, #tpu.memory_space<vmem>>, vector<1x32x32xbf16>
    %30 = vector.shape_cast %29 : vector<1x32x32xbf16> to vector<32x32xbf16>
    %cst_14 = arith.constant dense<0.000000e+00> : vector<16x32xf32>
    %31 = tpu.matmul %28, %30, %cst_14 {dimension_numbers = #tpu.dot_dimension_numbers<[1], [0], [0], [1], [0, 0, 1, 1], [], []>} : vector<16x32xbf16>, vector<32x32xbf16>, vector<16x32xf32> -> vector<16x32xf32>
    %c0_15 = arith.constant 0 : index
    %c0_16 = arith.constant 0 : index
    %c0_17 = arith.constant 0 : index
    %32 = vector.load %arg5[%c0_15, %c0_16, %c0_17] : memref<2x1x32xf32, #tpu.memory_space<vmem>>, vector<1x1x32xf32>
    %33 = vector.shape_cast %32 : vector<1x1x32xf32> to vector<1x32xf32>
    %34 = vector.broadcast %33 : vector<1x32xf32> to vector<16x32xf32>
    %35 = arith.addf %31, %34 : vector<16x32xf32>
    %cst_18 = arith.constant 0.353553385 : f32
    %36 = vector.broadcast %cst_18 : f32 to vector<16x32xf32>
    %37 = arith.mulf %35, %36 : vector<16x32xf32>
    %c0_19 = arith.constant 0 : index
    %c0_20 = arith.constant 0 : index
    %c0_21 = arith.constant 0 : index
    %38 = vector.load %arg6[%c0_19, %c0_20, %c0_21] : memref<2x64x32xbf16, #tpu.memory_space<vmem>>, vector<1x64x32xbf16>
    %39 = vector.shape_cast %38 : vector<1x64x32xbf16> to vector<64x32xbf16>
    %cst_22 = arith.constant dense<0.000000e+00> : vector<64x16xf32>
    %40 = tpu.matmul %39, %28, %cst_22 {dimension_numbers = #tpu.dot_dimension_numbers<[1], [1], [0], [0], [0, 0, 1, 0], [], []>} : vector<64x32xbf16>, vector<16x32xbf16>, vector<64x16xf32> -> vector<64x16xf32>
    %c0_23 = arith.constant 0 : index
    %c0_24 = arith.constant 0 : index
    %c0_25 = arith.constant 0 : index
    %41 = vector.load %arg7[%c0_23, %c0_24, %c0_25] : memref<2x64x1xf32, #tpu.memory_space<vmem>>, vector<1x64x1xf32>
    %42 = vector.shape_cast %41 : vector<1x64x1xf32> to vector<64x1xf32>
    %43 = vector.broadcast %42 : vector<64x1xf32> to vector<64x16xf32>
    %44 = arith.addf %40, %43 : vector<64x16xf32>
    %cst_26 = arith.constant 0.000000e+00 : f32
    %45 = vector.broadcast %cst_26 : f32 to vector<16x32xf32>
    %46 = vector.extract_strided_slice %37 {offsets = [0, 0], sizes = [16, 8], strides = [1, 1]} : vector<16x32xf32> to vector<16x8xf32>
    %47 = arith.truncf %46 : vector<16x8xf32> to vector<16x8xbf16>
    %48 = vector.extract_strided_slice %44 {offsets = [0, 0], sizes = [8, 16], strides = [1, 1]} : vector<64x16xf32> to vector<8x16xf32>
    %49 = arith.truncf %48 : vector<8x16xf32> to vector<8x16xbf16>
    %50 = vector.extract_strided_slice %44 {offsets = [32, 0], sizes = [8, 16], strides = [1, 1]} : vector<64x16xf32> to vector<8x16xf32>
    %51 = arith.truncf %50 : vector<8x16xf32> to vector<8x16xbf16>
    %cst_27 = arith.constant dense<0.000000e+00> : vector<16x16xf32>
    %52 = tpu.matmul %47, %49, %cst_27 {dimension_numbers = #tpu.dot_dimension_numbers<[1], [0], [0], [1], [0, 0, 1, 1], [], []>} : vector<16x8xbf16>, vector<8x16xbf16>, vector<16x16xf32> -> vector<16x16xf32>
    %53 = arith.addf %52, %0 : vector<16x16xf32>
    %cst_28 = arith.constant dense<0xFF800000> : vector<16xf32>
    %54 = vector.multi_reduction <maximumf>, %53, %cst_28 [1] : vector<16x16xf32> to vector<16xf32>
    %55 = vector.shape_cast %54 : vector<16xf32> to vector<16x1xf32>
    %56 = vector.broadcast %55 : vector<16x1xf32> to vector<16x16xf32>
    %57 = arith.subf %53, %56 : vector<16x16xf32>
    %58 = math.exp %57 : vector<16x16xf32>
    %cst_29 = arith.constant dense<0.000000e+00> : vector<16xf32>
    %59 = vector.multi_reduction <add>, %58, %cst_29 [1] : vector<16x16xf32> to vector<16xf32>
    %60 = vector.shape_cast %59 : vector<16xf32> to vector<16x1xf32>
    %61 = vector.broadcast %60 : vector<16x1xf32> to vector<16x16xf32>
    %62 = arith.divf %58, %61 : vector<16x16xf32>
    %63 = arith.truncf %62 : vector<16x16xf32> to vector<16x16xbf16>
    %cst_30 = arith.constant dense<0.000000e+00> : vector<16x8xf32>
    %64 = tpu.matmul %63, %51, %cst_30 {dimension_numbers = #tpu.dot_dimension_numbers<[1], [1], [0], [0], [0, 0, 1, 0], [], []>} : vector<16x16xbf16>, vector<8x16xbf16>, vector<16x8xf32> -> vector<16x8xf32>
    %65 = arith.truncf %64 : vector<16x8xf32> to vector<16x8xbf16>
    %c0_31 = arith.constant 0 : index
    %c0_32 = arith.constant 0 : index
    %c0_33 = arith.constant 0 : index
    %c0_34 = arith.constant 0 : index
    %66 = vector.load %arg8[%c0_31, %c0_32, %c0_33, %c0_34] : memref<2x4x8x32xbf16, #tpu.memory_space<vmem>>, vector<1x1x8x32xbf16>
    %67 = vector.shape_cast %66 : vector<1x1x8x32xbf16> to vector<8x32xbf16>
    %cst_35 = arith.constant dense<0.000000e+00> : vector<16x32xf32>
    %68 = tpu.matmul %65, %67, %cst_35 {dimension_numbers = #tpu.dot_dimension_numbers<[1], [0], [0], [1], [0, 0, 1, 1], [], []>} : vector<16x8xbf16>, vector<8x32xbf16>, vector<16x32xf32> -> vector<16x32xf32>
    %69 = arith.addf %45, %68 : vector<16x32xf32>
    %70 = vector.extract_strided_slice %37 {offsets = [0, 8], sizes = [16, 8], strides = [1, 1]} : vector<16x32xf32> to vector<16x8xf32>
    %71 = arith.truncf %70 : vector<16x8xf32> to vector<16x8xbf16>
    %72 = vector.extract_strided_slice %44 {offsets = [8, 0], sizes = [8, 16], strides = [1, 1]} : vector<64x16xf32> to vector<8x16xf32>
    %73 = arith.truncf %72 : vector<8x16xf32> to vector<8x16xbf16>
    %74 = vector.extract_strided_slice %44 {offsets = [40, 0], sizes = [8, 16], strides = [1, 1]} : vector<64x16xf32> to vector<8x16xf32>
    %75 = arith.truncf %74 : vector<8x16xf32> to vector<8x16xbf16>
    %cst_36 = arith.constant dense<0.000000e+00> : vector<16x16xf32>
    %76 = tpu.matmul %71, %73, %cst_36 {dimension_numbers = #tpu.dot_dimension_numbers<[1], [0], [0], [1], [0, 0, 1, 1], [], []>} : vector<16x8xbf16>, vector<8x16xbf16>, vector<16x16xf32> -> vector<16x16xf32>
    %77 = arith.addf %76, %0 : vector<16x16xf32>
    %cst_37 = arith.constant dense<0xFF800000> : vector<16xf32>
    %78 = vector.multi_reduction <maximumf>, %77, %cst_37 [1] : vector<16x16xf32> to vector<16xf32>
    %79 = vector.shape_cast %78 : vector<16xf32> to vector<16x1xf32>
    %80 = vector.broadcast %79 : vector<16x1xf32> to vector<16x16xf32>
    %81 = arith.subf %77, %80 : vector<16x16xf32>
    %82 = math.exp %81 : vector<16x16xf32>
    %cst_38 = arith.constant dense<0.000000e+00> : vector<16xf32>
    %83 = vector.multi_reduction <add>, %82, %cst_38 [1] : vector<16x16xf32> to vector<16xf32>
    %84 = vector.shape_cast %83 : vector<16xf32> to vector<16x1xf32>
    %85 = vector.broadcast %84 : vector<16x1xf32> to vector<16x16xf32>
    %86 = arith.divf %82, %85 : vector<16x16xf32>
    %87 = arith.truncf %86 : vector<16x16xf32> to vector<16x16xbf16>
    %cst_39 = arith.constant dense<0.000000e+00> : vector<16x8xf32>
    %88 = tpu.matmul %87, %75, %cst_39 {dimension_numbers = #tpu.dot_dimension_numbers<[1], [1], [0], [0], [0, 0, 1, 0], [], []>} : vector<16x16xbf16>, vector<8x16xbf16>, vector<16x8xf32> -> vector<16x8xf32>
    %89 = arith.truncf %88 : vector<16x8xf32> to vector<16x8xbf16>
    %c0_40 = arith.constant 0 : index
    %c1 = arith.constant 1 : index
    %c0_41 = arith.constant 0 : index
    %c0_42 = arith.constant 0 : index
    %90 = vector.load %arg8[%c0_40, %c1, %c0_41, %c0_42] : memref<2x4x8x32xbf16, #tpu.memory_space<vmem>>, vector<1x1x8x32xbf16>
    %91 = vector.shape_cast %90 : vector<1x1x8x32xbf16> to vector<8x32xbf16>
    %cst_43 = arith.constant dense<0.000000e+00> : vector<16x32xf32>
    %92 = tpu.matmul %89, %91, %cst_43 {dimension_numbers = #tpu.dot_dimension_numbers<[1], [0], [0], [1], [0, 0, 1, 1], [], []>} : vector<16x8xbf16>, vector<8x32xbf16>, vector<16x32xf32> -> vector<16x32xf32>
    %93 = arith.addf %69, %92 : vector<16x32xf32>
    %94 = vector.extract_strided_slice %37 {offsets = [0, 16], sizes = [16, 8], strides = [1, 1]} : vector<16x32xf32> to vector<16x8xf32>
    %95 = arith.truncf %94 : vector<16x8xf32> to vector<16x8xbf16>
    %96 = vector.extract_strided_slice %44 {offsets = [16, 0], sizes = [8, 16], strides = [1, 1]} : vector<64x16xf32> to vector<8x16xf32>
    %97 = arith.truncf %96 : vector<8x16xf32> to vector<8x16xbf16>
    %98 = vector.extract_strided_slice %44 {offsets = [48, 0], sizes = [8, 16], strides = [1, 1]} : vector<64x16xf32> to vector<8x16xf32>
    %99 = arith.truncf %98 : vector<8x16xf32> to vector<8x16xbf16>
    %cst_44 = arith.constant dense<0.000000e+00> : vector<16x16xf32>
    %100 = tpu.matmul %95, %97, %cst_44 {dimension_numbers = #tpu.dot_dimension_numbers<[1], [0], [0], [1], [0, 0, 1, 1], [], []>} : vector<16x8xbf16>, vector<8x16xbf16>, vector<16x16xf32> -> vector<16x16xf32>
    %101 = arith.addf %100, %0 : vector<16x16xf32>
    %cst_45 = arith.constant dense<0xFF800000> : vector<16xf32>
    %102 = vector.multi_reduction <maximumf>, %101, %cst_45 [1] : vector<16x16xf32> to vector<16xf32>
    %103 = vector.shape_cast %102 : vector<16xf32> to vector<16x1xf32>
    %104 = vector.broadcast %103 : vector<16x1xf32> to vector<16x16xf32>
    %105 = arith.subf %101, %104 : vector<16x16xf32>
    %106 = math.exp %105 : vector<16x16xf32>
    %cst_46 = arith.constant dense<0.000000e+00> : vector<16xf32>
    %107 = vector.multi_reduction <add>, %106, %cst_46 [1] : vector<16x16xf32> to vector<16xf32>
    %108 = vector.shape_cast %107 : vector<16xf32> to vector<16x1xf32>
    %109 = vector.broadcast %108 : vector<16x1xf32> to vector<16x16xf32>
    %110 = arith.divf %106, %109 : vector<16x16xf32>
    %111 = arith.truncf %110 : vector<16x16xf32> to vector<16x16xbf16>
    %cst_47 = arith.constant dense<0.000000e+00> : vector<16x8xf32>
    %112 = tpu.matmul %111, %99, %cst_47 {dimension_numbers = #tpu.dot_dimension_numbers<[1], [1], [0], [0], [0, 0, 1, 0], [], []>} : vector<16x16xbf16>, vector<8x16xbf16>, vector<16x8xf32> -> vector<16x8xf32>
    %113 = arith.truncf %112 : vector<16x8xf32> to vector<16x8xbf16>
    %c0_48 = arith.constant 0 : index
    %c2 = arith.constant 2 : index
    %c0_49 = arith.constant 0 : index
    %c0_50 = arith.constant 0 : index
    %114 = vector.load %arg8[%c0_48, %c2, %c0_49, %c0_50] : memref<2x4x8x32xbf16, #tpu.memory_space<vmem>>, vector<1x1x8x32xbf16>
    %115 = vector.shape_cast %114 : vector<1x1x8x32xbf16> to vector<8x32xbf16>
    %cst_51 = arith.constant dense<0.000000e+00> : vector<16x32xf32>
    %116 = tpu.matmul %113, %115, %cst_51 {dimension_numbers = #tpu.dot_dimension_numbers<[1], [0], [0], [1], [0, 0, 1, 1], [], []>} : vector<16x8xbf16>, vector<8x32xbf16>, vector<16x32xf32> -> vector<16x32xf32>
    %117 = arith.addf %93, %116 : vector<16x32xf32>
    %118 = vector.extract_strided_slice %37 {offsets = [0, 24], sizes = [16, 8], strides = [1, 1]} : vector<16x32xf32> to vector<16x8xf32>
    %119 = arith.truncf %118 : vector<16x8xf32> to vector<16x8xbf16>
    %120 = vector.extract_strided_slice %44 {offsets = [24, 0], sizes = [8, 16], strides = [1, 1]} : vector<64x16xf32> to vector<8x16xf32>
    %121 = arith.truncf %120 : vector<8x16xf32> to vector<8x16xbf16>
    %122 = vector.extract_strided_slice %44 {offsets = [56, 0], sizes = [8, 16], strides = [1, 1]} : vector<64x16xf32> to vector<8x16xf32>
    %123 = arith.truncf %122 : vector<8x16xf32> to vector<8x16xbf16>
    %cst_52 = arith.constant dense<0.000000e+00> : vector<16x16xf32>
    %124 = tpu.matmul %119, %121, %cst_52 {dimension_numbers = #tpu.dot_dimension_numbers<[1], [0], [0], [1], [0, 0, 1, 1], [], []>} : vector<16x8xbf16>, vector<8x16xbf16>, vector<16x16xf32> -> vector<16x16xf32>
    %125 = arith.addf %124, %0 : vector<16x16xf32>
    %cst_53 = arith.constant dense<0xFF800000> : vector<16xf32>
    %126 = vector.multi_reduction <maximumf>, %125, %cst_53 [1] : vector<16x16xf32> to vector<16xf32>
    %127 = vector.shape_cast %126 : vector<16xf32> to vector<16x1xf32>
    %128 = vector.broadcast %127 : vector<16x1xf32> to vector<16x16xf32>
    %129 = arith.subf %125, %128 : vector<16x16xf32>
    %130 = math.exp %129 : vector<16x16xf32>
    %cst_54 = arith.constant dense<0.000000e+00> : vector<16xf32>
    %131 = vector.multi_reduction <add>, %130, %cst_54 [1] : vector<16x16xf32> to vector<16xf32>
    %132 = vector.shape_cast %131 : vector<16xf32> to vector<16x1xf32>
    %133 = vector.broadcast %132 : vector<16x1xf32> to vector<16x16xf32>
    %134 = arith.divf %130, %133 : vector<16x16xf32>
    %135 = arith.truncf %134 : vector<16x16xf32> to vector<16x16xbf16>
    %cst_55 = arith.constant dense<0.000000e+00> : vector<16x8xf32>
    %136 = tpu.matmul %135, %123, %cst_55 {dimension_numbers = #tpu.dot_dimension_numbers<[1], [1], [0], [0], [0, 0, 1, 0], [], []>} : vector<16x16xbf16>, vector<8x16xbf16>, vector<16x8xf32> -> vector<16x8xf32>
    %137 = arith.truncf %136 : vector<16x8xf32> to vector<16x8xbf16>
    %c0_56 = arith.constant 0 : index
    %c3 = arith.constant 3 : index
    %c0_57 = arith.constant 0 : index
    %c0_58 = arith.constant 0 : index
    %138 = vector.load %arg8[%c0_56, %c3, %c0_57, %c0_58] : memref<2x4x8x32xbf16, #tpu.memory_space<vmem>>, vector<1x1x8x32xbf16>
    %139 = vector.shape_cast %138 : vector<1x1x8x32xbf16> to vector<8x32xbf16>
    %cst_59 = arith.constant dense<0.000000e+00> : vector<16x32xf32>
    %140 = tpu.matmul %137, %139, %cst_59 {dimension_numbers = #tpu.dot_dimension_numbers<[1], [0], [0], [1], [0, 0, 1, 1], [], []>} : vector<16x8xbf16>, vector<8x32xbf16>, vector<16x32xf32> -> vector<16x32xf32>
    %141 = arith.addf %117, %140 : vector<16x32xf32>
    %c0_60 = arith.constant 0 : index
    %c0_61 = arith.constant 0 : index
    %c0_62 = arith.constant 0 : index
    %142 = vector.load %arg9[%c0_60, %c0_61, %c0_62] : memref<2x1x32xf32, #tpu.memory_space<vmem>>, vector<1x1x32xf32>
    %143 = vector.shape_cast %142 : vector<1x1x32xf32> to vector<1x32xf32>
    %144 = vector.broadcast %143 : vector<1x32xf32> to vector<16x32xf32>
    %145 = arith.addf %141, %144 : vector<16x32xf32>
    %146 = arith.addf %27, %145 : vector<16x32xf32>
    %c0_63 = arith.constant 0 : index
    %c0_64 = arith.constant 0 : index
    %c0_65 = arith.constant 0 : index
    %147 = vector.load %arg10[%c0_63, %c0_64, %c0_65] : memref<2x1x32xf32, #tpu.memory_space<vmem>>, vector<1x1x32xf32>
    %148 = vector.shape_cast %147 : vector<1x1x32xf32> to vector<1x32xf32>
    %c0_66 = arith.constant 0 : index
    %c0_67 = arith.constant 0 : index
    %c0_68 = arith.constant 0 : index
    %149 = vector.load %arg11[%c0_66, %c0_67, %c0_68] : memref<2x1x32xf32, #tpu.memory_space<vmem>>, vector<1x1x32xf32>
    %150 = vector.shape_cast %149 : vector<1x1x32xf32> to vector<1x32xf32>
    %cst_69 = arith.constant dense<0.000000e+00> : vector<16xf32>
    %151 = vector.multi_reduction <add>, %146, %cst_69 [1] : vector<16x32xf32> to vector<16xf32>
    %152 = vector.shape_cast %151 : vector<16xf32> to vector<16x1xf32>
    %cst_70 = arith.constant 3.200000e+01 : f32
    %153 = vector.broadcast %cst_70 : f32 to vector<16x1xf32>
    %154 = arith.divf %152, %153 : vector<16x1xf32>
    %155 = vector.broadcast %154 : vector<16x1xf32> to vector<16x32xf32>
    %156 = arith.subf %146, %155 : vector<16x32xf32>
    %157 = vector.broadcast %154 : vector<16x1xf32> to vector<16x32xf32>
    %158 = arith.subf %146, %157 : vector<16x32xf32>
    %159 = arith.mulf %156, %158 : vector<16x32xf32>
    %cst_71 = arith.constant dense<0.000000e+00> : vector<16xf32>
    %160 = vector.multi_reduction <add>, %159, %cst_71 [1] : vector<16x32xf32> to vector<16xf32>
    %161 = vector.shape_cast %160 : vector<16xf32> to vector<16x1xf32>
    %cst_72 = arith.constant 3.200000e+01 : f32
    %162 = vector.broadcast %cst_72 : f32 to vector<16x1xf32>
    %163 = arith.divf %161, %162 : vector<16x1xf32>
    %164 = vector.broadcast %154 : vector<16x1xf32> to vector<16x32xf32>
    %165 = arith.subf %146, %164 : vector<16x32xf32>
    %cst_73 = arith.constant 9.99999996E-13 : f32
    %166 = vector.broadcast %cst_73 : f32 to vector<16x1xf32>
    %167 = arith.addf %163, %166 : vector<16x1xf32>
    %168 = math.rsqrt %167 : vector<16x1xf32>
    %169 = vector.broadcast %168 : vector<16x1xf32> to vector<16x32xf32>
    %170 = arith.mulf %165, %169 : vector<16x32xf32>
    %171 = vector.broadcast %148 : vector<1x32xf32> to vector<16x32xf32>
    %172 = arith.mulf %170, %171 : vector<16x32xf32>
    %173 = vector.broadcast %150 : vector<1x32xf32> to vector<16x32xf32>
    %174 = arith.addf %172, %173 : vector<16x32xf32>
    %175 = arith.truncf %174 : vector<16x32xf32> to vector<16x32xbf16>
    %c0_74 = arith.constant 0 : index
    %c0_75 = arith.constant 0 : index
    %c0_76 = arith.constant 0 : index
    %176 = vector.load %arg12[%c0_74, %c0_75, %c0_76] : memref<2x32x64xbf16, #tpu.memory_space<vmem>>, vector<1x32x64xbf16>
    %177 = vector.shape_cast %176 : vector<1x32x64xbf16> to vector<32x64xbf16>
    %cst_77 = arith.constant dense<0.000000e+00> : vector<16x64xf32>
    %178 = tpu.matmul %175, %177, %cst_77 {dimension_numbers = #tpu.dot_dimension_numbers<[1], [0], [0], [1], [0, 0, 1, 1], [], []>} : vector<16x32xbf16>, vector<32x64xbf16>, vector<16x64xf32> -> vector<16x64xf32>
    %c0_78 = arith.constant 0 : index
    %c0_79 = arith.constant 0 : index
    %c0_80 = arith.constant 0 : index
    %179 = vector.load %arg13[%c0_78, %c0_79, %c0_80] : memref<2x1x64xf32, #tpu.memory_space<vmem>>, vector<1x1x64xf32>
    %180 = vector.shape_cast %179 : vector<1x1x64xf32> to vector<1x64xf32>
    %181 = vector.broadcast %180 : vector<1x64xf32> to vector<16x64xf32>
    %182 = arith.addf %178, %181 : vector<16x64xf32>
    %cst_81 = arith.constant 5.000000e-01 : f32
    %183 = vector.broadcast %cst_81 : f32 to vector<16x64xf32>
    %184 = arith.mulf %183, %182 : vector<16x64xf32>
    %cst_82 = arith.constant 4.471500e-02 : f32
    %185 = vector.broadcast %cst_82 : f32 to vector<16x64xf32>
    %186 = arith.mulf %185, %182 : vector<16x64xf32>
    %187 = arith.mulf %186, %182 : vector<16x64xf32>
    %188 = arith.mulf %187, %182 : vector<16x64xf32>
    %189 = arith.addf %182, %188 : vector<16x64xf32>
    %cst_83 = arith.constant 0.797884583 : f32
    %190 = vector.broadcast %cst_83 : f32 to vector<16x64xf32>
    %191 = arith.mulf %190, %189 : vector<16x64xf32>
    %192 = math.tanh %191 : vector<16x64xf32>
    %cst_84 = arith.constant 1.000000e+00 : f32
    %193 = vector.broadcast %cst_84 : f32 to vector<16x64xf32>
    %194 = arith.addf %193, %192 : vector<16x64xf32>
    %195 = arith.mulf %184, %194 : vector<16x64xf32>
    %196 = arith.truncf %195 : vector<16x64xf32> to vector<16x64xbf16>
    %c0_85 = arith.constant 0 : index
    %c0_86 = arith.constant 0 : index
    %c0_87 = arith.constant 0 : index
    %197 = vector.load %arg14[%c0_85, %c0_86, %c0_87] : memref<2x64x32xbf16, #tpu.memory_space<vmem>>, vector<1x64x32xbf16>
    %198 = vector.shape_cast %197 : vector<1x64x32xbf16> to vector<64x32xbf16>
    %cst_88 = arith.constant dense<0.000000e+00> : vector<16x32xf32>
    %199 = tpu.matmul %196, %198, %cst_88 {dimension_numbers = #tpu.dot_dimension_numbers<[1], [0], [0], [1], [0, 0, 1, 1], [], []>} : vector<16x64xbf16>, vector<64x32xbf16>, vector<16x32xf32> -> vector<16x32xf32>
    %c0_89 = arith.constant 0 : index
    %c0_90 = arith.constant 0 : index
    %c0_91 = arith.constant 0 : index
    %200 = vector.load %arg15[%c0_89, %c0_90, %c0_91] : memref<2x1x32xf32, #tpu.memory_space<vmem>>, vector<1x1x32xf32>
    %201 = vector.shape_cast %200 : vector<1x1x32xf32> to vector<1x32xf32>
    %202 = vector.broadcast %201 : vector<1x32xf32> to vector<16x32xf32>
    %203 = arith.addf %199, %202 : vector<16x32xf32>
    %204 = arith.addf %174, %203 : vector<16x32xf32>
    %c0_92 = arith.constant 0 : index
    %c0_93 = arith.constant 0 : index
    %c0_94 = arith.constant 0 : index
    %205 = vector.load %arg16[%c0_92, %c0_93, %c0_94] : memref<2x1x32xf32, #tpu.memory_space<vmem>>, vector<1x1x32xf32>
    %206 = vector.shape_cast %205 : vector<1x1x32xf32> to vector<1x32xf32>
    %c0_95 = arith.constant 0 : index
    %c0_96 = arith.constant 0 : index
    %c0_97 = arith.constant 0 : index
    %207 = vector.load %arg17[%c0_95, %c0_96, %c0_97] : memref<2x1x32xf32, #tpu.memory_space<vmem>>, vector<1x1x32xf32>
    %208 = vector.shape_cast %207 : vector<1x1x32xf32> to vector<1x32xf32>
    %cst_98 = arith.constant dense<0.000000e+00> : vector<16xf32>
    %209 = vector.multi_reduction <add>, %204, %cst_98 [1] : vector<16x32xf32> to vector<16xf32>
    %210 = vector.shape_cast %209 : vector<16xf32> to vector<16x1xf32>
    %cst_99 = arith.constant 3.200000e+01 : f32
    %211 = vector.broadcast %cst_99 : f32 to vector<16x1xf32>
    %212 = arith.divf %210, %211 : vector<16x1xf32>
    %213 = vector.broadcast %212 : vector<16x1xf32> to vector<16x32xf32>
    %214 = arith.subf %204, %213 : vector<16x32xf32>
    %215 = vector.broadcast %212 : vector<16x1xf32> to vector<16x32xf32>
    %216 = arith.subf %204, %215 : vector<16x32xf32>
    %217 = arith.mulf %214, %216 : vector<16x32xf32>
    %cst_100 = arith.constant dense<0.000000e+00> : vector<16xf32>
    %218 = vector.multi_reduction <add>, %217, %cst_100 [1] : vector<16x32xf32> to vector<16xf32>
    %219 = vector.shape_cast %218 : vector<16xf32> to vector<16x1xf32>
    %cst_101 = arith.constant 3.200000e+01 : f32
    %220 = vector.broadcast %cst_101 : f32 to vector<16x1xf32>
    %221 = arith.divf %219, %220 : vector<16x1xf32>
    %222 = vector.broadcast %212 : vector<16x1xf32> to vector<16x32xf32>
    %223 = arith.subf %204, %222 : vector<16x32xf32>
    %cst_102 = arith.constant 9.99999996E-13 : f32
    %224 = vector.broadcast %cst_102 : f32 to vector<16x1xf32>
    %225 = arith.addf %221, %224 : vector<16x1xf32>
    %226 = math.rsqrt %225 : vector<16x1xf32>
    %227 = vector.broadcast %226 : vector<16x1xf32> to vector<16x32xf32>
    %228 = arith.mulf %223, %227 : vector<16x32xf32>
    %229 = vector.broadcast %206 : vector<1x32xf32> to vector<16x32xf32>
    %230 = arith.mulf %228, %229 : vector<16x32xf32>
    %231 = vector.broadcast %208 : vector<1x32xf32> to vector<16x32xf32>
    %232 = arith.addf %230, %231 : vector<16x32xf32>
    %233 = arith.truncf %232 : vector<16x32xf32> to vector<16x32xbf16>
    %c1_103 = arith.constant 1 : index
    %c0_104 = arith.constant 0 : index
    %c0_105 = arith.constant 0 : index
    %234 = vector.load %arg4[%c1_103, %c0_104, %c0_105] : memref<2x32x32xbf16, #tpu.memory_space<vmem>>, vector<1x32x32xbf16>
    %235 = vector.shape_cast %234 : vector<1x32x32xbf16> to vector<32x32xbf16>
    %cst_106 = arith.constant dense<0.000000e+00> : vector<16x32xf32>
    %236 = tpu.matmul %233, %235, %cst_106 {dimension_numbers = #tpu.dot_dimension_numbers<[1], [0], [0], [1], [0, 0, 1, 1], [], []>} : vector<16x32xbf16>, vector<32x32xbf16>, vector<16x32xf32> -> vector<16x32xf32>
    %c1_107 = arith.constant 1 : index
    %c0_108 = arith.constant 0 : index
    %c0_109 = arith.constant 0 : index
    %237 = vector.load %arg5[%c1_107, %c0_108, %c0_109] : memref<2x1x32xf32, #tpu.memory_space<vmem>>, vector<1x1x32xf32>
    %238 = vector.shape_cast %237 : vector<1x1x32xf32> to vector<1x32xf32>
    %239 = vector.broadcast %238 : vector<1x32xf32> to vector<16x32xf32>
    %240 = arith.addf %236, %239 : vector<16x32xf32>
    %cst_110 = arith.constant 0.353553385 : f32
    %241 = vector.broadcast %cst_110 : f32 to vector<16x32xf32>
    %242 = arith.mulf %240, %241 : vector<16x32xf32>
    %c1_111 = arith.constant 1 : index
    %c0_112 = arith.constant 0 : index
    %c0_113 = arith.constant 0 : index
    %243 = vector.load %arg6[%c1_111, %c0_112, %c0_113] : memref<2x64x32xbf16, #tpu.memory_space<vmem>>, vector<1x64x32xbf16>
    %244 = vector.shape_cast %243 : vector<1x64x32xbf16> to vector<64x32xbf16>
    %cst_114 = arith.constant dense<0.000000e+00> : vector<64x16xf32>
    %245 = tpu.matmul %244, %233, %cst_114 {dimension_numbers = #tpu.dot_dimension_numbers<[1], [1], [0], [0], [0, 0, 1, 0], [], []>} : vector<64x32xbf16>, vector<16x32xbf16>, vector<64x16xf32> -> vector<64x16xf32>
    %c1_115 = arith.constant 1 : index
    %c0_116 = arith.constant 0 : index
    %c0_117 = arith.constant 0 : index
    %246 = vector.load %arg7[%c1_115, %c0_116, %c0_117] : memref<2x64x1xf32, #tpu.memory_space<vmem>>, vector<1x64x1xf32>
    %247 = vector.shape_cast %246 : vector<1x64x1xf32> to vector<64x1xf32>
    %248 = vector.broadcast %247 : vector<64x1xf32> to vector<64x16xf32>
    %249 = arith.addf %245, %248 : vector<64x16xf32>
    %cst_118 = arith.constant 0.000000e+00 : f32
    %250 = vector.broadcast %cst_118 : f32 to vector<16x32xf32>
    %251 = vector.extract_strided_slice %242 {offsets = [0, 0], sizes = [16, 8], strides = [1, 1]} : vector<16x32xf32> to vector<16x8xf32>
    %252 = arith.truncf %251 : vector<16x8xf32> to vector<16x8xbf16>
    %253 = vector.extract_strided_slice %249 {offsets = [0, 0], sizes = [8, 16], strides = [1, 1]} : vector<64x16xf32> to vector<8x16xf32>
    %254 = arith.truncf %253 : vector<8x16xf32> to vector<8x16xbf16>
    %255 = vector.extract_strided_slice %249 {offsets = [32, 0], sizes = [8, 16], strides = [1, 1]} : vector<64x16xf32> to vector<8x16xf32>
    %256 = arith.truncf %255 : vector<8x16xf32> to vector<8x16xbf16>
    %cst_119 = arith.constant dense<0.000000e+00> : vector<16x16xf32>
    %257 = tpu.matmul %252, %254, %cst_119 {dimension_numbers = #tpu.dot_dimension_numbers<[1], [0], [0], [1], [0, 0, 1, 1], [], []>} : vector<16x8xbf16>, vector<8x16xbf16>, vector<16x16xf32> -> vector<16x16xf32>
    %258 = arith.addf %257, %0 : vector<16x16xf32>
    %cst_120 = arith.constant dense<0xFF800000> : vector<16xf32>
    %259 = vector.multi_reduction <maximumf>, %258, %cst_120 [1] : vector<16x16xf32> to vector<16xf32>
    %260 = vector.shape_cast %259 : vector<16xf32> to vector<16x1xf32>
    %261 = vector.broadcast %260 : vector<16x1xf32> to vector<16x16xf32>
    %262 = arith.subf %258, %261 : vector<16x16xf32>
    %263 = math.exp %262 : vector<16x16xf32>
    %cst_121 = arith.constant dense<0.000000e+00> : vector<16xf32>
    %264 = vector.multi_reduction <add>, %263, %cst_121 [1] : vector<16x16xf32> to vector<16xf32>
    %265 = vector.shape_cast %264 : vector<16xf32> to vector<16x1xf32>
    %266 = vector.broadcast %265 : vector<16x1xf32> to vector<16x16xf32>
    %267 = arith.divf %263, %266 : vector<16x16xf32>
    %268 = arith.truncf %267 : vector<16x16xf32> to vector<16x16xbf16>
    %cst_122 = arith.constant dense<0.000000e+00> : vector<16x8xf32>
    %269 = tpu.matmul %268, %256, %cst_122 {dimension_numbers = #tpu.dot_dimension_numbers<[1], [1], [0], [0], [0, 0, 1, 0], [], []>} : vector<16x16xbf16>, vector<8x16xbf16>, vector<16x8xf32> -> vector<16x8xf32>
    %270 = arith.truncf %269 : vector<16x8xf32> to vector<16x8xbf16>
    %c1_123 = arith.constant 1 : index
    %c0_124 = arith.constant 0 : index
    %c0_125 = arith.constant 0 : index
    %c0_126 = arith.constant 0 : index
    %271 = vector.load %arg8[%c1_123, %c0_124, %c0_125, %c0_126] : memref<2x4x8x32xbf16, #tpu.memory_space<vmem>>, vector<1x1x8x32xbf16>
    %272 = vector.shape_cast %271 : vector<1x1x8x32xbf16> to vector<8x32xbf16>
    %cst_127 = arith.constant dense<0.000000e+00> : vector<16x32xf32>
    %273 = tpu.matmul %270, %272, %cst_127 {dimension_numbers = #tpu.dot_dimension_numbers<[1], [0], [0], [1], [0, 0, 1, 1], [], []>} : vector<16x8xbf16>, vector<8x32xbf16>, vector<16x32xf32> -> vector<16x32xf32>
    %274 = arith.addf %250, %273 : vector<16x32xf32>
    %275 = vector.extract_strided_slice %242 {offsets = [0, 8], sizes = [16, 8], strides = [1, 1]} : vector<16x32xf32> to vector<16x8xf32>
    %276 = arith.truncf %275 : vector<16x8xf32> to vector<16x8xbf16>
    %277 = vector.extract_strided_slice %249 {offsets = [8, 0], sizes = [8, 16], strides = [1, 1]} : vector<64x16xf32> to vector<8x16xf32>
    %278 = arith.truncf %277 : vector<8x16xf32> to vector<8x16xbf16>
    %279 = vector.extract_strided_slice %249 {offsets = [40, 0], sizes = [8, 16], strides = [1, 1]} : vector<64x16xf32> to vector<8x16xf32>
    %280 = arith.truncf %279 : vector<8x16xf32> to vector<8x16xbf16>
    %cst_128 = arith.constant dense<0.000000e+00> : vector<16x16xf32>
    %281 = tpu.matmul %276, %278, %cst_128 {dimension_numbers = #tpu.dot_dimension_numbers<[1], [0], [0], [1], [0, 0, 1, 1], [], []>} : vector<16x8xbf16>, vector<8x16xbf16>, vector<16x16xf32> -> vector<16x16xf32>
    %282 = arith.addf %281, %0 : vector<16x16xf32>
    %cst_129 = arith.constant dense<0xFF800000> : vector<16xf32>
    %283 = vector.multi_reduction <maximumf>, %282, %cst_129 [1] : vector<16x16xf32> to vector<16xf32>
    %284 = vector.shape_cast %283 : vector<16xf32> to vector<16x1xf32>
    %285 = vector.broadcast %284 : vector<16x1xf32> to vector<16x16xf32>
    %286 = arith.subf %282, %285 : vector<16x16xf32>
    %287 = math.exp %286 : vector<16x16xf32>
    %cst_130 = arith.constant dense<0.000000e+00> : vector<16xf32>
    %288 = vector.multi_reduction <add>, %287, %cst_130 [1] : vector<16x16xf32> to vector<16xf32>
    %289 = vector.shape_cast %288 : vector<16xf32> to vector<16x1xf32>
    %290 = vector.broadcast %289 : vector<16x1xf32> to vector<16x16xf32>
    %291 = arith.divf %287, %290 : vector<16x16xf32>
    %292 = arith.truncf %291 : vector<16x16xf32> to vector<16x16xbf16>
    %cst_131 = arith.constant dense<0.000000e+00> : vector<16x8xf32>
    %293 = tpu.matmul %292, %280, %cst_131 {dimension_numbers = #tpu.dot_dimension_numbers<[1], [1], [0], [0], [0, 0, 1, 0], [], []>} : vector<16x16xbf16>, vector<8x16xbf16>, vector<16x8xf32> -> vector<16x8xf32>
    %294 = arith.truncf %293 : vector<16x8xf32> to vector<16x8xbf16>
    %c1_132 = arith.constant 1 : index
    %c1_133 = arith.constant 1 : index
    %c0_134 = arith.constant 0 : index
    %c0_135 = arith.constant 0 : index
    %295 = vector.load %arg8[%c1_132, %c1_133, %c0_134, %c0_135] : memref<2x4x8x32xbf16, #tpu.memory_space<vmem>>, vector<1x1x8x32xbf16>
    %296 = vector.shape_cast %295 : vector<1x1x8x32xbf16> to vector<8x32xbf16>
    %cst_136 = arith.constant dense<0.000000e+00> : vector<16x32xf32>
    %297 = tpu.matmul %294, %296, %cst_136 {dimension_numbers = #tpu.dot_dimension_numbers<[1], [0], [0], [1], [0, 0, 1, 1], [], []>} : vector<16x8xbf16>, vector<8x32xbf16>, vector<16x32xf32> -> vector<16x32xf32>
    %298 = arith.addf %274, %297 : vector<16x32xf32>
    %299 = vector.extract_strided_slice %242 {offsets = [0, 16], sizes = [16, 8], strides = [1, 1]} : vector<16x32xf32> to vector<16x8xf32>
    %300 = arith.truncf %299 : vector<16x8xf32> to vector<16x8xbf16>
    %301 = vector.extract_strided_slice %249 {offsets = [16, 0], sizes = [8, 16], strides = [1, 1]} : vector<64x16xf32> to vector<8x16xf32>
    %302 = arith.truncf %301 : vector<8x16xf32> to vector<8x16xbf16>
    %303 = vector.extract_strided_slice %249 {offsets = [48, 0], sizes = [8, 16], strides = [1, 1]} : vector<64x16xf32> to vector<8x16xf32>
    %304 = arith.truncf %303 : vector<8x16xf32> to vector<8x16xbf16>
    %cst_137 = arith.constant dense<0.000000e+00> : vector<16x16xf32>
    %305 = tpu.matmul %300, %302, %cst_137 {dimension_numbers = #tpu.dot_dimension_numbers<[1], [0], [0], [1], [0, 0, 1, 1], [], []>} : vector<16x8xbf16>, vector<8x16xbf16>, vector<16x16xf32> -> vector<16x16xf32>
    %306 = arith.addf %305, %0 : vector<16x16xf32>
    %cst_138 = arith.constant dense<0xFF800000> : vector<16xf32>
    %307 = vector.multi_reduction <maximumf>, %306, %cst_138 [1] : vector<16x16xf32> to vector<16xf32>
    %308 = vector.shape_cast %307 : vector<16xf32> to vector<16x1xf32>
    %309 = vector.broadcast %308 : vector<16x1xf32> to vector<16x16xf32>
    %310 = arith.subf %306, %309 : vector<16x16xf32>
    %311 = math.exp %310 : vector<16x16xf32>
    %cst_139 = arith.constant dense<0.000000e+00> : vector<16xf32>
    %312 = vector.multi_reduction <add>, %311, %cst_139 [1] : vector<16x16xf32> to vector<16xf32>
    %313 = vector.shape_cast %312 : vector<16xf32> to vector<16x1xf32>
    %314 = vector.broadcast %313 : vector<16x1xf32> to vector<16x16xf32>
    %315 = arith.divf %311, %314 : vector<16x16xf32>
    %316 = arith.truncf %315 : vector<16x16xf32> to vector<16x16xbf16>
    %cst_140 = arith.constant dense<0.000000e+00> : vector<16x8xf32>
    %317 = tpu.matmul %316, %304, %cst_140 {dimension_numbers = #tpu.dot_dimension_numbers<[1], [1], [0], [0], [0, 0, 1, 0], [], []>} : vector<16x16xbf16>, vector<8x16xbf16>, vector<16x8xf32> -> vector<16x8xf32>
    %318 = arith.truncf %317 : vector<16x8xf32> to vector<16x8xbf16>
    %c1_141 = arith.constant 1 : index
    %c2_142 = arith.constant 2 : index
    %c0_143 = arith.constant 0 : index
    %c0_144 = arith.constant 0 : index
    %319 = vector.load %arg8[%c1_141, %c2_142, %c0_143, %c0_144] : memref<2x4x8x32xbf16, #tpu.memory_space<vmem>>, vector<1x1x8x32xbf16>
    %320 = vector.shape_cast %319 : vector<1x1x8x32xbf16> to vector<8x32xbf16>
    %cst_145 = arith.constant dense<0.000000e+00> : vector<16x32xf32>
    %321 = tpu.matmul %318, %320, %cst_145 {dimension_numbers = #tpu.dot_dimension_numbers<[1], [0], [0], [1], [0, 0, 1, 1], [], []>} : vector<16x8xbf16>, vector<8x32xbf16>, vector<16x32xf32> -> vector<16x32xf32>
    %322 = arith.addf %298, %321 : vector<16x32xf32>
    %323 = vector.extract_strided_slice %242 {offsets = [0, 24], sizes = [16, 8], strides = [1, 1]} : vector<16x32xf32> to vector<16x8xf32>
    %324 = arith.truncf %323 : vector<16x8xf32> to vector<16x8xbf16>
    %325 = vector.extract_strided_slice %249 {offsets = [24, 0], sizes = [8, 16], strides = [1, 1]} : vector<64x16xf32> to vector<8x16xf32>
    %326 = arith.truncf %325 : vector<8x16xf32> to vector<8x16xbf16>
    %327 = vector.extract_strided_slice %249 {offsets = [56, 0], sizes = [8, 16], strides = [1, 1]} : vector<64x16xf32> to vector<8x16xf32>
    %328 = arith.truncf %327 : vector<8x16xf32> to vector<8x16xbf16>
    %cst_146 = arith.constant dense<0.000000e+00> : vector<16x16xf32>
    %329 = tpu.matmul %324, %326, %cst_146 {dimension_numbers = #tpu.dot_dimension_numbers<[1], [0], [0], [1], [0, 0, 1, 1], [], []>} : vector<16x8xbf16>, vector<8x16xbf16>, vector<16x16xf32> -> vector<16x16xf32>
    %330 = arith.addf %329, %0 : vector<16x16xf32>
    %cst_147 = arith.constant dense<0xFF800000> : vector<16xf32>
    %331 = vector.multi_reduction <maximumf>, %330, %cst_147 [1] : vector<16x16xf32> to vector<16xf32>
    %332 = vector.shape_cast %331 : vector<16xf32> to vector<16x1xf32>
    %333 = vector.broadcast %332 : vector<16x1xf32> to vector<16x16xf32>
    %334 = arith.subf %330, %333 : vector<16x16xf32>
    %335 = math.exp %334 : vector<16x16xf32>
    %cst_148 = arith.constant dense<0.000000e+00> : vector<16xf32>
    %336 = vector.multi_reduction <add>, %335, %cst_148 [1] : vector<16x16xf32> to vector<16xf32>
    %337 = vector.shape_cast %336 : vector<16xf32> to vector<16x1xf32>
    %338 = vector.broadcast %337 : vector<16x1xf32> to vector<16x16xf32>
    %339 = arith.divf %335, %338 : vector<16x16xf32>
    %340 = arith.truncf %339 : vector<16x16xf32> to vector<16x16xbf16>
    %cst_149 = arith.constant dense<0.000000e+00> : vector<16x8xf32>
    %341 = tpu.matmul %340, %328, %cst_149 {dimension_numbers = #tpu.dot_dimension_numbers<[1], [1], [0], [0], [0, 0, 1, 0], [], []>} : vector<16x16xbf16>, vector<8x16xbf16>, vector<16x8xf32> -> vector<16x8xf32>
    %342 = arith.truncf %341 : vector<16x8xf32> to vector<16x8xbf16>
    %c1_150 = arith.constant 1 : index
    %c3_151 = arith.constant 3 : index
    %c0_152 = arith.constant 0 : index
    %c0_153 = arith.constant 0 : index
    %343 = vector.load %arg8[%c1_150, %c3_151, %c0_152, %c0_153] : memref<2x4x8x32xbf16, #tpu.memory_space<vmem>>, vector<1x1x8x32xbf16>
    %344 = vector.shape_cast %343 : vector<1x1x8x32xbf16> to vector<8x32xbf16>
    %cst_154 = arith.constant dense<0.000000e+00> : vector<16x32xf32>
    %345 = tpu.matmul %342, %344, %cst_154 {dimension_numbers = #tpu.dot_dimension_numbers<[1], [0], [0], [1], [0, 0, 1, 1], [], []>} : vector<16x8xbf16>, vector<8x32xbf16>, vector<16x32xf32> -> vector<16x32xf32>
    %346 = arith.addf %322, %345 : vector<16x32xf32>
    %c1_155 = arith.constant 1 : index
    %c0_156 = arith.constant 0 : index
    %c0_157 = arith.constant 0 : index
    %347 = vector.load %arg9[%c1_155, %c0_156, %c0_157] : memref<2x1x32xf32, #tpu.memory_space<vmem>>, vector<1x1x32xf32>
    %348 = vector.shape_cast %347 : vector<1x1x32xf32> to vector<1x32xf32>
    %349 = vector.broadcast %348 : vector<1x32xf32> to vector<16x32xf32>
    %350 = arith.addf %346, %349 : vector<16x32xf32>
    %351 = arith.addf %232, %350 : vector<16x32xf32>
    %c1_158 = arith.constant 1 : index
    %c0_159 = arith.constant 0 : index
    %c0_160 = arith.constant 0 : index
    %352 = vector.load %arg10[%c1_158, %c0_159, %c0_160] : memref<2x1x32xf32, #tpu.memory_space<vmem>>, vector<1x1x32xf32>
    %353 = vector.shape_cast %352 : vector<1x1x32xf32> to vector<1x32xf32>
    %c1_161 = arith.constant 1 : index
    %c0_162 = arith.constant 0 : index
    %c0_163 = arith.constant 0 : index
    %354 = vector.load %arg11[%c1_161, %c0_162, %c0_163] : memref<2x1x32xf32, #tpu.memory_space<vmem>>, vector<1x1x32xf32>
    %355 = vector.shape_cast %354 : vector<1x1x32xf32> to vector<1x32xf32>
    %cst_164 = arith.constant dense<0.000000e+00> : vector<16xf32>
    %356 = vector.multi_reduction <add>, %351, %cst_164 [1] : vector<16x32xf32> to vector<16xf32>
    %357 = vector.shape_cast %356 : vector<16xf32> to vector<16x1xf32>
    %cst_165 = arith.constant 3.200000e+01 : f32
    %358 = vector.broadcast %cst_165 : f32 to vector<16x1xf32>
    %359 = arith.divf %357, %358 : vector<16x1xf32>
    %360 = vector.broadcast %359 : vector<16x1xf32> to vector<16x32xf32>
    %361 = arith.subf %351, %360 : vector<16x32xf32>
    %362 = vector.broadcast %359 : vector<16x1xf32> to vector<16x32xf32>
    %363 = arith.subf %351, %362 : vector<16x32xf32>
    %364 = arith.mulf %361, %363 : vector<16x32xf32>
    %cst_166 = arith.constant dense<0.000000e+00> : vector<16xf32>
    %365 = vector.multi_reduction <add>, %364, %cst_166 [1] : vector<16x32xf32> to vector<16xf32>
    %366 = vector.shape_cast %365 : vector<16xf32> to vector<16x1xf32>
    %cst_167 = arith.constant 3.200000e+01 : f32
    %367 = vector.broadcast %cst_167 : f32 to vector<16x1xf32>
    %368 = arith.divf %366, %367 : vector<16x1xf32>
    %369 = vector.broadcast %359 : vector<16x1xf32> to vector<16x32xf32>
    %370 = arith.subf %351, %369 : vector<16x32xf32>
    %cst_168 = arith.constant 9.99999996E-13 : f32
    %371 = vector.broadcast %cst_168 : f32 to vector<16x1xf32>
    %372 = arith.addf %368, %371 : vector<16x1xf32>
    %373 = math.rsqrt %372 : vector<16x1xf32>
    %374 = vector.broadcast %373 : vector<16x1xf32> to vector<16x32xf32>
    %375 = arith.mulf %370, %374 : vector<16x32xf32>
    %376 = vector.broadcast %353 : vector<1x32xf32> to vector<16x32xf32>
    %377 = arith.mulf %375, %376 : vector<16x32xf32>
    %378 = vector.broadcast %355 : vector<1x32xf32> to vector<16x32xf32>
    %379 = arith.addf %377, %378 : vector<16x32xf32>
    %380 = arith.truncf %379 : vector<16x32xf32> to vector<16x32xbf16>
    %c1_169 = arith.constant 1 : index
    %c0_170 = arith.constant 0 : index
    %c0_171 = arith.constant 0 : index
    %381 = vector.load %arg12[%c1_169, %c0_170, %c0_171] : memref<2x32x64xbf16, #tpu.memory_space<vmem>>, vector<1x32x64xbf16>
    %382 = vector.shape_cast %381 : vector<1x32x64xbf16> to vector<32x64xbf16>
    %cst_172 = arith.constant dense<0.000000e+00> : vector<16x64xf32>
    %383 = tpu.matmul %380, %382, %cst_172 {dimension_numbers = #tpu.dot_dimension_numbers<[1], [0], [0], [1], [0, 0, 1, 1], [], []>} : vector<16x32xbf16>, vector<32x64xbf16>, vector<16x64xf32> -> vector<16x64xf32>
    %c1_173 = arith.constant 1 : index
    %c0_174 = arith.constant 0 : index
    %c0_175 = arith.constant 0 : index
    %384 = vector.load %arg13[%c1_173, %c0_174, %c0_175] : memref<2x1x64xf32, #tpu.memory_space<vmem>>, vector<1x1x64xf32>
    %385 = vector.shape_cast %384 : vector<1x1x64xf32> to vector<1x64xf32>
    %386 = vector.broadcast %385 : vector<1x64xf32> to vector<16x64xf32>
    %387 = arith.addf %383, %386 : vector<16x64xf32>
    %cst_176 = arith.constant 5.000000e-01 : f32
    %388 = vector.broadcast %cst_176 : f32 to vector<16x64xf32>
    %389 = arith.mulf %388, %387 : vector<16x64xf32>
    %cst_177 = arith.constant 4.471500e-02 : f32
    %390 = vector.broadcast %cst_177 : f32 to vector<16x64xf32>
    %391 = arith.mulf %390, %387 : vector<16x64xf32>
    %392 = arith.mulf %391, %387 : vector<16x64xf32>
    %393 = arith.mulf %392, %387 : vector<16x64xf32>
    %394 = arith.addf %387, %393 : vector<16x64xf32>
    %cst_178 = arith.constant 0.797884583 : f32
    %395 = vector.broadcast %cst_178 : f32 to vector<16x64xf32>
    %396 = arith.mulf %395, %394 : vector<16x64xf32>
    %397 = math.tanh %396 : vector<16x64xf32>
    %cst_179 = arith.constant 1.000000e+00 : f32
    %398 = vector.broadcast %cst_179 : f32 to vector<16x64xf32>
    %399 = arith.addf %398, %397 : vector<16x64xf32>
    %400 = arith.mulf %389, %399 : vector<16x64xf32>
    %401 = arith.truncf %400 : vector<16x64xf32> to vector<16x64xbf16>
    %c1_180 = arith.constant 1 : index
    %c0_181 = arith.constant 0 : index
    %c0_182 = arith.constant 0 : index
    %402 = vector.load %arg14[%c1_180, %c0_181, %c0_182] : memref<2x64x32xbf16, #tpu.memory_space<vmem>>, vector<1x64x32xbf16>
    %403 = vector.shape_cast %402 : vector<1x64x32xbf16> to vector<64x32xbf16>
    %cst_183 = arith.constant dense<0.000000e+00> : vector<16x32xf32>
    %404 = tpu.matmul %401, %403, %cst_183 {dimension_numbers = #tpu.dot_dimension_numbers<[1], [0], [0], [1], [0, 0, 1, 1], [], []>} : vector<16x64xbf16>, vector<64x32xbf16>, vector<16x32xf32> -> vector<16x32xf32>
    %c1_184 = arith.constant 1 : index
    %c0_185 = arith.constant 0 : index
    %c0_186 = arith.constant 0 : index
    %405 = vector.load %arg15[%c1_184, %c0_185, %c0_186] : memref<2x1x32xf32, #tpu.memory_space<vmem>>, vector<1x1x32xf32>
    %406 = vector.shape_cast %405 : vector<1x1x32xf32> to vector<1x32xf32>
    %407 = vector.broadcast %406 : vector<1x32xf32> to vector<16x32xf32>
    %408 = arith.addf %404, %407 : vector<16x32xf32>
    %409 = arith.addf %379, %408 : vector<16x32xf32>
    %c1_187 = arith.constant 1 : index
    %c0_188 = arith.constant 0 : index
    %c0_189 = arith.constant 0 : index
    %410 = vector.load %arg16[%c1_187, %c0_188, %c0_189] : memref<2x1x32xf32, #tpu.memory_space<vmem>>, vector<1x1x32xf32>
    %411 = vector.shape_cast %410 : vector<1x1x32xf32> to vector<1x32xf32>
    %c1_190 = arith.constant 1 : index
    %c0_191 = arith.constant 0 : index
    %c0_192 = arith.constant 0 : index
    %412 = vector.load %arg17[%c1_190, %c0_191, %c0_192] : memref<2x1x32xf32, #tpu.memory_space<vmem>>, vector<1x1x32xf32>
    %413 = vector.shape_cast %412 : vector<1x1x32xf32> to vector<1x32xf32>
    %cst_193 = arith.constant dense<0.000000e+00> : vector<16xf32>
    %414 = vector.multi_reduction <add>, %409, %cst_193 [1] : vector<16x32xf32> to vector<16xf32>
    %415 = vector.shape_cast %414 : vector<16xf32> to vector<16x1xf32>
    %cst_194 = arith.constant 3.200000e+01 : f32
    %416 = vector.broadcast %cst_194 : f32 to vector<16x1xf32>
    %417 = arith.divf %415, %416 : vector<16x1xf32>
    %418 = vector.broadcast %417 : vector<16x1xf32> to vector<16x32xf32>
    %419 = arith.subf %409, %418 : vector<16x32xf32>
    %420 = vector.broadcast %417 : vector<16x1xf32> to vector<16x32xf32>
    %421 = arith.subf %409, %420 : vector<16x32xf32>
    %422 = arith.mulf %419, %421 : vector<16x32xf32>
    %cst_195 = arith.constant dense<0.000000e+00> : vector<16xf32>
    %423 = vector.multi_reduction <add>, %422, %cst_195 [1] : vector<16x32xf32> to vector<16xf32>
    %424 = vector.shape_cast %423 : vector<16xf32> to vector<16x1xf32>
    %cst_196 = arith.constant 3.200000e+01 : f32
    %425 = vector.broadcast %cst_196 : f32 to vector<16x1xf32>
    %426 = arith.divf %424, %425 : vector<16x1xf32>
    %427 = vector.broadcast %417 : vector<16x1xf32> to vector<16x32xf32>
    %428 = arith.subf %409, %427 : vector<16x32xf32>
    %cst_197 = arith.constant 9.99999996E-13 : f32
    %429 = vector.broadcast %cst_197 : f32 to vector<16x1xf32>
    %430 = arith.addf %426, %429 : vector<16x1xf32>
    %431 = math.rsqrt %430 : vector<16x1xf32>
    %432 = vector.broadcast %431 : vector<16x1xf32> to vector<16x32xf32>
    %433 = arith.mulf %428, %432 : vector<16x32xf32>
    %434 = vector.broadcast %411 : vector<1x32xf32> to vector<16x32xf32>
    %435 = arith.mulf %433, %434 : vector<16x32xf32>
    %436 = vector.broadcast %413 : vector<1x32xf32> to vector<16x32xf32>
    %437 = arith.addf %435, %436 : vector<16x32xf32>
    %438 = vector.extract_strided_slice %437 {offsets = [0, 0], sizes = [1, 32], strides = [1, 1]} : vector<16x32xf32> to vector<1x32xf32>
    %c0_198 = arith.constant 0 : index
    %c0_199 = arith.constant 0 : index
    %439 = vector.load %arg18[%c0_198, %c0_199] : memref<2x32xf32, #tpu.memory_space<vmem>>, vector<1x32xf32>
    tpu.vector_store %arg18[%c0_198, %c0_199], %438 {strides = array<i32>} : memref<2x32xf32, #tpu.memory_space<vmem>>, vector<1x32xf32>,
    %440 = vector.extract_strided_slice %437 {offsets = [8, 0], sizes = [1, 32], strides = [1, 1]} : vector<16x32xf32> to vector<1x32xf32>
    %c1_200 = arith.constant 1 : index
    %c0_201 = arith.constant 0 : index
    %441 = vector.load %arg18[%c1_200, %c0_201] : memref<2x32xf32, #tpu.memory_space<vmem>>, vector<1x32xf32>
    tpu.vector_store %arg18[%c1_200, %c0_201], %440 {strides = array<i32>} : memref<2x32xf32, #tpu.memory_space<vmem>>, vector<1x32xf32>,
    return
  }
}

</mosaic_0001>

<llo_original>
// kernel: text_encoder_forward.1
$region0: #{text_encoder_forward.1}
  #allocation0 [shape = 'u32[]', space=smem, size = 0x4, offset = 0x4, fixed_abs, tag = 'smem constant byte address 0x4 - core index']
  #allocation1 [shape = 'u32[144,128]{1,0:T(1,128)}', space=vmem, size = 0x12000, scoped, tag = 'internal scratch']
  %s0 = inlined_call_operand.vmem [shape: f32[16,32], index: 0, kind: input, shape index: {}]
  %s1 = inlined_call_operand.vmem [shape: f32[16,16], index: 1, kind: input, shape index: {}]
  %s2 = inlined_call_operand.vmem [shape: f32[1,32], index: 2, kind: input, shape index: {}]
  %s3 = inlined_call_operand.vmem [shape: f32[1,32], index: 3, kind: input, shape index: {}]
  %s4 = inlined_call_operand.vmem [shape: bf16[2,32,32], index: 4, kind: input, shape index: {}]
  %s5 = inlined_call_operand.vmem [shape: f32[2,1,32], index: 5, kind: input, shape index: {}]
  %s6 = inlined_call_operand.vmem [shape: bf16[2,64,32], index: 6, kind: input, shape index: {}]
  %s7 = inlined_call_operand.vmem [shape: f32[2,64,1], index: 7, kind: input, shape index: {}]
  %s8 = inlined_call_operand.vmem [shape: bf16[2,4,8,32], index: 8, kind: input, shape index: {}]
  %s9 = inlined_call_operand.vmem [shape: f32[2,1,32], index: 9, kind: input, shape index: {}]
  %s10 = inlined_call_operand.vmem [shape: f32[2,1,32], index: 10, kind: input, shape index: {}]
  %s11 = inlined_call_operand.vmem [shape: f32[2,1,32], index: 11, kind: input, shape index: {}]
  %s12 = inlined_call_operand.vmem [shape: bf16[2,32,64], index: 12, kind: input, shape index: {}]
  %s13 = inlined_call_operand.vmem [shape: f32[2,1,64], index: 13, kind: input, shape index: {}]
  %s14 = inlined_call_operand.vmem [shape: bf16[2,64,32], index: 14, kind: input, shape index: {}]
  %s15 = inlined_call_operand.vmem [shape: f32[2,1,32], index: 15, kind: input, shape index: {}]
  %s16 = inlined_call_operand.vmem [shape: f32[2,1,32], index: 16, kind: input, shape index: {}]
  %s17 = inlined_call_operand.vmem [shape: f32[2,1,32], index: 17, kind: input, shape index: {}]
  %s18 = inlined_call_operand.hbm [shape: f32[2,32], index: 18, kind: output, shape index: {}]
  %s19 = sld [smem:[#allocation0]]
  $region82: #{text_encoder_forward.1} parent=0
    _
  %s21 = ssub.s32 1, %s19
  %s22 = scalar_select 0, %s21, %s19
  $region1: #{text_encoder_forward.1} parent=0
    #allocation2 [shape = 'u8[1024]{0}', space=vmem, size = 0x400, scoped, tag = 'output window, operand 0, single buffered']
    #allocation3 [shape = 's32[1]{0}', space=sflag, size = 0x4, scoped, tag = 'scoped memory for text_encoder_forward.1']
    %23 = vsyncpa [#allocation3], 0
    // Predicated region
    $region2: #{text_encoder_forward.1} parent=1 // pred_check
      _
    $region3: #{text_encoder_forward.1} parent=1 // pred_check_branch
      %25 = sbr.rel (0) target = $region5
    $region4: #{text_encoder_forward.1} parent=1 // pred_region
      _
    $region5: #{text_encoder_forward.1} parent=1 // pred_fallthru
      _
    // Predicated region
    $region6: #{text_encoder_forward.1} parent=1 // pred_check
      _
    $region7: #{text_encoder_forward.1} parent=1 // pred_check_branch
      %27 = sbr.rel (0) target = $region9
    $region8: #{text_encoder_forward.1} parent=1 // pred_region
      _
    $region9: #{text_encoder_forward.1} parent=1 // pred_fallthru
      _
    // Predicated region
    $region10: #{text_encoder_forward.1} parent=1 // pred_check
      _
    $region11: #{text_encoder_forward.1} parent=1 // pred_check_branch
      %29 = sbr.rel (0) target = $region13
    $region12: #{text_encoder_forward.1} parent=1 // pred_region
      _
    $region13: #{text_encoder_forward.1} parent=1 // pred_fallthru
      _
    // Predicated region
    $region14: #{text_encoder_forward.1} parent=1 // pred_check
      _
    $region15: #{text_encoder_forward.1} parent=1 // pred_check_branch
      %31 = sbr.rel (0) target = $region17
    $region16: #{text_encoder_forward.1} parent=1 // pred_region
      _
    $region17: #{text_encoder_forward.1} parent=1 // pred_fallthru
      _
    // Predicated region
    $region18: #{text_encoder_forward.1} parent=1 // pred_check
      _
    $region19: #{text_encoder_forward.1} parent=1 // pred_check_branch
      %33 = sbr.rel (0) target = $region21
    $region20: #{text_encoder_forward.1} parent=1 // pred_region
      _
    $region21: #{text_encoder_forward.1} parent=1 // pred_fallthru
      _
    // Predicated region
    $region22: #{text_encoder_forward.1} parent=1 // pred_check
      _
    $region23: #{text_encoder_forward.1} parent=1 // pred_check_branch
      %35 = sbr.rel (0) target = $region25
    $region24: #{text_encoder_forward.1} parent=1 // pred_region
      _
    $region25: #{text_encoder_forward.1} parent=1 // pred_fallthru
      _
    // Predicated region
    $region26: #{text_encoder_forward.1} parent=1 // pred_check
      _
    $region27: #{text_encoder_forward.1} parent=1 // pred_check_branch
      %37 = sbr.rel (0) target = $region29
    $region28: #{text_encoder_forward.1} parent=1 // pred_region
      _
    $region29: #{text_encoder_forward.1} parent=1 // pred_fallthru
      _
    // Predicated region
    $region30: #{text_encoder_forward.1} parent=1 // pred_check
      _
    $region31: #{text_encoder_forward.1} parent=1 // pred_check_branch
      %39 = sbr.rel (0) target = $region33
    $region32: #{text_encoder_forward.1} parent=1 // pred_region
      _
    $region33: #{text_encoder_forward.1} parent=1 // pred_fallthru
      _
    // Predicated region
    $region34: #{text_encoder_forward.1} parent=1 // pred_check
      _
    $region35: #{text_encoder_forward.1} parent=1 // pred_check_branch
      %41 = sbr.rel (0) target = $region37
    $region36: #{text_encoder_forward.1} parent=1 // pred_region
      _
    $region37: #{text_encoder_forward.1} parent=1 // pred_fallthru
      _
    // Predicated region
    $region38: #{text_encoder_forward.1} parent=1 // pred_check
      _
    $region39: #{text_encoder_forward.1} parent=1 // pred_check_branch
      %43 = sbr.rel (0) target = $region41
    $region40: #{text_encoder_forward.1} parent=1 // pred_region
      _
    $region41: #{text_encoder_forward.1} parent=1 // pred_fallthru
      _
    // Predicated region
    $region42: #{text_encoder_forward.1} parent=1 // pred_check
      _
    $region43: #{text_encoder_forward.1} parent=1 // pred_check_branch
      %45 = sbr.rel (0) target = $region45
    $region44: #{text_encoder_forward.1} parent=1 // pred_region
      _
    $region45: #{text_encoder_forward.1} parent=1 // pred_fallthru
      _
    // Predicated region
    $region46: #{text_encoder_forward.1} parent=1 // pred_check
      _
    $region47: #{text_encoder_forward.1} parent=1 // pred_check_branch
      %47 = sbr.rel (0) target = $region49
    $region48: #{text_encoder_forward.1} parent=1 // pred_region
      _
    $region49: #{text_encoder_forward.1} parent=1 // pred_fallthru
      _
    // Predicated region
    $region50: #{text_encoder_forward.1} parent=1 // pred_check
      _
    $region51: #{text_encoder_forward.1} parent=1 // pred_check_branch
      %49 = sbr.rel (0) target = $region53
    $region52: #{text_encoder_forward.1} parent=1 // pred_region
      _
    $region53: #{text_encoder_forward.1} parent=1 // pred_fallthru
      _
    // Predicated region
    $region54: #{text_encoder_forward.1} parent=1 // pred_check
      _
    $region55: #{text_encoder_forward.1} parent=1 // pred_check_branch
      %51 = sbr.rel (0) target = $region57
    $region56: #{text_encoder_forward.1} parent=1 // pred_region
      _
    $region57: #{text_encoder_forward.1} parent=1 // pred_fallthru
      _
    // Predicated region
    $region58: #{text_encoder_forward.1} parent=1 // pred_check
      _
    $region59: #{text_encoder_forward.1} parent=1 // pred_check_branch
      %53 = sbr.rel (0) target = $region61
    $region60: #{text_encoder_forward.1} parent=1 // pred_region
      _
    $region61: #{text_encoder_forward.1} parent=1 // pred_fallthru
      _
    // Predicated region
    $region62: #{text_encoder_forward.1} parent=1 // pred_check
      _
    $region63: #{text_encoder_forward.1} parent=1 // pred_check_branch
      %55 = sbr.rel (0) target = $region65
    $region64: #{text_encoder_forward.1} parent=1 // pred_region
      _
    $region65: #{text_encoder_forward.1} parent=1 // pred_fallthru
      _
    // Predicated region
    $region66: #{text_encoder_forward.1} parent=1 // pred_check
      _
    $region67: #{text_encoder_forward.1} parent=1 // pred_check_branch
      %57 = sbr.rel (0) target = $region69
    $region68: #{text_encoder_forward.1} parent=1 // pred_region
      _
    $region69: #{text_encoder_forward.1} parent=1 // pred_fallthru
      _
    // Predicated region
    $region70: #{text_encoder_forward.1} parent=1 // pred_check
      _
    $region71: #{text_encoder_forward.1} parent=1 // pred_check_branch
      %59 = sbr.rel (0) target = $region73
    $region72: #{text_encoder_forward.1} parent=1 // pred_region
      _
    $region73: #{text_encoder_forward.1} parent=1 // pred_fallthru
      _
    %v61 = vld [vmem:[%s1] sm:$0xff]
    %v62 = vld [vmem:[%s1 + $0x8] sm:$0xff]
    %v63 = vld [vmem:[%s0] sm:$0xff]
    %v64 = vld [vmem:[%s0 + $0x8] sm:$0xff]
    %v65 = vld [vmem:[%s2] sm:$0x1]
    %v66 = vld [vmem:[%s3] sm:$0x1]
    %vm67 = vcmask 261120
    %v68 = vsel %vm67, %v63, 0.0
    %69 = vadd.xlane.f32.xlu0 %v68
    %v70 = vpop.xlane.xlu0 %69
    %v71 = vsel %vm67, %v64, 0.0
    %72 = vadd.xlane.f32.xlu0 %v71
    %v73 = vpop.xlane.xlu0 %72
    %v74 = vrcp.pop 32.0
    %v75 = vmul.f32 %v70, %v74
    %v76 = vmul.f32 %v73, %v74
    %v77 = vsub.f32 %v63, %v75
    %v78 = vsub.f32 %v64, %v76
    %v79 = vmul.f32 %v77, %v77
    %v80 = vmul.f32 %v78, %v78
    %v81 = vsel %vm67, %v79, 0.0
    %82 = vadd.xlane.f32.xlu0 %v81
    %v83 = vpop.xlane.xlu0 %82
    %v84 = vsel %vm67, %v80, 0.0
    %85 = vadd.xlane.f32.xlu0 %v84
    %v86 = vpop.xlane.xlu0 %85
    %v87 = vmul.f32 %v83, %v74
    %v88 = vmul.f32 %v86, %v74
    %v89 = vadd.f32 %v87, 1e-12
    %v90 = vadd.f32 %v88, 1e-12
    %v91 = vrsqrt.pop %v89
    %v92 = vrsqrt.pop %v90
    %v93 = vmul.f32 %v77, %v91
    %v94 = vmul.f32 %v78, %v92
    %v96 = vlaneseq
    %v97 = vshrl.u32 %v96, 7
    %v98 = vsub.s32 0, %v97
    %v99 = vrot.slane %v65, %v98
    %v101 = vmul.f32 %v93, %v99
    %v102 = vmul.f32 %v94, %v99
    %v104 = vlaneseq
    %v105 = vshrl.u32 %v104, 7
    %v106 = vsub.s32 0, %v105
    %v107 = vrot.slane %v66, %v106
    %v109 = vadd.f32 %v101, %v107
    %v110 = vadd.f32 %v102, %v107
    %v111 = vpack.c.bf16 %v110, %v109
    %v112 = vld [vmem:[%s4] sm:$0xf]
    %v113 = vld [vmem:[%s4 + $0x4] sm:$0xf]
    %v114 = vld [vmem:[%s4 + $0x8] sm:$0xf]
    %v115 = vld [vmem:[%s4 + $0xc] sm:$0xf]
    %v116 = vld [vmem:[%s5] sm:$0x1]
    %v118 = vlaneseq
    %v119 = vshrl.u32 %v118, 7
    %v120 = vsub.s32 0, %v119
    %v121 = vrot.slane %v116, %v120
    %v127 = vunpack.c.l.b16 %v112
    %v128 = vunpack.c.l.b16 %v113
    %v129 = vunpack.c.l.b16 %v114
    %v130 = vunpack.c.l.b16 %v115
    %v131 = vpack.c.b16 %v128, %v127
    %v132 = vpack.c.b16 %v130, %v129
    %v136 = vsel %vm67, %v111, 0
    %138 = vmatprep.subr.bf16.mxu0 0
    %139 = vmatpush1.bf16.msra.mxu0 %v131
    %140 = vmatprep.subr.bf16.mxu0 0
    %141 = vmatpush1.bf16.msra.mxu0 %v132
    %142 = vmatprep.subr.bf16.mxu0 0
    %143 = vmatpush1.bf16.msra.mxu0 0
    %144 = vmatprep.subr.bf16.mxu0 0
    %145 = vmatpush1.bf16.msra.mxu0 0
    %146 = vmatprep.subr.bf16.mxu0 0
    %147 = vmatpush1.bf16.msra.mxu0 0
    %148 = vmatprep.subr.bf16.mxu0 0
    %149 = vmatpush1.bf16.msra.mxu0 0
    %150 = vmatprep.subr.bf16.mxu0 0
    %151 = vmatpush1.bf16.msra.mxu0 0
    %152 = vmatprep.subr.bf16.mxu0 0
    %153 = vmatpush1.bf16.msra.mxu0 0
    %154 = vmatprep.subr.bf16.mxu0 0
    %155 = vmatpush1.bf16.msra.mxu0 0
    %156 = vmatprep.subr.bf16.mxu0 0
    %157 = vmatpush1.bf16.msra.mxu0 0
    %158 = vmatprep.subr.bf16.mxu0 0
    %159 = vmatpush1.bf16.msra.mxu0 0
    %160 = vmatprep.subr.bf16.mxu0 0
    %161 = vmatpush1.bf16.msra.mxu0 0
    %162 = vmatprep.subr.bf16.mxu0 0
    %163 = vmatpush1.bf16.msra.mxu0 0
    %164 = vmatprep.subr.bf16.mxu0 0
    %165 = vmatpush1.bf16.msra.mxu0 0
    %166 = vmatprep.subr.bf16.mxu0 0
    %167 = vmatpush1.bf16.msra.mxu0 0
    %168 = vmatprep.subr.bf16.mxu0 0
    %169 = vmatpush1.bf16.msra.mxu0 0
    %170 = vmatprep.mubr.bf16.mxu0 0
    %171 = vmatmul.mubr.bf16.gmra.mrb[0].mxu0 %v136
    %v172 = vpop.f32.mrb[0].mxu0
    %v173 = vadd.f32 %v121, %v172
    %v174 = vpop.f32.mrb[0].mxu0
    %v175 = vpop.f32.mrb[0].mxu0
    %v176 = vadd.f32 %v121, %v175
    %v177 = vpop.f32.mrb[0].mxu0
    %178 = vdwg.mxu0
    %v179 = vmul.f32 %v173, 0.35355338
    %v180 = vmul.f32 %v176, 0.35355338
    %v181 = vld [vmem:[%s6] sm:$0xf]
    %v182 = vld [vmem:[%s6 + $0x4] sm:$0xf]
    %v183 = vld [vmem:[%s6 + $0x8] sm:$0xf]
    %v184 = vld [vmem:[%s6 + $0xc] sm:$0xf]
    %v185 = vld [vmem:[%s6 + $0x10] sm:$0xf]
    %v186 = vld [vmem:[%s6 + $0x14] sm:$0xf]
    %v187 = vld [vmem:[%s6 + $0x18] sm:$0xf]
    %v188 = vld [vmem:[%s6 + $0x1c] sm:$0xf]
    %v189 = vld [vmem:[%s7] sm:$0xff]
    %v190 = vld [vmem:[%s7 + $0x8] sm:$0xff]
    %v191 = vld [vmem:[%s7 + $0x10] sm:$0xff]
    %v192 = vld [vmem:[%s7 + $0x18] sm:$0xff]
    %v193 = vld [vmem:[%s7 + $0x20] sm:$0xff]
    %v194 = vld [vmem:[%s7 + $0x28] sm:$0xff]
    %v195 = vld [vmem:[%s7 + $0x30] sm:$0xff]
    %v196 = vld [vmem:[%s7 + $0x38] sm:$0xff]
    %198 = vset.pattern.permute.xlu0 0
    %199 = vperm.xlu0 %198, %v189
    %v200 = vpop.permute.xlu0 %199
    %203 = vset.pattern.permute.xlu0 0
    %204 = vperm.xlu0 %203, %v190
    %v205 = vpop.permute.xlu0 %204
    %208 = vset.pattern.permute.xlu0 0
    %209 = vperm.xlu0 %208, %v191
    %v210 = vpop.permute.xlu0 %209
    %213 = vset.pattern.permute.xlu0 0
    %214 = vperm.xlu0 %213, %v192
    %v215 = vpop.permute.xlu0 %214
    %218 = vset.pattern.permute.xlu0 0
    %219 = vperm.xlu0 %218, %v193
    %v220 = vpop.permute.xlu0 %219
    %223 = vset.pattern.permute.xlu0 0
    %224 = vperm.xlu0 %223, %v194
    %v225 = vpop.permute.xlu0 %224
    %228 = vset.pattern.permute.xlu0 0
    %229 = vperm.xlu0 %228, %v195
    %v230 = vpop.permute.xlu0 %229
    %233 = vset.pattern.permute.xlu0 0
    %234 = vperm.xlu0 %233, %v196
    %v235 = vpop.permute.xlu0 %234
    %v245 = vunpack.c.l.b16 %v181
    %v246 = vunpack.c.l.b16 %v182
    %v247 = vunpack.c.l.b16 %v183
    %v248 = vunpack.c.l.b16 %v184
    %v249 = vunpack.c.l.b16 %v185
    %v250 = vunpack.c.l.b16 %v186
    %v251 = vunpack.c.l.b16 %v187
    %v252 = vunpack.c.l.b16 %v188
    %v253 = vpack.c.b16 %v246, %v245
    %v254 = vpack.c.b16 %v248, %v247
    %v255 = vpack.c.b16 %v250, %v249
    %v256 = vpack.c.b16 %v252, %v251
    %v258 = vsel %vm67, %v253, 0
    %v261 = vsel %vm67, %v254, 0
    %v264 = vsel %vm67, %v255, 0
    %v267 = vsel %vm67, %v256, 0
    %269 = vmatprep.subr.bf16.mxu0 0
    %270 = vmatpush1.bf16.xpose.msra.mxu0 %v136
    %271 = vmatprep.subr.bf16.mxu0 0
    %272 = vmatpush1.bf16.xpose.msra.mxu0 0
    %273 = vmatprep.subr.bf16.mxu0 0
    %274 = vmatpush1.bf16.xpose.msra.mxu0 0
    %275 = vmatprep.subr.bf16.mxu0 0
    %276 = vmatpush1.bf16.xpose.msra.mxu0 0
    %277 = vmatprep.subr.bf16.mxu0 0
    %278 = vmatpush1.bf16.xpose.msra.mxu0 0
    %279 = vmatprep.subr.bf16.mxu0 0
    %280 = vmatpush1.bf16.xpose.msra.mxu0 0
    %281 = vmatprep.subr.bf16.mxu0 0
    %282 = vmatpush1.bf16.xpose.msra.mxu0 0
    %283 = vmatprep.subr.bf16.mxu0 0
    %284 = vmatpush1.bf16.xpose.msra.mxu0 0
    %285 = vmatprep.subr.bf16.mxu0 0
    %286 = vmatpush1.bf16.xpose.msra.mxu0 0
    %287 = vmatprep.subr.bf16.mxu0 0
    %288 = vmatpush1.bf16.xpose.msra.mxu0 0
    %289 = vmatprep.subr.bf16.mxu0 0
    %290 = vmatpush1.bf16.xpose.msra.mxu0 0
    %291 = vmatprep.subr.bf16.mxu0 0
    %292 = vmatpush1.bf16.xpose.msra.mxu0 0
    %293 = vmatprep.subr.bf16.mxu0 0
    %294 = vmatpush1.bf16.xpose.msra.mxu0 0
    %295 = vmatprep.subr.bf16.mxu0 0
    %296 = vmatpush1.bf16.xpose.msra.mxu0 0
    %297 = vmatprep.subr.bf16.mxu0 0
    %298 = vmatpush1.bf16.xpose.msra.mxu0 0
    %299 = vmatprep.subr.bf16.mxu0 0
    %300 = vmatpush1.bf16.xpose.msra.mxu0 0
    %301 = vmatprep.mubr.bf16.mxu0 0
    %302 = vmatmul.mubr.bf16.gmra.mrb[0].mxu0 %v258
    %v303 = vpop.f32.mrb[0].mxu0
    %v304 = vadd.f32 %v200, %v303
    %v305 = vpop.f32.mrb[0].mxu0
    %v306 = vpop.f32.mrb[0].mxu0
    %v307 = vadd.f32 %v205, %v306
    %v308 = vpop.f32.mrb[0].mxu0
    %309 = vmatprep.mubr.bf16.mxu0 0
    %310 = vmatmul.mubr.bf16.gmra.mrb[0].mxu0 %v261
    %v311 = vpop.f32.mrb[0].mxu0
    %v312 = vadd.f32 %v210, %v311
    %v313 = vpop.f32.mrb[0].mxu0
    %v314 = vpop.f32.mrb[0].mxu0
    %v315 = vadd.f32 %v215, %v314
    %v316 = vpop.f32.mrb[0].mxu0
    %317 = vmatprep.mubr.bf16.mxu0 0
    %318 = vmatmul.mubr.bf16.gmra.mrb[0].mxu0 %v264
    %v319 = vpop.f32.mrb[0].mxu0
    %v320 = vadd.f32 %v220, %v319
    %v321 = vpop.f32.mrb[0].mxu0
    %v322 = vpop.f32.mrb[0].mxu0
    %v323 = vadd.f32 %v225, %v322
    %v324 = vpop.f32.mrb[0].mxu0
    %325 = vmatprep.mubr.bf16.mxu0 0
    %326 = vmatmul.mubr.bf16.gmra.mrb[0].mxu0 %v267
    %v327 = vpop.f32.mrb[0].mxu0
    %v328 = vadd.f32 %v230, %v327
    %v329 = vpop.f32.mrb[0].mxu0
    %v330 = vpop.f32.mrb[0].mxu0
    %v331 = vadd.f32 %v235, %v330
    %v332 = vpop.f32.mrb[0].mxu0
    %333 = vdwg.mxu0
    %v334 = vpack.c.bf16 %v180, %v179
    %v335 = vpack.c.bf16 %v304, %v304
    %v336 = vpack.c.bf16 %v320, %v320
    %vm337 = vcmask 64512
    %v339 = vsel %vm337, %v334, 0
    %vm341 = vcmask 1043456
    %v343 = vsel %vm341, %v335, 0
    %345 = vmatprep.subr.bf16.mxu0 0
    %346 = vmatpush1.bf16.msra.mxu0 %v343
    %347 = vmatprep.subr.bf16.mxu0 0
    %348 = vmatpush1.bf16.msra.mxu0 0
    %349 = vmatprep.subr.bf16.mxu0 0
    %350 = vmatpush1.bf16.msra.mxu0 0
    %351 = vmatprep.subr.bf16.mxu0 0
    %352 = vmatpush1.bf16.msra.mxu0 0
    %353 = vmatprep.subr.bf16.mxu0 0
    %354 = vmatpush1.bf16.msra.mxu0 0
    %355 = vmatprep.subr.bf16.mxu0 0
    %356 = vmatpush1.bf16.msra.mxu0 0
    %357 = vmatprep.subr.bf16.mxu0 0
    %358 = vmatpush1.bf16.msra.mxu0 0
    %359 = vmatprep.subr.bf16.mxu0 0
    %360 = vmatpush1.bf16.msra.mxu0 0
    %361 = vmatprep.subr.bf16.mxu0 0
    %362 = vmatpush1.bf16.msra.mxu0 0
    %363 = vmatprep.subr.bf16.mxu0 0
    %364 = vmatpush1.bf16.msra.mxu0 0
    %365 = vmatprep.subr.bf16.mxu0 0
    %366 = vmatpush1.bf16.msra.mxu0 0
    %367 = vmatprep.subr.bf16.mxu0 0
    %368 = vmatpush1.bf16.msra.mxu0 0
    %369 = vmatprep.subr.bf16.mxu0 0
    %370 = vmatpush1.bf16.msra.mxu0 0
    %371 = vmatprep.subr.bf16.mxu0 0
    %372 = vmatpush1.bf16.msra.mxu0 0
    %373 = vmatprep.subr.bf16.mxu0 0
    %374 = vmatpush1.bf16.msra.mxu0 0
    %375 = vmatprep.subr.bf16.mxu0 0
    %376 = vmatpush1.bf16.msra.mxu0 0
    %377 = vmatprep.mubr.bf16.mxu0 0
    %378 = vmatmul.mubr.bf16.gmra.mrb[0].mxu0 %v339
    %v379 = vpop.f32.mrb[0].mxu0
    %v380 = vadd.f32 %v61, %v379
    %v381 = vpop.f32.mrb[0].mxu0
    %v382 = vpop.f32.mrb[0].mxu0
    %v383 = vadd.f32 %v62, %v382
    %v384 = vpop.f32.mrb[0].mxu0
    %385 = vdwg.mxu0
    %vm386 = vcmask 130048
    %v387 = vsel %vm386, %v380, -inf
    %388 = vmax.xlane.f32.xlu0 %v387
    %v389 = vpop.xlane.xlu0 %388
    %v390 = vsel %vm386, %v383, -inf
    %391 = vmax.xlane.f32.xlu0 %v390
    %v392 = vpop.xlane.xlu0 %391
    %v393 = vsub.f32 %v380, %v389
    %v394 = vsub.f32 %v383, %v392
    %v395 = vmul.f32 %v393, 1.442695
    %v396 = vpow.pop %v395
    %v397 = vmul.f32 %v394, 1.442695
    %v398 = vpow.pop %v397
    %v399 = vsel %vm386, %v396, 0.0
    %400 = vadd.xlane.f32.xlu0 %v399
    %v401 = vpop.xlane.xlu0 %400
    %v402 = vsel %vm386, %v398, 0.0
    %403 = vadd.xlane.f32.xlu0 %v402
    %v404 = vpop.xlane.xlu0 %403
    %v405 = vrcp.pop %v401
    %v406 = vmul.f32 %v396, %v405
    %v407 = vrcp.pop %v404
    %v408 = vmul.f32 %v398, %v407
    %v409 = vpack.c.bf16 %v408, %v406
    %v411 = vsel %vm386, %v409, 0
    %v414 = vsel %vm386, %v336, 0
    %416 = vmatprep.subr.bf16.mxu0 0
    %417 = vmatpush1.bf16.xpose.msra.mxu0 %v414
    %418 = vmatprep.subr.bf16.mxu0 0
    %419 = vmatpush1.bf16.xpose.msra.mxu0 0
    %420 = vmatprep.subr.bf16.mxu0 0
    %421 = vmatpush1.bf16.xpose.msra.mxu0 0
    %422 = vmatprep.subr.bf16.mxu0 0
    %423 = vmatpush1.bf16.xpose.msra.mxu0 0
    %424 = vmatprep.subr.bf16.mxu0 0
    %425 = vmatpush1.bf16.xpose.msra.mxu0 0
    %426 = vmatprep.subr.bf16.mxu0 0
    %427 = vmatpush1.bf16.xpose.msra.mxu0 0
    %428 = vmatprep.subr.bf16.mxu0 0
    %429 = vmatpush1.bf16.xpose.msra.mxu0 0
    %430 = vmatprep.subr.bf16.mxu0 0
    %431 = vmatpush1.bf16.xpose.msra.mxu0 0
    %432 = vmatprep.subr.bf16.mxu0 0
    %433 = vmatpush1.bf16.xpose.msra.mxu0 0
    %434 = vmatprep.subr.bf16.mxu0 0
    %435 = vmatpush1.bf16.xpose.msra.mxu0 0
    %436 = vmatprep.subr.bf16.mxu0 0
    %437 = vmatpush1.bf16.xpose.msra.mxu0 0
    %438 = vmatprep.subr.bf16.mxu0 0
    %439 = vmatpush1.bf16.xpose.msra.mxu0 0
    %440 = vmatprep.subr.bf16.mxu0 0
    %441 = vmatpush1.bf16.xpose.msra.mxu0 0
    %442 = vmatprep.subr.bf16.mxu0 0
    %443 = vmatpush1.bf16.xpose.msra.mxu0 0
    %444 = vmatprep.subr.bf16.mxu0 0
    %445 = vmatpush1.bf16.xpose.msra.mxu0 0
    %446 = vmatprep.subr.bf16.mxu0 0
    %447 = vmatpush1.bf16.xpose.msra.mxu0 0
    %448 = vmatprep.mubr.bf16.mxu0 0
    %449 = vmatmul.mubr.bf16.gmra.mrb[0].mxu0 %v411
    %v450 = vpop.f32.mrb[0].mxu0
    %v451 = vadd.f32 0.0, %v450
    %v452 = vpop.f32.mrb[0].mxu0
    %v453 = vpop.f32.mrb[0].mxu0
    %v454 = vadd.f32 0.0, %v453
    %v455 = vpop.f32.mrb[0].mxu0
    %456 = vdwg.mxu0
    %v457 = vpack.c.bf16 %v454, %v451
    %v458 = vld [vmem:[%s8] sm:$0xf]
    %v459 = vpack.c.bf16 %v307, %v307
    %v460 = vpack.c.bf16 %v323, %v323
    %462 = vrot.lane.b32.xlu0 %v334, 120
    %v463 = vpop.permute.xlu0 %462
    %v465 = vsel %vm337, %v463, 0
    %v468 = vsel %vm341, %v459, 0
    %470 = vmatprep.subr.bf16.mxu0 0
    %471 = vmatpush1.bf16.msra.mxu0 %v468
    %472 = vmatprep.subr.bf16.mxu0 0
    %473 = vmatpush1.bf16.msra.mxu0 0
    %474 = vmatprep.subr.bf16.mxu0 0
    %475 = vmatpush1.bf16.msra.mxu0 0
    %476 = vmatprep.subr.bf16.mxu0 0
    %477 = vmatpush1.bf16.msra.mxu0 0
    %478 = vmatprep.subr.bf16.mxu0 0
    %479 = vmatpush1.bf16.msra.mxu0 0
    %480 = vmatprep.subr.bf16.mxu0 0
    %481 = vmatpush1.bf16.msra.mxu0 0
    %482 = vmatprep.subr.bf16.mxu0 0
    %483 = vmatpush1.bf16.msra.mxu0 0
    %484 = vmatprep.subr.bf16.mxu0 0
    %485 = vmatpush1.bf16.msra.mxu0 0
    %486 = vmatprep.subr.bf16.mxu0 0
    %487 = vmatpush1.bf16.msra.mxu0 0
    %488 = vmatprep.subr.bf16.mxu0 0
    %489 = vmatpush1.bf16.msra.mxu0 0
    %490 = vmatprep.subr.bf16.mxu0 0
    %491 = vmatpush1.bf16.msra.mxu0 0
    %492 = vmatprep.subr.bf16.mxu0 0
    %493 = vmatpush1.bf16.msra.mxu0 0
    %494 = vmatprep.subr.bf16.mxu0 0
    %495 = vmatpush1.bf16.msra.mxu0 0
    %496 = vmatprep.subr.bf16.mxu0 0
    %497 = vmatpush1.bf16.msra.mxu0 0
    %498 = vmatprep.subr.bf16.mxu0 0
    %499 = vmatpush1.bf16.msra.mxu0 0
    %500 = vmatprep.subr.bf16.mxu0 0
    %501 = vmatpush1.bf16.msra.mxu0 0
    %502 = vmatprep.mubr.bf16.mxu0 0
    %503 = vmatmul.mubr.bf16.gmra.mrb[0].mxu0 %v465
    %v504 = vpop.f32.mrb[0].mxu0
    %v505 = vadd.f32 %v61, %v504
    %v506 = vpop.f32.mrb[0].mxu0
    %v507 = vpop.f32.mrb[0].mxu0
    %v508 = vadd.f32 %v62, %v507
    %v509 = vpop.f32.mrb[0].mxu0
    %510 = vdwg.mxu0
    %v511 = vsel %vm386, %v505, -inf
    %512 = vmax.xlane.f32.xlu0 %v511
    %v513 = vpop.xlane.xlu0 %512
    %v514 = vsel %vm386, %v508, -inf
    %515 = vmax.xlane.f32.xlu0 %v514
    %v516 = vpop.xlane.xlu0 %515
    %v517 = vsub.f32 %v505, %v513
    %v518 = vsub.f32 %v508, %v516
    %v519 = vmul.f32 %v517, 1.442695
    %v520 = vpow.pop %v519
    %v521 = vmul.f32 %v518, 1.442695
    %v522 = vpow.pop %v521
    %v523 = vsel %vm386, %v520, 0.0
    %524 = vadd.xlane.f32.xlu0 %v523
    %v525 = vpop.xlane.xlu0 %524
    %v526 = vsel %vm386, %v522, 0.0
    %527 = vadd.xlane.f32.xlu0 %v526
    %v528 = vpop.xlane.xlu0 %527
    %v529 = vrcp.pop %v525
    %v530 = vmul.f32 %v520, %v529
    %v531 = vrcp.pop %v528
    %v532 = vmul.f32 %v522, %v531
    %v533 = vpack.c.bf16 %v532, %v530
    %v535 = vsel %vm386, %v533, 0
    %v538 = vsel %vm386, %v460, 0
    %540 = vmatprep.subr.bf16.mxu0 0
    %541 = vmatpush1.bf16.xpose.msra.mxu0 %v538
    %542 = vmatprep.subr.bf16.mxu0 0
    %543 = vmatpush1.bf16.xpose.msra.mxu0 0
    %544 = vmatprep.subr.bf16.mxu0 0
    %545 = vmatpush1.bf16.xpose.msra.mxu0 0
    %546 = vmatprep.subr.bf16.mxu0 0
    %547 = vmatpush1.bf16.xpose.msra.mxu0 0
    %548 = vmatprep.subr.bf16.mxu0 0
    %549 = vmatpush1.bf16.xpose.msra.mxu0 0
    %550 = vmatprep.subr.bf16.mxu0 0
    %551 = vmatpush1.bf16.xpose.msra.mxu0 0
    %552 = vmatprep.subr.bf16.mxu0 0
    %553 = vmatpush1.bf16.xpose.msra.mxu0 0
    %554 = vmatprep.subr.bf16.mxu0 0
    %555 = vmatpush1.bf16.xpose.msra.mxu0 0
    %556 = vmatprep.subr.bf16.mxu0 0
    %557 = vmatpush1.bf16.xpose.msra.mxu0 0
    %558 = vmatprep.subr.bf16.mxu0 0
    %559 = vmatpush1.bf16.xpose.msra.mxu0 0
    %560 = vmatprep.subr.bf16.mxu0 0
    %561 = vmatpush1.bf16.xpose.msra.mxu0 0
    %562 = vmatprep.subr.bf16.mxu0 0
    %563 = vmatpush1.bf16.xpose.msra.mxu0 0
    %564 = vmatprep.subr.bf16.mxu0 0
    %565 = vmatpush1.bf16.xpose.msra.mxu0 0
    %566 = vmatprep.subr.bf16.mxu0 0
    %567 = vmatpush1.bf16.xpose.msra.mxu0 0
    %568 = vmatprep.subr.bf16.mxu0 0
    %569 = vmatpush1.bf16.xpose.msra.mxu0 0
    %570 = vmatprep.subr.bf16.mxu0 0
    %571 = vmatpush1.bf16.xpose.msra.mxu0 0
    %572 = vmatprep.mubr.bf16.mxu0 0
    %573 = vmatmul.mubr.bf16.gmra.mrb[0].mxu0 %v535
    %v574 = vpop.f32.mrb[0].mxu0
    %v575 = vadd.f32 0.0, %v574
    %v576 = vpop.f32.mrb[0].mxu0
    %v577 = vpop.f32.mrb[0].mxu0
    %v578 = vadd.f32 0.0, %v577
    %v579 = vpop.f32.mrb[0].mxu0
    %580 = vdwg.mxu0
    %v581 = vpack.c.bf16 %v578, %v575
    %s582 = scalar_lea.vmem %s8, 4
    %v583 = vld [vmem:[%s582] sm:$0xf]
    %v585 = vsel %vm337, %v581, 0
    %v588 = vsel %vm341, %v583, 0
    %590 = vmatprep.subr.bf16.mxu0 0
    %591 = vmatpush1.bf16.msra.mxu0 %v588
    %592 = vmatprep.subr.bf16.mxu0 0
    %593 = vmatpush1.bf16.msra.mxu0 0
    %594 = vmatprep.subr.bf16.mxu0 0
    %595 = vmatpush1.bf16.msra.mxu0 0
    %596 = vmatprep.subr.bf16.mxu0 0
    %597 = vmatpush1.bf16.msra.mxu0 0
    %598 = vmatprep.subr.bf16.mxu0 0
    %599 = vmatpush1.bf16.msra.mxu0 0
    %600 = vmatprep.subr.bf16.mxu0 0
    %601 = vmatpush1.bf16.msra.mxu0 0
    %602 = vmatprep.subr.bf16.mxu0 0
    %603 = vmatpush1.bf16.msra.mxu0 0
    %604 = vmatprep.subr.bf16.mxu0 0
    %605 = vmatpush1.bf16.msra.mxu0 0
    %606 = vmatprep.subr.bf16.mxu0 0
    %607 = vmatpush1.bf16.msra.mxu0 0
    %608 = vmatprep.subr.bf16.mxu0 0
    %609 = vmatpush1.bf16.msra.mxu0 0
    %610 = vmatprep.subr.bf16.mxu0 0
    %611 = vmatpush1.bf16.msra.mxu0 0
    %612 = vmatprep.subr.bf16.mxu0 0
    %613 = vmatpush1.bf16.msra.mxu0 0
    %614 = vmatprep.subr.bf16.mxu0 0
    %615 = vmatpush1.bf16.msra.mxu0 0
    %616 = vmatprep.subr.bf16.mxu0 0
    %617 = vmatpush1.bf16.msra.mxu0 0
    %618 = vmatprep.subr.bf16.mxu0 0
    %619 = vmatpush1.bf16.msra.mxu0 0
    %620 = vmatprep.subr.bf16.mxu0 0
    %621 = vmatpush1.bf16.msra.mxu0 0
    %622 = vmatprep.mubr.bf16.mxu0 0
    %623 = vmatmul.mubr.bf16.gmra.mrb[0].mxu0 %v585
    %v624 = vpop.f32.mrb[0].mxu0
    %v625 = vadd.f32 0.0, %v624
    %v626 = vpop.f32.mrb[0].mxu0
    %v627 = vpop.f32.mrb[0].mxu0
    %v628 = vadd.f32 0.0, %v627
    %v629 = vpop.f32.mrb[0].mxu0
    %630 = vdwg.mxu0
    %v632 = vsel %vm337, %v457, 0
    %v635 = vsel %vm341, %v458, 0
    %637 = vmatprep.subr.bf16.mxu0 0
    %638 = vmatpush1.bf16.msra.mxu0 %v635
    %639 = vmatprep.subr.bf16.mxu0 0
    %640 = vmatpush1.bf16.msra.mxu0 0
    %641 = vmatprep.subr.bf16.mxu0 0
    %642 = vmatpush1.bf16.msra.mxu0 0
    %643 = vmatprep.subr.bf16.mxu0 0
    %644 = vmatpush1.bf16.msra.mxu0 0
    %645 = vmatprep.subr.bf16.mxu0 0
    %646 = vmatpush1.bf16.msra.mxu0 0
    %647 = vmatprep.subr.bf16.mxu0 0
    %648 = vmatpush1.bf16.msra.mxu0 0
    %649 = vmatprep.subr.bf16.mxu0 0
    %650 = vmatpush1.bf16.msra.mxu0 0
    %651 = vmatprep.subr.bf16.mxu0 0
    %652 = vmatpush1.bf16.msra.mxu0 0
    %653 = vmatprep.subr.bf16.mxu0 0
    %654 = vmatpush1.bf16.msra.mxu0 0
    %655 = vmatprep.subr.bf16.mxu0 0
    %656 = vmatpush1.bf16.msra.mxu0 0
    %657 = vmatprep.subr.bf16.mxu0 0
    %658 = vmatpush1.bf16.msra.mxu0 0
    %659 = vmatprep.subr.bf16.mxu0 0
    %660 = vmatpush1.bf16.msra.mxu0 0
    %661 = vmatprep.subr.bf16.mxu0 0
    %662 = vmatpush1.bf16.msra.mxu0 0
    %663 = vmatprep.subr.bf16.mxu0 0
    %664 = vmatpush1.bf16.msra.mxu0 0
    %665 = vmatprep.subr.bf16.mxu0 0
    %666 = vmatpush1.bf16.msra.mxu0 0
    %667 = vmatprep.subr.bf16.mxu0 0
    %668 = vmatpush1.bf16.msra.mxu0 0
    %669 = vmatprep.mubr.bf16.mxu0 0
    %670 = vmatmul.mubr.bf16.gmra.mrb[0].mxu0 %v632
    %v671 = vpop.f32.mrb[0].mxu0
    %v672 = vadd.f32 %v625, %v671
    %v673 = vpop.f32.mrb[0].mxu0
    %v674 = vpop.f32.mrb[0].mxu0
    %v675 = vadd.f32 %v628, %v674
    %v676 = vpop.f32.mrb[0].mxu0
    %677 = vdwg.mxu0
    %v678 = vpack.c.bf16 %v312, %v312
    %v679 = vpack.c.bf16 %v328, %v328
    %680 = vrot.lane.b32.xlu0 %v334, 112
    %v681 = vpop.permute.xlu0 %680
    %v683 = vsel %vm337, %v681, 0
    %v686 = vsel %vm341, %v678, 0
    %688 = vmatprep.subr.bf16.mxu0 0
    %689 = vmatpush1.bf16.msra.mxu0 %v686
    %690 = vmatprep.subr.bf16.mxu0 0
    %691 = vmatpush1.bf16.msra.mxu0 0
    %692 = vmatprep.subr.bf16.mxu0 0
    %693 = vmatpush1.bf16.msra.mxu0 0
    %694 = vmatprep.subr.bf16.mxu0 0
    %695 = vmatpush1.bf16.msra.mxu0 0
    %696 = vmatprep.subr.bf16.mxu0 0
    %697 = vmatpush1.bf16.msra.mxu0 0
    %698 = vmatprep.subr.bf16.mxu0 0
    %699 = vmatpush1.bf16.msra.mxu0 0
    %700 = vmatprep.subr.bf16.mxu0 0
    %701 = vmatpush1.bf16.msra.mxu0 0
    %702 = vmatprep.subr.bf16.mxu0 0
    %703 = vmatpush1.bf16.msra.mxu0 0
    %704 = vmatprep.subr.bf16.mxu0 0
    %705 = vmatpush1.bf16.msra.mxu0 0
    %706 = vmatprep.subr.bf16.mxu0 0
    %707 = vmatpush1.bf16.msra.mxu0 0
    %708 = vmatprep.subr.bf16.mxu0 0
    %709 = vmatpush1.bf16.msra.mxu0 0
    %710 = vmatprep.subr.bf16.mxu0 0
    %711 = vmatpush1.bf16.msra.mxu0 0
    %712 = vmatprep.subr.bf16.mxu0 0
    %713 = vmatpush1.bf16.msra.mxu0 0
    %714 = vmatprep.subr.bf16.mxu0 0
    %715 = vmatpush1.bf16.msra.mxu0 0
    %716 = vmatprep.subr.bf16.mxu0 0
    %717 = vmatpush1.bf16.msra.mxu0 0
    %718 = vmatprep.subr.bf16.mxu0 0
    %719 = vmatpush1.bf16.msra.mxu0 0
    %720 = vmatprep.mubr.bf16.mxu0 0
    %721 = vmatmul.mubr.bf16.gmra.mrb[0].mxu0 %v683
    %v722 = vpop.f32.mrb[0].mxu0
    %v723 = vadd.f32 %v61, %v722
    %v724 = vpop.f32.mrb[0].mxu0
    %v725 = vpop.f32.mrb[0].mxu0
    %v726 = vadd.f32 %v62, %v725
    %v727 = vpop.f32.mrb[0].mxu0
    %728 = vdwg.mxu0
    %v729 = vsel %vm386, %v723, -inf
    %730 = vmax.xlane.f32.xlu0 %v729
    %v731 = vpop.xlane.xlu0 %730
    %v732 = vsel %vm386, %v726, -inf
    %733 = vmax.xlane.f32.xlu0 %v732
    %v734 = vpop.xlane.xlu0 %733
    %v735 = vsub.f32 %v723, %v731
    %v736 = vsub.f32 %v726, %v734
    %v737 = vmul.f32 %v735, 1.442695
    %v738 = vpow.pop %v737
    %v739 = vmul.f32 %v736, 1.442695
    %v740 = vpow.pop %v739
    %v741 = vsel %vm386, %v738, 0.0
    %742 = vadd.xlane.f32.xlu0 %v741
    %v743 = vpop.xlane.xlu0 %742
    %v744 = vsel %vm386, %v740, 0.0
    %745 = vadd.xlane.f32.xlu0 %v744
    %v746 = vpop.xlane.xlu0 %745
    %v747 = vrcp.pop %v743
    %v748 = vmul.f32 %v738, %v747
    %v749 = vrcp.pop %v746
    %v750 = vmul.f32 %v740, %v749
    %v751 = vpack.c.bf16 %v750, %v748
    %v753 = vsel %vm386, %v751, 0
    %v756 = vsel %vm386, %v679, 0
    %758 = vmatprep.subr.bf16.mxu0 0
    %759 = vmatpush1.bf16.xpose.msra.mxu0 %v756
    %760 = vmatprep.subr.bf16.mxu0 0
    %761 = vmatpush1.bf16.xpose.msra.mxu0 0
    %762 = vmatprep.subr.bf16.mxu0 0
    %763 = vmatpush1.bf16.xpose.msra.mxu0 0
    %764 = vmatprep.subr.bf16.mxu0 0
    %765 = vmatpush1.bf16.xpose.msra.mxu0 0
    %766 = vmatprep.subr.bf16.mxu0 0
    %767 = vmatpush1.bf16.xpose.msra.mxu0 0
    %768 = vmatprep.subr.bf16.mxu0 0
    %769 = vmatpush1.bf16.xpose.msra.mxu0 0
    %770 = vmatprep.subr.bf16.mxu0 0
    %771 = vmatpush1.bf16.xpose.msra.mxu0 0
    %772 = vmatprep.subr.bf16.mxu0 0
    %773 = vmatpush1.bf16.xpose.msra.mxu0 0
    %774 = vmatprep.subr.bf16.mxu0 0
    %775 = vmatpush1.bf16.xpose.msra.mxu0 0
    %776 = vmatprep.subr.bf16.mxu0 0
    %777 = vmatpush1.bf16.xpose.msra.mxu0 0
    %778 = vmatprep.subr.bf16.mxu0 0
    %779 = vmatpush1.bf16.xpose.msra.mxu0 0
    %780 = vmatprep.subr.bf16.mxu0 0
    %781 = vmatpush1.bf16.xpose.msra.mxu0 0
    %782 = vmatprep.subr.bf16.mxu0 0
    %783 = vmatpush1.bf16.xpose.msra.mxu0 0
    %784 = vmatprep.subr.bf16.mxu0 0
    %785 = vmatpush1.bf16.xpose.msra.mxu0 0
    %786 = vmatprep.subr.bf16.mxu0 0
    %787 = vmatpush1.bf16.xpose.msra.mxu0 0
    %788 = vmatprep.subr.bf16.mxu0 0
    %789 = vmatpush1.bf16.xpose.msra.mxu0 0
    %790 = vmatprep.mubr.bf16.mxu0 0
    %791 = vmatmul.mubr.bf16.gmra.mrb[0].mxu0 %v753
    %v792 = vpop.f32.mrb[0].mxu0
    %v793 = vadd.f32 0.0, %v792
    %v794 = vpop.f32.mrb[0].mxu0
    %v795 = vpop.f32.mrb[0].mxu0
    %v796 = vadd.f32 0.0, %v795
    %v797 = vpop.f32.mrb[0].mxu0
    %798 = vdwg.mxu0
    %v799 = vpack.c.bf16 %v796, %v793
    %s800 = scalar_lea.vmem %s8, 8
    %v801 = vld [vmem:[%s800] sm:$0xf]
    %v803 = vsel %vm337, %v799, 0
    %v806 = vsel %vm341, %v801, 0
    %808 = vmatprep.subr.bf16.mxu0 0
    %809 = vmatpush1.bf16.msra.mxu0 %v806
    %810 = vmatprep.subr.bf16.mxu0 0
    %811 = vmatpush1.bf16.msra.mxu0 0
    %812 = vmatprep.subr.bf16.mxu0 0
    %813 = vmatpush1.bf16.msra.mxu0 0
    %814 = vmatprep.subr.bf16.mxu0 0
    %815 = vmatpush1.bf16.msra.mxu0 0
    %816 = vmatprep.subr.bf16.mxu0 0
    %817 = vmatpush1.bf16.msra.mxu0 0
    %818 = vmatprep.subr.bf16.mxu0 0
    %819 = vmatpush1.bf16.msra.mxu0 0
    %820 = vmatprep.subr.bf16.mxu0 0
    %821 = vmatpush1.bf16.msra.mxu0 0
    %822 = vmatprep.subr.bf16.mxu0 0
    %823 = vmatpush1.bf16.msra.mxu0 0
    %824 = vmatprep.subr.bf16.mxu0 0
    %825 = vmatpush1.bf16.msra.mxu0 0
    %826 = vmatprep.subr.bf16.mxu0 0
    %827 = vmatpush1.bf16.msra.mxu0 0
    %828 = vmatprep.subr.bf16.mxu0 0
    %829 = vmatpush1.bf16.msra.mxu0 0
    %830 = vmatprep.subr.bf16.mxu0 0
    %831 = vmatpush1.bf16.msra.mxu0 0
    %832 = vmatprep.subr.bf16.mxu0 0
    %833 = vmatpush1.bf16.msra.mxu0 0
    %834 = vmatprep.subr.bf16.mxu0 0
    %835 = vmatpush1.bf16.msra.mxu0 0
    %836 = vmatprep.subr.bf16.mxu0 0
    %837 = vmatpush1.bf16.msra.mxu0 0
    %838 = vmatprep.subr.bf16.mxu0 0
    %839 = vmatpush1.bf16.msra.mxu0 0
    %840 = vmatprep.mubr.bf16.mxu0 0
    %841 = vmatmul.mubr.bf16.gmra.mrb[0].mxu0 %v803
    %v842 = vpop.f32.mrb[0].mxu0
    %v843 = vadd.f32 0.0, %v842
    %v844 = vpop.f32.mrb[0].mxu0
    %v845 = vpop.f32.mrb[0].mxu0
    %v846 = vadd.f32 0.0, %v845
    %v847 = vpop.f32.mrb[0].mxu0
    %848 = vdwg.mxu0
    %v849 = vadd.f32 %v672, %v843
    %v850 = vadd.f32 %v675, %v846
    %v851 = vpack.c.bf16 %v315, %v315
    %v852 = vpack.c.bf16 %v331, %v331
    %853 = vrot.lane.b32.xlu0 %v334, 104
    %v854 = vpop.permute.xlu0 %853
    %v856 = vsel %vm337, %v854, 0
    %v859 = vsel %vm341, %v851, 0
    %861 = vmatprep.subr.bf16.mxu0 0
    %862 = vmatpush1.bf16.msra.mxu0 %v859
    %863 = vmatprep.subr.bf16.mxu0 0
    %864 = vmatpush1.bf16.msra.mxu0 0
    %865 = vmatprep.subr.bf16.mxu0 0
    %866 = vmatpush1.bf16.msra.mxu0 0
    %867 = vmatprep.subr.bf16.mxu0 0
    %868 = vmatpush1.bf16.msra.mxu0 0
    %869 = vmatprep.subr.bf16.mxu0 0
    %870 = vmatpush1.bf16.msra.mxu0 0
    %871 = vmatprep.subr.bf16.mxu0 0
    %872 = vmatpush1.bf16.msra.mxu0 0
    %873 = vmatprep.subr.bf16.mxu0 0
    %874 = vmatpush1.bf16.msra.mxu0 0
    %875 = vmatprep.subr.bf16.mxu0 0
    %876 = vmatpush1.bf16.msra.mxu0 0
    %877 = vmatprep.subr.bf16.mxu0 0
    %878 = vmatpush1.bf16.msra.mxu0 0
    %879 = vmatprep.subr.bf16.mxu0 0
    %880 = vmatpush1.bf16.msra.mxu0 0
    %881 = vmatprep.subr.bf16.mxu0 0
    %882 = vmatpush1.bf16.msra.mxu0 0
    %883 = vmatprep.subr.bf16.mxu0 0
    %884 = vmatpush1.bf16.msra.mxu0 0
    %885 = vmatprep.subr.bf16.mxu0 0
    %886 = vmatpush1.bf16.msra.mxu0 0
    %887 = vmatprep.subr.bf16.mxu0 0
    %888 = vmatpush1.bf16.msra.mxu0 0
    %889 = vmatprep.subr.bf16.mxu0 0
    %890 = vmatpush1.bf16.msra.mxu0 0
    %891 = vmatprep.subr.bf16.mxu0 0
    %892 = vmatpush1.bf16.msra.mxu0 0
    %893 = vmatprep.mubr.bf16.mxu0 0
    %894 = vmatmul.mubr.bf16.gmra.mrb[0].mxu0 %v856
    %v895 = vpop.f32.mrb[0].mxu0
    %v896 = vadd.f32 %v61, %v895
    %v897 = vpop.f32.mrb[0].mxu0
    %v898 = vpop.f32.mrb[0].mxu0
    %v899 = vadd.f32 %v62, %v898
    %v900 = vpop.f32.mrb[0].mxu0
    %901 = vdwg.mxu0
    %v902 = vsel %vm386, %v896, -inf
    %903 = vmax.xlane.f32.xlu0 %v902
    %v904 = vpop.xlane.xlu0 %903
    %v905 = vsel %vm386, %v899, -inf
    %906 = vmax.xlane.f32.xlu0 %v905
    %v907 = vpop.xlane.xlu0 %906
    %v908 = vsub.f32 %v896, %v904
    %v909 = vsub.f32 %v899, %v907
    %v910 = vmul.f32 %v908, 1.442695
    %v911 = vpow.pop %v910
    %v912 = vmul.f32 %v909, 1.442695
    %v913 = vpow.pop %v912
    %v914 = vsel %vm386, %v911, 0.0
    %915 = vadd.xlane.f32.xlu0 %v914
    %v916 = vpop.xlane.xlu0 %915
    %v917 = vsel %vm386, %v913, 0.0
    %918 = vadd.xlane.f32.xlu0 %v917
    %v919 = vpop.xlane.xlu0 %918
    %v920 = vrcp.pop %v916
    %v921 = vmul.f32 %v911, %v920
    %v922 = vrcp.pop %v919
    %v923 = vmul.f32 %v913, %v922
    %v924 = vpack.c.bf16 %v923, %v921
    %v926 = vsel %vm386, %v924, 0
    %v929 = vsel %vm386, %v852, 0
    %931 = vmatprep.subr.bf16.mxu0 0
    %932 = vmatpush1.bf16.xpose.msra.mxu0 %v929
    %933 = vmatprep.subr.bf16.mxu0 0
    %934 = vmatpush1.bf16.xpose.msra.mxu0 0
    %935 = vmatprep.subr.bf16.mxu0 0
    %936 = vmatpush1.bf16.xpose.msra.mxu0 0
    %937 = vmatprep.subr.bf16.mxu0 0
    %938 = vmatpush1.bf16.xpose.msra.mxu0 0
    %939 = vmatprep.subr.bf16.mxu0 0
    %940 = vmatpush1.bf16.xpose.msra.mxu0 0
    %941 = vmatprep.subr.bf16.mxu0 0
    %942 = vmatpush1.bf16.xpose.msra.mxu0 0
    %943 = vmatprep.subr.bf16.mxu0 0
    %944 = vmatpush1.bf16.xpose.msra.mxu0 0
    %945 = vmatprep.subr.bf16.mxu0 0
    %946 = vmatpush1.bf16.xpose.msra.mxu0 0
    %947 = vmatprep.subr.bf16.mxu0 0
    %948 = vmatpush1.bf16.xpose.msra.mxu0 0
    %949 = vmatprep.subr.bf16.mxu0 0
    %950 = vmatpush1.bf16.xpose.msra.mxu0 0
    %951 = vmatprep.subr.bf16.mxu0 0
    %952 = vmatpush1.bf16.xpose.msra.mxu0 0
    %953 = vmatprep.subr.bf16.mxu0 0
    %954 = vmatpush1.bf16.xpose.msra.mxu0 0
    %955 = vmatprep.subr.bf16.mxu0 0
    %956 = vmatpush1.bf16.xpose.msra.mxu0 0
    %957 = vmatprep.subr.bf16.mxu0 0
    %958 = vmatpush1.bf16.xpose.msra.mxu0 0
    %959 = vmatprep.subr.bf16.mxu0 0
    %960 = vmatpush1.bf16.xpose.msra.mxu0 0
    %961 = vmatprep.subr.bf16.mxu0 0
    %962 = vmatpush1.bf16.xpose.msra.mxu0 0
    %963 = vmatprep.mubr.bf16.mxu0 0
    %964 = vmatmul.mubr.bf16.gmra.mrb[0].mxu0 %v926
    %v965 = vpop.f32.mrb[0].mxu0
    %v966 = vadd.f32 0.0, %v965
    %v967 = vpop.f32.mrb[0].mxu0
    %v968 = vpop.f32.mrb[0].mxu0
    %v969 = vadd.f32 0.0, %v968
    %v970 = vpop.f32.mrb[0].mxu0
    %971 = vdwg.mxu0
    %v972 = vpack.c.bf16 %v969, %v966
    %s973 = scalar_lea.vmem %s8, 12
    %v974 = vld [vmem:[%s973] sm:$0xf]
    %v976 = vsel %vm337, %v972, 0
    %v979 = vsel %vm341, %v974, 0
    %981 = vmatprep.subr.bf16.mxu0 0
    %982 = vmatpush1.bf16.msra.mxu0 %v979
    %983 = vmatprep.subr.bf16.mxu0 0
    %984 = vmatpush1.bf16.msra.mxu0 0
    %985 = vmatprep.subr.bf16.mxu0 0
    %986 = vmatpush1.bf16.msra.mxu0 0
    %987 = vmatprep.subr.bf16.mxu0 0
    %988 = vmatpush1.bf16.msra.mxu0 0
    %989 = vmatprep.subr.bf16.mxu0 0
    %990 = vmatpush1.bf16.msra.mxu0 0
    %991 = vmatprep.subr.bf16.mxu0 0
    %992 = vmatpush1.bf16.msra.mxu0 0
    %993 = vmatprep.subr.bf16.mxu0 0
    %994 = vmatpush1.bf16.msra.mxu0 0
    %995 = vmatprep.subr.bf16.mxu0 0
    %996 = vmatpush1.bf16.msra.mxu0 0
    %997 = vmatprep.subr.bf16.mxu0 0
    %998 = vmatpush1.bf16.msra.mxu0 0
    %999 = vmatprep.subr.bf16.mxu0 0
    %1000 = vmatpush1.bf16.msra.mxu0 0
    %1001 = vmatprep.subr.bf16.mxu0 0
    %1002 = vmatpush1.bf16.msra.mxu0 0
    %1003 = vmatprep.subr.bf16.mxu0 0
    %1004 = vmatpush1.bf16.msra.mxu0 0
    %1005 = vmatprep.subr.bf16.mxu0 0
    %1006 = vmatpush1.bf16.msra.mxu0 0
    %1007 = vmatprep.subr.bf16.mxu0 0
    %1008 = vmatpush1.bf16.msra.mxu0 0
    %1009 = vmatprep.subr.bf16.mxu0 0
    %1010 = vmatpush1.bf16.msra.mxu0 0
    %1011 = vmatprep.subr.bf16.mxu0 0
    %1012 = vmatpush1.bf16.msra.mxu0 0
    %1013 = vmatprep.mubr.bf16.mxu0 0
    %1014 = vmatmul.mubr.bf16.gmra.mrb[0].mxu0 %v976
    %v1015 = vpop.f32.mrb[0].mxu0
    %v1016 = vadd.f32 0.0, %v1015
    %v1017 = vpop.f32.mrb[0].mxu0
    %v1018 = vpop.f32.mrb[0].mxu0
    %v1019 = vadd.f32 0.0, %v1018
    %v1020 = vpop.f32.mrb[0].mxu0
    %1021 = vdwg.mxu0
    %v1022 = vadd.f32 %v849, %v1016
    %v1023 = vadd.f32 %v850, %v1019
    %v1024 = vld [vmem:[%s9] sm:$0x1]
    %v1026 = vlaneseq
    %v1027 = vshrl.u32 %v1026, 7
    %v1028 = vsub.s32 0, %v1027
    %v1029 = vrot.slane %v1024, %v1028
    %v1031 = vadd.f32 %v1022, %v1029
    %v1032 = vadd.f32 %v1023, %v1029
    %v1033 = vadd.f32 %v109, %v1031
    %v1034 = vadd.f32 %v110, %v1032
    %v1035 = vld [vmem:[%s10] sm:$0x1]
    %v1036 = vld [vmem:[%s11] sm:$0x1]
    %v1037 = vsel %vm67, %v1033, 0.0
    %1038 = vadd.xlane.f32.xlu0 %v1037
    %v1039 = vpop.xlane.xlu0 %1038
    %v1040 = vsel %vm67, %v1034, 0.0
    %1041 = vadd.xlane.f32.xlu0 %v1040
    %v1042 = vpop.xlane.xlu0 %1041
    %v1043 = vmul.f32 %v1039, %v74
    %v1044 = vmul.f32 %v1042, %v74
    %v1045 = vsub.f32 %v1033, %v1043
    %v1046 = vsub.f32 %v1034, %v1044
    %v1047 = vmul.f32 %v1045, %v1045
    %v1048 = vmul.f32 %v1046, %v1046
    %v1049 = vsel %vm67, %v1047, 0.0
    %1050 = vadd.xlane.f32.xlu0 %v1049
    %v1051 = vpop.xlane.xlu0 %1050
    %v1052 = vsel %vm67, %v1048, 0.0
    %1053 = vadd.xlane.f32.xlu0 %v1052
    %v1054 = vpop.xlane.xlu0 %1053
    %v1055 = vmul.f32 %v1051, %v74
    %v1056 = vmul.f32 %v1054, %v74
    %v1057 = vadd.f32 %v1055, 1e-12
    %v1058 = vadd.f32 %v1056, 1e-12
    %v1059 = vrsqrt.pop %v1057
    %v1060 = vrsqrt.pop %v1058
    %v1061 = vmul.f32 %v1045, %v1059
    %v1062 = vmul.f32 %v1046, %v1060
    %v1064 = vlaneseq
    %v1065 = vshrl.u32 %v1064, 7
    %v1066 = vsub.s32 0, %v1065
    %v1067 = vrot.slane %v1035, %v1066
    %v1069 = vmul.f32 %v1061, %v1067
    %v1070 = vmul.f32 %v1062, %v1067
    %v1072 = vlaneseq
    %v1073 = vshrl.u32 %v1072, 7
    %v1074 = vsub.s32 0, %v1073
    %v1075 = vrot.slane %v1036, %v1074
    %v1077 = vadd.f32 %v1069, %v1075
    %v1078 = vadd.f32 %v1070, %v1075
    %v1079 = vpack.c.bf16 %v1078, %v1077
    %v1080 = vld [vmem:[%s12] sm:$0xf]
    %v1081 = vld [vmem:[%s12 + $0x4] sm:$0xf]
    %v1082 = vld [vmem:[%s12 + $0x8] sm:$0xf]
    %v1083 = vld [vmem:[%s12 + $0xc] sm:$0xf]
    %v1084 = vld [vmem:[%s13] sm:$0x1]
    %v1086 = vlaneseq
    %v1087 = vshrl.u32 %v1086, 7
    %v1088 = vsub.s32 0, %v1087
    %v1089 = vrot.slane %v1084, %v1088
    %v1095 = vunpack.c.l.b16 %v1080
    %v1096 = vunpack.c.l.b16 %v1081
    %v1097 = vunpack.c.l.b16 %v1082
    %v1098 = vunpack.c.l.b16 %v1083
    %v1099 = vpack.c.b16 %v1096, %v1095
    %v1100 = vpack.c.b16 %v1098, %v1097
    %v1104 = vsel %vm67, %v1079, 0
    %1106 = vmatprep.subr.bf16.mxu0 0
    %1107 = vmatpush1.bf16.msra.mxu0 %v1099
    %1108 = vmatprep.subr.bf16.mxu0 0
    %1109 = vmatpush1.bf16.msra.mxu0 %v1100
    %1110 = vmatprep.subr.bf16.mxu0 0
    %1111 = vmatpush1.bf16.msra.mxu0 0
    %1112 = vmatprep.subr.bf16.mxu0 0
    %1113 = vmatpush1.bf16.msra.mxu0 0
    %1114 = vmatprep.subr.bf16.mxu0 0
    %1115 = vmatpush1.bf16.msra.mxu0 0
    %1116 = vmatprep.subr.bf16.mxu0 0
    %1117 = vmatpush1.bf16.msra.mxu0 0
    %1118 = vmatprep.subr.bf16.mxu0 0
    %1119 = vmatpush1.bf16.msra.mxu0 0
    %1120 = vmatprep.subr.bf16.mxu0 0
    %1121 = vmatpush1.bf16.msra.mxu0 0
    %1122 = vmatprep.subr.bf16.mxu0 0
    %1123 = vmatpush1.bf16.msra.mxu0 0
    %1124 = vmatprep.subr.bf16.mxu0 0
    %1125 = vmatpush1.bf16.msra.mxu0 0
    %1126 = vmatprep.subr.bf16.mxu0 0
    %1127 = vmatpush1.bf16.msra.mxu0 0
    %1128 = vmatprep.subr.bf16.mxu0 0
    %1129 = vmatpush1.bf16.msra.mxu0 0
    %1130 = vmatprep.subr.bf16.mxu0 0
    %1131 = vmatpush1.bf16.msra.mxu0 0
    %1132 = vmatprep.subr.bf16.mxu0 0
    %1133 = vmatpush1.bf16.msra.mxu0 0
    %1134 = vmatprep.subr.bf16.mxu0 0
    %1135 = vmatpush1.bf16.msra.mxu0 0
    %1136 = vmatprep.subr.bf16.mxu0 0
    %1137 = vmatpush1.bf16.msra.mxu0 0
    %1138 = vmatprep.mubr.bf16.mxu0 0
    %1139 = vmatmul.mubr.bf16.gmra.mrb[0].mxu0 %v1104
    %v1140 = vpop.f32.mrb[0].mxu0
    %v1141 = vadd.f32 %v1089, %v1140
    %v1142 = vpop.f32.mrb[0].mxu0
    %v1143 = vpop.f32.mrb[0].mxu0
    %v1144 = vadd.f32 %v1089, %v1143
    %v1145 = vpop.f32.mrb[0].mxu0
    %1146 = vdwg.mxu0
    %v1147 = vmul.f32 %v1141, 0.5
    %v1148 = vmul.f32 %v1144, 0.5
    %v1149 = vmul.f32 %v1141, 0.044715
    %v1150 = vmul.f32 %v1144, 0.044715
    %v1151 = vmul.f32 %v1149, %v1141
    %v1152 = vmul.f32 %v1150, %v1144
    %v1153 = vmul.f32 %v1151, %v1141
    %v1154 = vmul.f32 %v1152, %v1144
    %v1155 = vadd.f32 %v1141, %v1153
    %v1156 = vadd.f32 %v1144, %v1154
    %v1157 = vmul.f32 %v1155, 0.7978846
    %v1158 = vmul.f32 %v1156, 0.7978846
    %v1159 = vtanh.pop %v1157
    %v1160 = vtanh.pop %v1158
    %v1161 = vadd.f32 %v1159, 1.0
    %v1162 = vadd.f32 %v1160, 1.0
    %v1163 = vmul.f32 %v1147, %v1161
    %v1164 = vmul.f32 %v1148, %v1162
    %v1165 = vpack.c.bf16 %v1164, %v1163
    %v1166 = vld [vmem:[%s14] sm:$0xf]
    %v1167 = vld [vmem:[%s14 + $0x4] sm:$0xf]
    %v1168 = vld [vmem:[%s14 + $0x8] sm:$0xf]
    %v1169 = vld [vmem:[%s14 + $0xc] sm:$0xf]
    %v1170 = vld [vmem:[%s14 + $0x10] sm:$0xf]
    %v1171 = vld [vmem:[%s14 + $0x14] sm:$0xf]
    %v1172 = vld [vmem:[%s14 + $0x18] sm:$0xf]
    %v1173 = vld [vmem:[%s14 + $0x1c] sm:$0xf]
    %v1174 = vld [vmem:[%s15] sm:$0x1]
    %v1176 = vlaneseq
    %v1177 = vshrl.u32 %v1176, 7
    %v1178 = vsub.s32 0, %v1177
    %v1179 = vrot.slane %v1174, %v1178
    %v1189 = vunpack.c.l.b16 %v1166
    %v1190 = vunpack.c.l.b16 %v1167
    %v1191 = vunpack.c.l.b16 %v1168
    %v1192 = vunpack.c.l.b16 %v1169
    %v1193 = vunpack.c.l.b16 %v1170
    %v1194 = vunpack.c.l.b16 %v1171
    %v1195 = vunpack.c.l.b16 %v1172
    %v1196 = vunpack.c.l.b16 %v1173
    %v1197 = vpack.c.b16 %v1190, %v1189
    %v1198 = vpack.c.b16 %v1192, %v1191
    %v1199 = vpack.c.b16 %v1194, %v1193
    %v1200 = vpack.c.b16 %v1196, %v1195
    %vm1205 = vcmask 523264
    %v1207 = vsel %vm1205, %v1165, 0
    %1209 = vmatprep.subr.bf16.mxu0 0
    %1210 = vmatpush1.bf16.msra.mxu0 %v1197
    %1211 = vmatprep.subr.bf16.mxu0 0
    %1212 = vmatpush1.bf16.msra.mxu0 %v1198
    %1213 = vmatprep.subr.bf16.mxu0 0
    %1214 = vmatpush1.bf16.msra.mxu0 %v1199
    %1215 = vmatprep.subr.bf16.mxu0 0
    %1216 = vmatpush1.bf16.msra.mxu0 %v1200
    %1217 = vmatprep.subr.bf16.mxu0 0
    %1218 = vmatpush1.bf16.msra.mxu0 0
    %1219 = vmatprep.subr.bf16.mxu0 0
    %1220 = vmatpush1.bf16.msra.mxu0 0
    %1221 = vmatprep.subr.bf16.mxu0 0
    %1222 = vmatpush1.bf16.msra.mxu0 0
    %1223 = vmatprep.subr.bf16.mxu0 0
    %1224 = vmatpush1.bf16.msra.mxu0 0
    %1225 = vmatprep.subr.bf16.mxu0 0
    %1226 = vmatpush1.bf16.msra.mxu0 0
    %1227 = vmatprep.subr.bf16.mxu0 0
    %1228 = vmatpush1.bf16.msra.mxu0 0
    %1229 = vmatprep.subr.bf16.mxu0 0
    %1230 = vmatpush1.bf16.msra.mxu0 0
    %1231 = vmatprep.subr.bf16.mxu0 0
    %1232 = vmatpush1.bf16.msra.mxu0 0
    %1233 = vmatprep.subr.bf16.mxu0 0
    %1234 = vmatpush1.bf16.msra.mxu0 0
    %1235 = vmatprep.subr.bf16.mxu0 0
    %1236 = vmatpush1.bf16.msra.mxu0 0
    %1237 = vmatprep.subr.bf16.mxu0 0
    %1238 = vmatpush1.bf16.msra.mxu0 0
    %1239 = vmatprep.subr.bf16.mxu0 0
    %1240 = vmatpush1.bf16.msra.mxu0 0
    %1241 = vmatprep.mubr.bf16.mxu0 0
    %1242 = vmatmul.mubr.bf16.gmra.mrb[0].mxu0 %v1207
    %v1243 = vpop.f32.mrb[0].mxu0
    %v1244 = vadd.f32 %v1179, %v1243
    %v1245 = vpop.f32.mrb[0].mxu0
    %v1246 = vpop.f32.mrb[0].mxu0
    %v1247 = vadd.f32 %v1179, %v1246
    %v1248 = vpop.f32.mrb[0].mxu0
    %1249 = vdwg.mxu0
    %v1250 = vadd.f32 %v1077, %v1244
    %v1251 = vadd.f32 %v1078, %v1247
    %v1252 = vld [vmem:[%s16] sm:$0x1]
    %v1253 = vld [vmem:[%s17] sm:$0x1]
    %v1254 = vsel %vm67, %v1250, 0.0
    %1255 = vadd.xlane.f32.xlu0 %v1254
    %v1256 = vpop.xlane.xlu0 %1255
    %v1257 = vsel %vm67, %v1251, 0.0
    %1258 = vadd.xlane.f32.xlu0 %v1257
    %v1259 = vpop.xlane.xlu0 %1258
    %v1260 = vmul.f32 %v1256, %v74
    %v1261 = vmul.f32 %v1259, %v74
    %v1262 = vsub.f32 %v1250, %v1260
    %v1263 = vsub.f32 %v1251, %v1261
    %v1264 = vmul.f32 %v1262, %v1262
    %v1265 = vmul.f32 %v1263, %v1263
    %v1266 = vsel %vm67, %v1264, 0.0
    %1267 = vadd.xlane.f32.xlu0 %v1266
    %v1268 = vpop.xlane.xlu0 %1267
    %v1269 = vsel %vm67, %v1265, 0.0
    %1270 = vadd.xlane.f32.xlu0 %v1269
    %v1271 = vpop.xlane.xlu0 %1270
    %v1272 = vmul.f32 %v1268, %v74
    %v1273 = vmul.f32 %v1271, %v74
    %v1274 = vadd.f32 %v1272, 1e-12
    %v1275 = vadd.f32 %v1273, 1e-12
    %v1276 = vrsqrt.pop %v1274
    %v1277 = vrsqrt.pop %v1275
    %v1278 = vmul.f32 %v1262, %v1276
    %v1279 = vmul.f32 %v1263, %v1277
    %v1281 = vlaneseq
    %v1282 = vshrl.u32 %v1281, 7
    %v1283 = vsub.s32 0, %v1282
    %v1284 = vrot.slane %v1252, %v1283
    %v1286 = vmul.f32 %v1278, %v1284
    %v1287 = vmul.f32 %v1279, %v1284
    %v1289 = vlaneseq
    %v1290 = vshrl.u32 %v1289, 7
    %v1291 = vsub.s32 0, %v1290
    %v1292 = vrot.slane %v1253, %v1291
    %v1294 = vadd.f32 %v1286, %v1292
    %v1295 = vadd.f32 %v1287, %v1292
    %v1296 = vpack.c.bf16 %v1295, %v1294
    %s1297 = scalar_lea.vmem %s4, 16
    %v1298 = vld [vmem:[%s1297] sm:$0xf]
    %v1299 = vld [vmem:[%s1297 + $0x4] sm:$0xf]
    %v1300 = vld [vmem:[%s1297 + $0x8] sm:$0xf]
    %v1301 = vld [vmem:[%s1297 + $0xc] sm:$0xf]
    %s1302 = scalar_lea.vmem %s5, 1
    %v1303 = vld [vmem:[%s1302] sm:$0x1]
    %v1305 = vlaneseq
    %v1306 = vshrl.u32 %v1305, 7
    %v1307 = vsub.s32 0, %v1306
    %v1308 = vrot.slane %v1303, %v1307
    %v1314 = vunpack.c.l.b16 %v1298
    %v1315 = vunpack.c.l.b16 %v1299
    %v1316 = vunpack.c.l.b16 %v1300
    %v1317 = vunpack.c.l.b16 %v1301
    %v1318 = vpack.c.b16 %v1315, %v1314
    %v1319 = vpack.c.b16 %v1317, %v1316
    %v1323 = vsel %vm67, %v1296, 0
    %1325 = vmatprep.subr.bf16.mxu0 0
    %1326 = vmatpush1.bf16.msra.mxu0 %v1318
    %1327 = vmatprep.subr.bf16.mxu0 0
    %1328 = vmatpush1.bf16.msra.mxu0 %v1319
    %1329 = vmatprep.subr.bf16.mxu0 0
    %1330 = vmatpush1.bf16.msra.mxu0 0
    %1331 = vmatprep.subr.bf16.mxu0 0
    %1332 = vmatpush1.bf16.msra.mxu0 0
    %1333 = vmatprep.subr.bf16.mxu0 0
    %1334 = vmatpush1.bf16.msra.mxu0 0
    %1335 = vmatprep.subr.bf16.mxu0 0
    %1336 = vmatpush1.bf16.msra.mxu0 0
    %1337 = vmatprep.subr.bf16.mxu0 0
    %1338 = vmatpush1.bf16.msra.mxu0 0
    %1339 = vmatprep.subr.bf16.mxu0 0
    %1340 = vmatpush1.bf16.msra.mxu0 0
    %1341 = vmatprep.subr.bf16.mxu0 0
    %1342 = vmatpush1.bf16.msra.mxu0 0
    %1343 = vmatprep.subr.bf16.mxu0 0
    %1344 = vmatpush1.bf16.msra.mxu0 0
    %1345 = vmatprep.subr.bf16.mxu0 0
    %1346 = vmatpush1.bf16.msra.mxu0 0
    %1347 = vmatprep.subr.bf16.mxu0 0
    %1348 = vmatpush1.bf16.msra.mxu0 0
    %1349 = vmatprep.subr.bf16.mxu0 0
    %1350 = vmatpush1.bf16.msra.mxu0 0
    %1351 = vmatprep.subr.bf16.mxu0 0
    %1352 = vmatpush1.bf16.msra.mxu0 0
    %1353 = vmatprep.subr.bf16.mxu0 0
    %1354 = vmatpush1.bf16.msra.mxu0 0
    %1355 = vmatprep.subr.bf16.mxu0 0
    %1356 = vmatpush1.bf16.msra.mxu0 0
    %1357 = vmatprep.mubr.bf16.mxu0 0
    %1358 = vmatmul.mubr.bf16.gmra.mrb[0].mxu0 %v1323
    %v1359 = vpop.f32.mrb[0].mxu0
    %v1360 = vadd.f32 %v1308, %v1359
    %v1361 = vpop.f32.mrb[0].mxu0
    %v1362 = vpop.f32.mrb[0].mxu0
    %v1363 = vadd.f32 %v1308, %v1362
    %v1364 = vpop.f32.mrb[0].mxu0
    %1365 = vdwg.mxu0
    %v1366 = vmul.f32 %v1360, 0.35355338
    %v1367 = vmul.f32 %v1363, 0.35355338
    %s1368 = scalar_lea.vmem %s6, 32
    %v1369 = vld [vmem:[%s1368] sm:$0xf]
    %v1370 = vld [vmem:[%s1368 + $0x4] sm:$0xf]
    %v1371 = vld [vmem:[%s1368 + $0x8] sm:$0xf]
    %v1372 = vld [vmem:[%s1368 + $0xc] sm:$0xf]
    %v1373 = vld [vmem:[%s1368 + $0x10] sm:$0xf]
    %v1374 = vld [vmem:[%s1368 + $0x14] sm:$0xf]
    %v1375 = vld [vmem:[%s1368 + $0x18] sm:$0xf]
    %v1376 = vld [vmem:[%s1368 + $0x1c] sm:$0xf]
    %s1377 = scalar_lea.vmem %s7, 64
    %v1378 = vld [vmem:[%s1377] sm:$0xff]
    %v1379 = vld [vmem:[%s1377 + $0x8] sm:$0xff]
    %v1380 = vld [vmem:[%s1377 + $0x10] sm:$0xff]
    %v1381 = vld [vmem:[%s1377 + $0x18] sm:$0xff]
    %v1382 = vld [vmem:[%s1377 + $0x20] sm:$0xff]
    %v1383 = vld [vmem:[%s1377 + $0x28] sm:$0xff]
    %v1384 = vld [vmem:[%s1377 + $0x30] sm:$0xff]
    %v1385 = vld [vmem:[%s1377 + $0x38] sm:$0xff]
    %1387 = vset.pattern.permute.xlu0 0
    %1388 = vperm.xlu0 %1387, %v1378
    %v1389 = vpop.permute.xlu0 %1388
    %1392 = vset.pattern.permute.xlu0 0
    %1393 = vperm.xlu0 %1392, %v1379
    %v1394 = vpop.permute.xlu0 %1393
    %1397 = vset.pattern.permute.xlu0 0
    %1398 = vperm.xlu0 %1397, %v1380
    %v1399 = vpop.permute.xlu0 %1398
    %1402 = vset.pattern.permute.xlu0 0
    %1403 = vperm.xlu0 %1402, %v1381
    %v1404 = vpop.permute.xlu0 %1403
    %1407 = vset.pattern.permute.xlu0 0
    %1408 = vperm.xlu0 %1407, %v1382
    %v1409 = vpop.permute.xlu0 %1408
    %1412 = vset.pattern.permute.xlu0 0
    %1413 = vperm.xlu0 %1412, %v1383
    %v1414 = vpop.permute.xlu0 %1413
    %1417 = vset.pattern.permute.xlu0 0
    %1418 = vperm.xlu0 %1417, %v1384
    %v1419 = vpop.permute.xlu0 %1418
    %1422 = vset.pattern.permute.xlu0 0
    %1423 = vperm.xlu0 %1422, %v1385
    %v1424 = vpop.permute.xlu0 %1423
    %v1434 = vunpack.c.l.b16 %v1369
    %v1435 = vunpack.c.l.b16 %v1370
    %v1436 = vunpack.c.l.b16 %v1371
    %v1437 = vunpack.c.l.b16 %v1372
    %v1438 = vunpack.c.l.b16 %v1373
    %v1439 = vunpack.c.l.b16 %v1374
    %v1440 = vunpack.c.l.b16 %v1375
    %v1441 = vunpack.c.l.b16 %v1376
    %v1442 = vpack.c.b16 %v1435, %v1434
    %v1443 = vpack.c.b16 %v1437, %v1436
    %v1444 = vpack.c.b16 %v1439, %v1438
    %v1445 = vpack.c.b16 %v1441, %v1440
    %v1447 = vsel %vm67, %v1442, 0
    %v1450 = vsel %vm67, %v1443, 0
    %v1453 = vsel %vm67, %v1444, 0
    %v1456 = vsel %vm67, %v1445, 0
    %1458 = vmatprep.subr.bf16.mxu0 0
    %1459 = vmatpush1.bf16.xpose.msra.mxu0 %v1323
    %1460 = vmatprep.subr.bf16.mxu0 0
    %1461 = vmatpush1.bf16.xpose.msra.mxu0 0
    %1462 = vmatprep.subr.bf16.mxu0 0
    %1463 = vmatpush1.bf16.xpose.msra.mxu0 0
    %1464 = vmatprep.subr.bf16.mxu0 0
    %1465 = vmatpush1.bf16.xpose.msra.mxu0 0
    %1466 = vmatprep.subr.bf16.mxu0 0
    %1467 = vmatpush1.bf16.xpose.msra.mxu0 0
    %1468 = vmatprep.subr.bf16.mxu0 0
    %1469 = vmatpush1.bf16.xpose.msra.mxu0 0
    %1470 = vmatprep.subr.bf16.mxu0 0
    %1471 = vmatpush1.bf16.xpose.msra.mxu0 0
    %1472 = vmatprep.subr.bf16.mxu0 0
    %1473 = vmatpush1.bf16.xpose.msra.mxu0 0
    %1474 = vmatprep.subr.bf16.mxu0 0
    %1475 = vmatpush1.bf16.xpose.msra.mxu0 0
    %1476 = vmatprep.subr.bf16.mxu0 0
    %1477 = vmatpush1.bf16.xpose.msra.mxu0 0
    %1478 = vmatprep.subr.bf16.mxu0 0
    %1479 = vmatpush1.bf16.xpose.msra.mxu0 0
    %1480 = vmatprep.subr.bf16.mxu0 0
    %1481 = vmatpush1.bf16.xpose.msra.mxu0 0
    %1482 = vmatprep.subr.bf16.mxu0 0
    %1483 = vmatpush1.bf16.xpose.msra.mxu0 0
    %1484 = vmatprep.subr.bf16.mxu0 0
    %1485 = vmatpush1.bf16.xpose.msra.mxu0 0
    %1486 = vmatprep.subr.bf16.mxu0 0
    %1487 = vmatpush1.bf16.xpose.msra.mxu0 0
    %1488 = vmatprep.subr.bf16.mxu0 0
    %1489 = vmatpush1.bf16.xpose.msra.mxu0 0
    %1490 = vmatprep.mubr.bf16.mxu0 0
    %1491 = vmatmul.mubr.bf16.gmra.mrb[0].mxu0 %v1447
    %v1492 = vpop.f32.mrb[0].mxu0
    %v1493 = vadd.f32 %v1389, %v1492
    %v1494 = vpop.f32.mrb[0].mxu0
    %v1495 = vpop.f32.mrb[0].mxu0
    %v1496 = vadd.f32 %v1394, %v1495
    %v1497 = vpop.f32.mrb[0].mxu0
    %1498 = vmatprep.mubr.bf16.mxu0 0
    %1499 = vmatmul.mubr.bf16.gmra.mrb[0].mxu0 %v1450
    %v1500 = vpop.f32.mrb[0].mxu0
    %v1501 = vadd.f32 %v1399, %v1500
    %v1502 = vpop.f32.mrb[0].mxu0
    %v1503 = vpop.f32.mrb[0].mxu0
    %v1504 = vadd.f32 %v1404, %v1503
    %v1505 = vpop.f32.mrb[0].mxu0
    %1506 = vmatprep.mubr.bf16.mxu0 0
    %1507 = vmatmul.mubr.bf16.gmra.mrb[0].mxu0 %v1453
    %v1508 = vpop.f32.mrb[0].mxu0
    %v1509 = vadd.f32 %v1409, %v1508
    %v1510 = vpop.f32.mrb[0].mxu0
    %v1511 = vpop.f32.mrb[0].mxu0
    %v1512 = vadd.f32 %v1414, %v1511
    %v1513 = vpop.f32.mrb[0].mxu0
    %1514 = vmatprep.mubr.bf16.mxu0 0
    %1515 = vmatmul.mubr.bf16.gmra.mrb[0].mxu0 %v1456
    %v1516 = vpop.f32.mrb[0].mxu0
    %v1517 = vadd.f32 %v1419, %v1516
    %v1518 = vpop.f32.mrb[0].mxu0
    %v1519 = vpop.f32.mrb[0].mxu0
    %v1520 = vadd.f32 %v1424, %v1519
    %v1521 = vpop.f32.mrb[0].mxu0
    %1522 = vdwg.mxu0
    %v1523 = vpack.c.bf16 %v1367, %v1366
    %v1524 = vpack.c.bf16 %v1493, %v1493
    %v1525 = vpack.c.bf16 %v1509, %v1509
    %v1527 = vsel %vm337, %v1523, 0
    %v1530 = vsel %vm341, %v1524, 0
    %1532 = vmatprep.subr.bf16.mxu0 0
    %1533 = vmatpush1.bf16.msra.mxu0 %v1530
    %1534 = vmatprep.subr.bf16.mxu0 0
    %1535 = vmatpush1.bf16.msra.mxu0 0
    %1536 = vmatprep.subr.bf16.mxu0 0
    %1537 = vmatpush1.bf16.msra.mxu0 0
    %1538 = vmatprep.subr.bf16.mxu0 0
    %1539 = vmatpush1.bf16.msra.mxu0 0
    %1540 = vmatprep.subr.bf16.mxu0 0
    %1541 = vmatpush1.bf16.msra.mxu0 0
    %1542 = vmatprep.subr.bf16.mxu0 0
    %1543 = vmatpush1.bf16.msra.mxu0 0
    %1544 = vmatprep.subr.bf16.mxu0 0
    %1545 = vmatpush1.bf16.msra.mxu0 0
    %1546 = vmatprep.subr.bf16.mxu0 0
    %1547 = vmatpush1.bf16.msra.mxu0 0
    %1548 = vmatprep.subr.bf16.mxu0 0
    %1549 = vmatpush1.bf16.msra.mxu0 0
    %1550 = vmatprep.subr.bf16.mxu0 0
    %1551 = vmatpush1.bf16.msra.mxu0 0
    %1552 = vmatprep.subr.bf16.mxu0 0
    %1553 = vmatpush1.bf16.msra.mxu0 0
    %1554 = vmatprep.subr.bf16.mxu0 0
    %1555 = vmatpush1.bf16.msra.mxu0 0
    %1556 = vmatprep.subr.bf16.mxu0 0
    %1557 = vmatpush1.bf16.msra.mxu0 0
    %1558 = vmatprep.subr.bf16.mxu0 0
    %1559 = vmatpush1.bf16.msra.mxu0 0
    %1560 = vmatprep.subr.bf16.mxu0 0
    %1561 = vmatpush1.bf16.msra.mxu0 0
    %1562 = vmatprep.subr.bf16.mxu0 0
    %1563 = vmatpush1.bf16.msra.mxu0 0
    %1564 = vmatprep.mubr.bf16.mxu0 0
    %1565 = vmatmul.mubr.bf16.gmra.mrb[0].mxu0 %v1527
    %v1566 = vpop.f32.mrb[0].mxu0
    %v1567 = vadd.f32 %v61, %v1566
    %v1568 = vpop.f32.mrb[0].mxu0
    %v1569 = vpop.f32.mrb[0].mxu0
    %v1570 = vadd.f32 %v62, %v1569
    %v1571 = vpop.f32.mrb[0].mxu0
    %1572 = vdwg.mxu0
    %v1573 = vsel %vm386, %v1567, -inf
    %1574 = vmax.xlane.f32.xlu0 %v1573
    %v1575 = vpop.xlane.xlu0 %1574
    %v1576 = vsel %vm386, %v1570, -inf
    %1577 = vmax.xlane.f32.xlu0 %v1576
    %v1578 = vpop.xlane.xlu0 %1577
    %v1579 = vsub.f32 %v1567, %v1575
    %v1580 = vsub.f32 %v1570, %v1578
    %v1581 = vmul.f32 %v1579, 1.442695
    %v1582 = vpow.pop %v1581
    %v1583 = vmul.f32 %v1580, 1.442695
    %v1584 = vpow.pop %v1583
    %v1585 = vsel %vm386, %v1582, 0.0
    %1586 = vadd.xlane.f32.xlu0 %v1585
    %v1587 = vpop.xlane.xlu0 %1586
    %v1588 = vsel %vm386, %v1584, 0.0
    %1589 = vadd.xlane.f32.xlu0 %v1588
    %v1590 = vpop.xlane.xlu0 %1589
    %v1591 = vrcp.pop %v1587
    %v1592 = vmul.f32 %v1582, %v1591
    %v1593 = vrcp.pop %v1590
    %v1594 = vmul.f32 %v1584, %v1593
    %v1595 = vpack.c.bf16 %v1594, %v1592
    %v1597 = vsel %vm386, %v1595, 0
    %v1600 = vsel %vm386, %v1525, 0
    %1602 = vmatprep.subr.bf16.mxu0 0
    %1603 = vmatpush1.bf16.xpose.msra.mxu0 %v1600
    %1604 = vmatprep.subr.bf16.mxu0 0
    %1605 = vmatpush1.bf16.xpose.msra.mxu0 0
    %1606 = vmatprep.subr.bf16.mxu0 0
    %1607 = vmatpush1.bf16.xpose.msra.mxu0 0
    %1608 = vmatprep.subr.bf16.mxu0 0
    %1609 = vmatpush1.bf16.xpose.msra.mxu0 0
    %1610 = vmatprep.subr.bf16.mxu0 0
    %1611 = vmatpush1.bf16.xpose.msra.mxu0 0
    %1612 = vmatprep.subr.bf16.mxu0 0
    %1613 = vmatpush1.bf16.xpose.msra.mxu0 0
    %1614 = vmatprep.subr.bf16.mxu0 0
    %1615 = vmatpush1.bf16.xpose.msra.mxu0 0
    %1616 = vmatprep.subr.bf16.mxu0 0
    %1617 = vmatpush1.bf16.xpose.msra.mxu0 0
    %1618 = vmatprep.subr.bf16.mxu0 0
    %1619 = vmatpush1.bf16.xpose.msra.mxu0 0
    %1620 = vmatprep.subr.bf16.mxu0 0
    %1621 = vmatpush1.bf16.xpose.msra.mxu0 0
    %1622 = vmatprep.subr.bf16.mxu0 0
    %1623 = vmatpush1.bf16.xpose.msra.mxu0 0
    %1624 = vmatprep.subr.bf16.mxu0 0
    %1625 = vmatpush1.bf16.xpose.msra.mxu0 0
    %1626 = vmatprep.subr.bf16.mxu0 0
    %1627 = vmatpush1.bf16.xpose.msra.mxu0 0
    %1628 = vmatprep.subr.bf16.mxu0 0
    %1629 = vmatpush1.bf16.xpose.msra.mxu0 0
    %1630 = vmatprep.subr.bf16.mxu0 0
    %1631 = vmatpush1.bf16.xpose.msra.mxu0 0
    %1632 = vmatprep.subr.bf16.mxu0 0
    %1633 = vmatpush1.bf16.xpose.msra.mxu0 0
    %1634 = vmatprep.mubr.bf16.mxu0 0
    %1635 = vmatmul.mubr.bf16.gmra.mrb[0].mxu0 %v1597
    %v1636 = vpop.f32.mrb[0].mxu0
    %v1637 = vadd.f32 0.0, %v1636
    %v1638 = vpop.f32.mrb[0].mxu0
    %v1639 = vpop.f32.mrb[0].mxu0
    %v1640 = vadd.f32 0.0, %v1639
    %v1641 = vpop.f32.mrb[0].mxu0
    %1642 = vdwg.mxu0
    %v1643 = vpack.c.bf16 %v1640, %v1637
    %s1644 = scalar_lea.vmem %s8, 16
    %v1645 = vld [vmem:[%s1644] sm:$0xf]
    %v1646 = vpack.c.bf16 %v1496, %v1496
    %v1647 = vpack.c.bf16 %v1512, %v1512
    %1649 = vrot.lane.b32.xlu0 %v1523, 120
    %v1650 = vpop.permute.xlu0 %1649
    %v1652 = vsel %vm337, %v1650, 0
    %v1655 = vsel %vm341, %v1646, 0
    %1657 = vmatprep.subr.bf16.mxu0 0
    %1658 = vmatpush1.bf16.msra.mxu0 %v1655
    %1659 = vmatprep.subr.bf16.mxu0 0
    %1660 = vmatpush1.bf16.msra.mxu0 0
    %1661 = vmatprep.subr.bf16.mxu0 0
    %1662 = vmatpush1.bf16.msra.mxu0 0
    %1663 = vmatprep.subr.bf16.mxu0 0
    %1664 = vmatpush1.bf16.msra.mxu0 0
    %1665 = vmatprep.subr.bf16.mxu0 0
    %1666 = vmatpush1.bf16.msra.mxu0 0
    %1667 = vmatprep.subr.bf16.mxu0 0
    %1668 = vmatpush1.bf16.msra.mxu0 0
    %1669 = vmatprep.subr.bf16.mxu0 0
    %1670 = vmatpush1.bf16.msra.mxu0 0
    %1671 = vmatprep.subr.bf16.mxu0 0
    %1672 = vmatpush1.bf16.msra.mxu0 0
    %1673 = vmatprep.subr.bf16.mxu0 0
    %1674 = vmatpush1.bf16.msra.mxu0 0
    %1675 = vmatprep.subr.bf16.mxu0 0
    %1676 = vmatpush1.bf16.msra.mxu0 0
    %1677 = vmatprep.subr.bf16.mxu0 0
    %1678 = vmatpush1.bf16.msra.mxu0 0
    %1679 = vmatprep.subr.bf16.mxu0 0
    %1680 = vmatpush1.bf16.msra.mxu0 0
    %1681 = vmatprep.subr.bf16.mxu0 0
    %1682 = vmatpush1.bf16.msra.mxu0 0
    %1683 = vmatprep.subr.bf16.mxu0 0
    %1684 = vmatpush1.bf16.msra.mxu0 0
    %1685 = vmatprep.subr.bf16.mxu0 0
    %1686 = vmatpush1.bf16.msra.mxu0 0
    %1687 = vmatprep.subr.bf16.mxu0 0
    %1688 = vmatpush1.bf16.msra.mxu0 0
    %1689 = vmatprep.mubr.bf16.mxu0 0
    %1690 = vmatmul.mubr.bf16.gmra.mrb[0].mxu0 %v1652
    %v1691 = vpop.f32.mrb[0].mxu0
    %v1692 = vadd.f32 %v61, %v1691
    %v1693 = vpop.f32.mrb[0].mxu0
    %v1694 = vpop.f32.mrb[0].mxu0
    %v1695 = vadd.f32 %v62, %v1694
    %v1696 = vpop.f32.mrb[0].mxu0
    %1697 = vdwg.mxu0
    %v1698 = vsel %vm386, %v1692, -inf
    %1699 = vmax.xlane.f32.xlu0 %v1698
    %v1700 = vpop.xlane.xlu0 %1699
    %v1701 = vsel %vm386, %v1695, -inf
    %1702 = vmax.xlane.f32.xlu0 %v1701
    %v1703 = vpop.xlane.xlu0 %1702
    %v1704 = vsub.f32 %v1692, %v1700
    %v1705 = vsub.f32 %v1695, %v1703
    %v1706 = vmul.f32 %v1704, 1.442695
    %v1707 = vpow.pop %v1706
    %v1708 = vmul.f32 %v1705, 1.442695
    %v1709 = vpow.pop %v1708
    %v1710 = vsel %vm386, %v1707, 0.0
    %1711 = vadd.xlane.f32.xlu0 %v1710
    %v1712 = vpop.xlane.xlu0 %1711
    %v1713 = vsel %vm386, %v1709, 0.0
    %1714 = vadd.xlane.f32.xlu0 %v1713
    %v1715 = vpop.xlane.xlu0 %1714
    %v1716 = vrcp.pop %v1712
    %v1717 = vmul.f32 %v1707, %v1716
    %v1718 = vrcp.pop %v1715
    %v1719 = vmul.f32 %v1709, %v1718
    %v1720 = vpack.c.bf16 %v1719, %v1717
    %v1722 = vsel %vm386, %v1720, 0
    %v1725 = vsel %vm386, %v1647, 0
    %1727 = vmatprep.subr.bf16.mxu0 0
    %1728 = vmatpush1.bf16.xpose.msra.mxu0 %v1725
    %1729 = vmatprep.subr.bf16.mxu0 0
    %1730 = vmatpush1.bf16.xpose.msra.mxu0 0
    %1731 = vmatprep.subr.bf16.mxu0 0
    %1732 = vmatpush1.bf16.xpose.msra.mxu0 0
    %1733 = vmatprep.subr.bf16.mxu0 0
    %1734 = vmatpush1.bf16.xpose.msra.mxu0 0
    %1735 = vmatprep.subr.bf16.mxu0 0
    %1736 = vmatpush1.bf16.xpose.msra.mxu0 0
    %1737 = vmatprep.subr.bf16.mxu0 0
    %1738 = vmatpush1.bf16.xpose.msra.mxu0 0
    %1739 = vmatprep.subr.bf16.mxu0 0
    %1740 = vmatpush1.bf16.xpose.msra.mxu0 0
    %1741 = vmatprep.subr.bf16.mxu0 0
    %1742 = vmatpush1.bf16.xpose.msra.mxu0 0
    %1743 = vmatprep.subr.bf16.mxu0 0
    %1744 = vmatpush1.bf16.xpose.msra.mxu0 0
    %1745 = vmatprep.subr.bf16.mxu0 0
    %1746 = vmatpush1.bf16.xpose.msra.mxu0 0
    %1747 = vmatprep.subr.bf16.mxu0 0
    %1748 = vmatpush1.bf16.xpose.msra.mxu0 0
    %1749 = vmatprep.subr.bf16.mxu0 0
    %1750 = vmatpush1.bf16.xpose.msra.mxu0 0
    %1751 = vmatprep.subr.bf16.mxu0 0
    %1752 = vmatpush1.bf16.xpose.msra.mxu0 0
    %1753 = vmatprep.subr.bf16.mxu0 0
    %1754 = vmatpush1.bf16.xpose.msra.mxu0 0
    %1755 = vmatprep.subr.bf16.mxu0 0
    %1756 = vmatpush1.bf16.xpose.msra.mxu0 0
    %1757 = vmatprep.subr.bf16.mxu0 0
    %1758 = vmatpush1.bf16.xpose.msra.mxu0 0
    %1759 = vmatprep.mubr.bf16.mxu0 0
    %1760 = vmatmul.mubr.bf16.gmra.mrb[0].mxu0 %v1722
    %v1761 = vpop.f32.mrb[0].mxu0
    %v1762 = vadd.f32 0.0, %v1761
    %v1763 = vpop.f32.mrb[0].mxu0
    %v1764 = vpop.f32.mrb[0].mxu0
    %v1765 = vadd.f32 0.0, %v1764
    %v1766 = vpop.f32.mrb[0].mxu0
    %1767 = vdwg.mxu0
    %v1768 = vpack.c.bf16 %v1765, %v1762
    %s1769 = scalar_lea.vmem %s8, 20
    %v1770 = vld [vmem:[%s1769] sm:$0xf]
    %v1772 = vsel %vm337, %v1768, 0
    %v1775 = vsel %vm341, %v1770, 0
    %1777 = vmatprep.subr.bf16.mxu0 0
    %1778 = vmatpush1.bf16.msra.mxu0 %v1775
    %1779 = vmatprep.subr.bf16.mxu0 0
    %1780 = vmatpush1.bf16.msra.mxu0 0
    %1781 = vmatprep.subr.bf16.mxu0 0
    %1782 = vmatpush1.bf16.msra.mxu0 0
    %1783 = vmatprep.subr.bf16.mxu0 0
    %1784 = vmatpush1.bf16.msra.mxu0 0
    %1785 = vmatprep.subr.bf16.mxu0 0
    %1786 = vmatpush1.bf16.msra.mxu0 0
    %1787 = vmatprep.subr.bf16.mxu0 0
    %1788 = vmatpush1.bf16.msra.mxu0 0
    %1789 = vmatprep.subr.bf16.mxu0 0
    %1790 = vmatpush1.bf16.msra.mxu0 0
    %1791 = vmatprep.subr.bf16.mxu0 0
    %1792 = vmatpush1.bf16.msra.mxu0 0
    %1793 = vmatprep.subr.bf16.mxu0 0
    %1794 = vmatpush1.bf16.msra.mxu0 0
    %1795 = vmatprep.subr.bf16.mxu0 0
    %1796 = vmatpush1.bf16.msra.mxu0 0
    %1797 = vmatprep.subr.bf16.mxu0 0
    %1798 = vmatpush1.bf16.msra.mxu0 0
    %1799 = vmatprep.subr.bf16.mxu0 0
    %1800 = vmatpush1.bf16.msra.mxu0 0
    %1801 = vmatprep.subr.bf16.mxu0 0
    %1802 = vmatpush1.bf16.msra.mxu0 0
    %1803 = vmatprep.subr.bf16.mxu0 0
    %1804 = vmatpush1.bf16.msra.mxu0 0
    %1805 = vmatprep.subr.bf16.mxu0 0
    %1806 = vmatpush1.bf16.msra.mxu0 0
    %1807 = vmatprep.subr.bf16.mxu0 0
    %1808 = vmatpush1.bf16.msra.mxu0 0
    %1809 = vmatprep.mubr.bf16.mxu0 0
    %1810 = vmatmul.mubr.bf16.gmra.mrb[0].mxu0 %v1772
    %v1811 = vpop.f32.mrb[0].mxu0
    %v1812 = vadd.f32 0.0, %v1811
    %v1813 = vpop.f32.mrb[0].mxu0
    %v1814 = vpop.f32.mrb[0].mxu0
    %v1815 = vadd.f32 0.0, %v1814
    %v1816 = vpop.f32.mrb[0].mxu0
    %1817 = vdwg.mxu0
    %v1819 = vsel %vm337, %v1643, 0
    %v1822 = vsel %vm341, %v1645, 0
    %1824 = vmatprep.subr.bf16.mxu0 0
    %1825 = vmatpush1.bf16.msra.mxu0 %v1822
    %1826 = vmatprep.subr.bf16.mxu0 0
    %1827 = vmatpush1.bf16.msra.mxu0 0
    %1828 = vmatprep.subr.bf16.mxu0 0
    %1829 = vmatpush1.bf16.msra.mxu0 0
    %1830 = vmatprep.subr.bf16.mxu0 0
    %1831 = vmatpush1.bf16.msra.mxu0 0
    %1832 = vmatprep.subr.bf16.mxu0 0
    %1833 = vmatpush1.bf16.msra.mxu0 0
    %1834 = vmatprep.subr.bf16.mxu0 0
    %1835 = vmatpush1.bf16.msra.mxu0 0
    %1836 = vmatprep.subr.bf16.mxu0 0
    %1837 = vmatpush1.bf16.msra.mxu0 0
    %1838 = vmatprep.subr.bf16.mxu0 0
    %1839 = vmatpush1.bf16.msra.mxu0 0
    %1840 = vmatprep.subr.bf16.mxu0 0
    %1841 = vmatpush1.bf16.msra.mxu0 0
    %1842 = vmatprep.subr.bf16.mxu0 0
    %1843 = vmatpush1.bf16.msra.mxu0 0
    %1844 = vmatprep.subr.bf16.mxu0 0
    %1845 = vmatpush1.bf16.msra.mxu0 0
    %1846 = vmatprep.subr.bf16.mxu0 0
    %1847 = vmatpush1.bf16.msra.mxu0 0
    %1848 = vmatprep.subr.bf16.mxu0 0
    %1849 = vmatpush1.bf16.msra.mxu0 0
    %1850 = vmatprep.subr.bf16.mxu0 0
    %1851 = vmatpush1.bf16.msra.mxu0 0
    %1852 = vmatprep.subr.bf16.mxu0 0
    %1853 = vmatpush1.bf16.msra.mxu0 0
    %1854 = vmatprep.subr.bf16.mxu0 0
    %1855 = vmatpush1.bf16.msra.mxu0 0
    %1856 = vmatprep.mubr.bf16.mxu0 0
    %1857 = vmatmul.mubr.bf16.gmra.mrb[0].mxu0 %v1819
    %v1858 = vpop.f32.mrb[0].mxu0
    %v1859 = vadd.f32 %v1812, %v1858
    %v1860 = vpop.f32.mrb[0].mxu0
    %v1861 = vpop.f32.mrb[0].mxu0
    %v1862 = vadd.f32 %v1815, %v1861
    %v1863 = vpop.f32.mrb[0].mxu0
    %1864 = vdwg.mxu0
    %v1865 = vpack.c.bf16 %v1501, %v1501
    %v1866 = vpack.c.bf16 %v1517, %v1517
    %1867 = vrot.lane.b32.xlu0 %v1523, 112
    %v1868 = vpop.permute.xlu0 %1867
    %v1870 = vsel %vm337, %v1868, 0
    %v1873 = vsel %vm341, %v1865, 0
    %1875 = vmatprep.subr.bf16.mxu0 0
    %1876 = vmatpush1.bf16.msra.mxu0 %v1873
    %1877 = vmatprep.subr.bf16.mxu0 0
    %1878 = vmatpush1.bf16.msra.mxu0 0
    %1879 = vmatprep.subr.bf16.mxu0 0
    %1880 = vmatpush1.bf16.msra.mxu0 0
    %1881 = vmatprep.subr.bf16.mxu0 0
    %1882 = vmatpush1.bf16.msra.mxu0 0
    %1883 = vmatprep.subr.bf16.mxu0 0
    %1884 = vmatpush1.bf16.msra.mxu0 0
    %1885 = vmatprep.subr.bf16.mxu0 0
    %1886 = vmatpush1.bf16.msra.mxu0 0
    %1887 = vmatprep.subr.bf16.mxu0 0
    %1888 = vmatpush1.bf16.msra.mxu0 0
    %1889 = vmatprep.subr.bf16.mxu0 0
    %1890 = vmatpush1.bf16.msra.mxu0 0
    %1891 = vmatprep.subr.bf16.mxu0 0
    %1892 = vmatpush1.bf16.msra.mxu0 0
    %1893 = vmatprep.subr.bf16.mxu0 0
    %1894 = vmatpush1.bf16.msra.mxu0 0
    %1895 = vmatprep.subr.bf16.mxu0 0
    %1896 = vmatpush1.bf16.msra.mxu0 0
    %1897 = vmatprep.subr.bf16.mxu0 0
    %1898 = vmatpush1.bf16.msra.mxu0 0
    %1899 = vmatprep.subr.bf16.mxu0 0
    %1900 = vmatpush1.bf16.msra.mxu0 0
    %1901 = vmatprep.subr.bf16.mxu0 0
    %1902 = vmatpush1.bf16.msra.mxu0 0
    %1903 = vmatprep.subr.bf16.mxu0 0
    %1904 = vmatpush1.bf16.msra.mxu0 0
    %1905 = vmatprep.subr.bf16.mxu0 0
    %1906 = vmatpush1.bf16.msra.mxu0 0
    %1907 = vmatprep.mubr.bf16.mxu0 0
    %1908 = vmatmul.mubr.bf16.gmra.mrb[0].mxu0 %v1870
    %v1909 = vpop.f32.mrb[0].mxu0
    %v1910 = vadd.f32 %v61, %v1909
    %v1911 = vpop.f32.mrb[0].mxu0
    %v1912 = vpop.f32.mrb[0].mxu0
    %v1913 = vadd.f32 %v62, %v1912
    %v1914 = vpop.f32.mrb[0].mxu0
    %1915 = vdwg.mxu0
    %v1916 = vsel %vm386, %v1910, -inf
    %1917 = vmax.xlane.f32.xlu0 %v1916
    %v1918 = vpop.xlane.xlu0 %1917
    %v1919 = vsel %vm386, %v1913, -inf
    %1920 = vmax.xlane.f32.xlu0 %v1919
    %v1921 = vpop.xlane.xlu0 %1920
    %v1922 = vsub.f32 %v1910, %v1918
    %v1923 = vsub.f32 %v1913, %v1921
    %v1924 = vmul.f32 %v1922, 1.442695
    %v1925 = vpow.pop %v1924
    %v1926 = vmul.f32 %v1923, 1.442695
    %v1927 = vpow.pop %v1926
    %v1928 = vsel %vm386, %v1925, 0.0
    %1929 = vadd.xlane.f32.xlu0 %v1928
    %v1930 = vpop.xlane.xlu0 %1929
    %v1931 = vsel %vm386, %v1927, 0.0
    %1932 = vadd.xlane.f32.xlu0 %v1931
    %v1933 = vpop.xlane.xlu0 %1932
    %v1934 = vrcp.pop %v1930
    %v1935 = vmul.f32 %v1925, %v1934
    %v1936 = vrcp.pop %v1933
    %v1937 = vmul.f32 %v1927, %v1936
    %v1938 = vpack.c.bf16 %v1937, %v1935
    %v1940 = vsel %vm386, %v1938, 0
    %v1943 = vsel %vm386, %v1866, 0
    %1945 = vmatprep.subr.bf16.mxu0 0
    %1946 = vmatpush1.bf16.xpose.msra.mxu0 %v1943
    %1947 = vmatprep.subr.bf16.mxu0 0
    %1948 = vmatpush1.bf16.xpose.msra.mxu0 0
    %1949 = vmatprep.subr.bf16.mxu0 0
    %1950 = vmatpush1.bf16.xpose.msra.mxu0 0
    %1951 = vmatprep.subr.bf16.mxu0 0
    %1952 = vmatpush1.bf16.xpose.msra.mxu0 0
    %1953 = vmatprep.subr.bf16.mxu0 0
    %1954 = vmatpush1.bf16.xpose.msra.mxu0 0
    %1955 = vmatprep.subr.bf16.mxu0 0
    %1956 = vmatpush1.bf16.xpose.msra.mxu0 0
    %1957 = vmatprep.subr.bf16.mxu0 0
    %1958 = vmatpush1.bf16.xpose.msra.mxu0 0
    %1959 = vmatprep.subr.bf16.mxu0 0
    %1960 = vmatpush1.bf16.xpose.msra.mxu0 0
    %1961 = vmatprep.subr.bf16.mxu0 0
    %1962 = vmatpush1.bf16.xpose.msra.mxu0 0
    %1963 = vmatprep.subr.bf16.mxu0 0
    %1964 = vmatpush1.bf16.xpose.msra.mxu0 0
    %1965 = vmatprep.subr.bf16.mxu0 0
    %1966 = vmatpush1.bf16.xpose.msra.mxu0 0
    %1967 = vmatprep.subr.bf16.mxu0 0
    %1968 = vmatpush1.bf16.xpose.msra.mxu0 0
    %1969 = vmatprep.subr.bf16.mxu0 0
    %1970 = vmatpush1.bf16.xpose.msra.mxu0 0
    %1971 = vmatprep.subr.bf16.mxu0 0
    %1972 = vmatpush1.bf16.xpose.msra.mxu0 0
    %1973 = vmatprep.subr.bf16.mxu0 0
    %1974 = vmatpush1.bf16.xpose.msra.mxu0 0
    %1975 = vmatprep.subr.bf16.mxu0 0
    %1976 = vmatpush1.bf16.xpose.msra.mxu0 0
    %1977 = vmatprep.mubr.bf16.mxu0 0
    %1978 = vmatmul.mubr.bf16.gmra.mrb[0].mxu0 %v1940
    %v1979 = vpop.f32.mrb[0].mxu0
    %v1980 = vadd.f32 0.0, %v1979
    %v1981 = vpop.f32.mrb[0].mxu0
    %v1982 = vpop.f32.mrb[0].mxu0
    %v1983 = vadd.f32 0.0, %v1982
    %v1984 = vpop.f32.mrb[0].mxu0
    %1985 = vdwg.mxu0
    %v1986 = vpack.c.bf16 %v1983, %v1980
    %s1987 = scalar_lea.vmem %s8, 24
    %v1988 = vld [vmem:[%s1987] sm:$0xf]
    %v1990 = vsel %vm337, %v1986, 0
    %v1993 = vsel %vm341, %v1988, 0
    %1995 = vmatprep.subr.bf16.mxu0 0
    %1996 = vmatpush1.bf16.msra.mxu0 %v1993
    %1997 = vmatprep.subr.bf16.mxu0 0
    %1998 = vmatpush1.bf16.msra.mxu0 0
    %1999 = vmatprep.subr.bf16.mxu0 0
    %2000 = vmatpush1.bf16.msra.mxu0 0
    %2001 = vmatprep.subr.bf16.mxu0 0
    %2002 = vmatpush1.bf16.msra.mxu0 0
    %2003 = vmatprep.subr.bf16.mxu0 0
    %2004 = vmatpush1.bf16.msra.mxu0 0
    %2005 = vmatprep.subr.bf16.mxu0 0
    %2006 = vmatpush1.bf16.msra.mxu0 0
    %2007 = vmatprep.subr.bf16.mxu0 0
    %2008 = vmatpush1.bf16.msra.mxu0 0
    %2009 = vmatprep.subr.bf16.mxu0 0
    %2010 = vmatpush1.bf16.msra.mxu0 0
    %2011 = vmatprep.subr.bf16.mxu0 0
    %2012 = vmatpush1.bf16.msra.mxu0 0
    %2013 = vmatprep.subr.bf16.mxu0 0
    %2014 = vmatpush1.bf16.msra.mxu0 0
    %2015 = vmatprep.subr.bf16.mxu0 0
    %2016 = vmatpush1.bf16.msra.mxu0 0
    %2017 = vmatprep.subr.bf16.mxu0 0
    %2018 = vmatpush1.bf16.msra.mxu0 0
    %2019 = vmatprep.subr.bf16.mxu0 0
    %2020 = vmatpush1.bf16.msra.mxu0 0
    %2021 = vmatprep.subr.bf16.mxu0 0
    %2022 = vmatpush1.bf16.msra.mxu0 0
    %2023 = vmatprep.subr.bf16.mxu0 0
    %2024 = vmatpush1.bf16.msra.mxu0 0
    %2025 = vmatprep.subr.bf16.mxu0 0
    %2026 = vmatpush1.bf16.msra.mxu0 0
    %2027 = vmatprep.mubr.bf16.mxu0 0
    %2028 = vmatmul.mubr.bf16.gmra.mrb[0].mxu0 %v1990
    %v2029 = vpop.f32.mrb[0].mxu0
    %v2030 = vadd.f32 0.0, %v2029
    %v2031 = vpop.f32.mrb[0].mxu0
    %v2032 = vpop.f32.mrb[0].mxu0
    %v2033 = vadd.f32 0.0, %v2032
    %v2034 = vpop.f32.mrb[0].mxu0
    %2035 = vdwg.mxu0
    %v2036 = vadd.f32 %v1859, %v2030
    %v2037 = vadd.f32 %v1862, %v2033
    %v2038 = vpack.c.bf16 %v1504, %v1504
    %v2039 = vpack.c.bf16 %v1520, %v1520
    %2040 = vrot.lane.b32.xlu0 %v1523, 104
    %v2041 = vpop.permute.xlu0 %2040
    %v2043 = vsel %vm337, %v2041, 0
    %v2046 = vsel %vm341, %v2038, 0
    %2048 = vmatprep.subr.bf16.mxu0 0
    %2049 = vmatpush1.bf16.msra.mxu0 %v2046
    %2050 = vmatprep.subr.bf16.mxu0 0
    %2051 = vmatpush1.bf16.msra.mxu0 0
    %2052 = vmatprep.subr.bf16.mxu0 0
    %2053 = vmatpush1.bf16.msra.mxu0 0
    %2054 = vmatprep.subr.bf16.mxu0 0
    %2055 = vmatpush1.bf16.msra.mxu0 0
    %2056 = vmatprep.subr.bf16.mxu0 0
    %2057 = vmatpush1.bf16.msra.mxu0 0
    %2058 = vmatprep.subr.bf16.mxu0 0
    %2059 = vmatpush1.bf16.msra.mxu0 0
    %2060 = vmatprep.subr.bf16.mxu0 0
    %2061 = vmatpush1.bf16.msra.mxu0 0
    %2062 = vmatprep.subr.bf16.mxu0 0
    %2063 = vmatpush1.bf16.msra.mxu0 0
    %2064 = vmatprep.subr.bf16.mxu0 0
    %2065 = vmatpush1.bf16.msra.mxu0 0
    %2066 = vmatprep.subr.bf16.mxu0 0
    %2067 = vmatpush1.bf16.msra.mxu0 0
    %2068 = vmatprep.subr.bf16.mxu0 0
    %2069 = vmatpush1.bf16.msra.mxu0 0
    %2070 = vmatprep.subr.bf16.mxu0 0
    %2071 = vmatpush1.bf16.msra.mxu0 0
    %2072 = vmatprep.subr.bf16.mxu0 0
    %2073 = vmatpush1.bf16.msra.mxu0 0
    %2074 = vmatprep.subr.bf16.mxu0 0
    %2075 = vmatpush1.bf16.msra.mxu0 0
    %2076 = vmatprep.subr.bf16.mxu0 0
    %2077 = vmatpush1.bf16.msra.mxu0 0
    %2078 = vmatprep.subr.bf16.mxu0 0
    %2079 = vmatpush1.bf16.msra.mxu0 0
    %2080 = vmatprep.mubr.bf16.mxu0 0
    %2081 = vmatmul.mubr.bf16.gmra.mrb[0].mxu0 %v2043
    %v2082 = vpop.f32.mrb[0].mxu0
    %v2083 = vadd.f32 %v61, %v2082
    %v2084 = vpop.f32.mrb[0].mxu0
    %v2085 = vpop.f32.mrb[0].mxu0
    %v2086 = vadd.f32 %v62, %v2085
    %v2087 = vpop.f32.mrb[0].mxu0
    %2088 = vdwg.mxu0
    %v2089 = vsel %vm386, %v2083, -inf
    %2090 = vmax.xlane.f32.xlu0 %v2089
    %v2091 = vpop.xlane.xlu0 %2090
    %v2092 = vsel %vm386, %v2086, -inf
    %2093 = vmax.xlane.f32.xlu0 %v2092
    %v2094 = vpop.xlane.xlu0 %2093
    %v2095 = vsub.f32 %v2083, %v2091
    %v2096 = vsub.f32 %v2086, %v2094
    %v2097 = vmul.f32 %v2095, 1.442695
    %v2098 = vpow.pop %v2097
    %v2099 = vmul.f32 %v2096, 1.442695
    %v2100 = vpow.pop %v2099
    %v2101 = vsel %vm386, %v2098, 0.0
    %2102 = vadd.xlane.f32.xlu0 %v2101
    %v2103 = vpop.xlane.xlu0 %2102
    %v2104 = vsel %vm386, %v2100, 0.0
    %2105 = vadd.xlane.f32.xlu0 %v2104
    %v2106 = vpop.xlane.xlu0 %2105
    %v2107 = vrcp.pop %v2103
    %v2108 = vmul.f32 %v2098, %v2107
    %v2109 = vrcp.pop %v2106
    %v2110 = vmul.f32 %v2100, %v2109
    %v2111 = vpack.c.bf16 %v2110, %v2108
    %v2113 = vsel %vm386, %v2111, 0
    %v2116 = vsel %vm386, %v2039, 0
    %2118 = vmatprep.subr.bf16.mxu0 0
    %2119 = vmatpush1.bf16.xpose.msra.mxu0 %v2116
    %2120 = vmatprep.subr.bf16.mxu0 0
    %2121 = vmatpush1.bf16.xpose.msra.mxu0 0
    %2122 = vmatprep.subr.bf16.mxu0 0
    %2123 = vmatpush1.bf16.xpose.msra.mxu0 0
    %2124 = vmatprep.subr.bf16.mxu0 0
    %2125 = vmatpush1.bf16.xpose.msra.mxu0 0
    %2126 = vmatprep.subr.bf16.mxu0 0
    %2127 = vmatpush1.bf16.xpose.msra.mxu0 0
    %2128 = vmatprep.subr.bf16.mxu0 0
    %2129 = vmatpush1.bf16.xpose.msra.mxu0 0
    %2130 = vmatprep.subr.bf16.mxu0 0
    %2131 = vmatpush1.bf16.xpose.msra.mxu0 0
    %2132 = vmatprep.subr.bf16.mxu0 0
    %2133 = vmatpush1.bf16.xpose.msra.mxu0 0
    %2134 = vmatprep.subr.bf16.mxu0 0
    %2135 = vmatpush1.bf16.xpose.msra.mxu0 0
    %2136 = vmatprep.subr.bf16.mxu0 0
    %2137 = vmatpush1.bf16.xpose.msra.mxu0 0
    %2138 = vmatprep.subr.bf16.mxu0 0
    %2139 = vmatpush1.bf16.xpose.msra.mxu0 0
    %2140 = vmatprep.subr.bf16.mxu0 0
    %2141 = vmatpush1.bf16.xpose.msra.mxu0 0
    %2142 = vmatprep.subr.bf16.mxu0 0
    %2143 = vmatpush1.bf16.xpose.msra.mxu0 0
    %2144 = vmatprep.subr.bf16.mxu0 0
    %2145 = vmatpush1.bf16.xpose.msra.mxu0 0
    %2146 = vmatprep.subr.bf16.mxu0 0
    %2147 = vmatpush1.bf16.xpose.msra.mxu0 0
    %2148 = vmatprep.subr.bf16.mxu0 0
    %2149 = vmatpush1.bf16.xpose.msra.mxu0 0
    %2150 = vmatprep.mubr.bf16.mxu0 0
    %2151 = vmatmul.mubr.bf16.gmra.mrb[0].mxu0 %v2113
    %v2152 = vpop.f32.mrb[0].mxu0
    %v2153 = vadd.f32 0.0, %v2152
    %v2154 = vpop.f32.mrb[0].mxu0
    %v2155 = vpop.f32.mrb[0].mxu0
    %v2156 = vadd.f32 0.0, %v2155
    %v2157 = vpop.f32.mrb[0].mxu0
    %2158 = vdwg.mxu0
    %v2159 = vpack.c.bf16 %v2156, %v2153
    %s2160 = scalar_lea.vmem %s8, 28
    %v2161 = vld [vmem:[%s2160] sm:$0xf]
    %v2163 = vsel %vm337, %v2159, 0
    %v2166 = vsel %vm341, %v2161, 0
    %2168 = vmatprep.subr.bf16.mxu0 0
    %2169 = vmatpush1.bf16.msra.mxu0 %v2166
    %2170 = vmatprep.subr.bf16.mxu0 0
    %2171 = vmatpush1.bf16.msra.mxu0 0
    %2172 = vmatprep.subr.bf16.mxu0 0
    %2173 = vmatpush1.bf16.msra.mxu0 0
    %2174 = vmatprep.subr.bf16.mxu0 0
    %2175 = vmatpush1.bf16.msra.mxu0 0
    %2176 = vmatprep.subr.bf16.mxu0 0
    %2177 = vmatpush1.bf16.msra.mxu0 0
    %2178 = vmatprep.subr.bf16.mxu0 0
    %2179 = vmatpush1.bf16.msra.mxu0 0
    %2180 = vmatprep.subr.bf16.mxu0 0
    %2181 = vmatpush1.bf16.msra.mxu0 0
    %2182 = vmatprep.subr.bf16.mxu0 0
    %2183 = vmatpush1.bf16.msra.mxu0 0
    %2184 = vmatprep.subr.bf16.mxu0 0
    %2185 = vmatpush1.bf16.msra.mxu0 0
    %2186 = vmatprep.subr.bf16.mxu0 0
    %2187 = vmatpush1.bf16.msra.mxu0 0
    %2188 = vmatprep.subr.bf16.mxu0 0
    %2189 = vmatpush1.bf16.msra.mxu0 0
    %2190 = vmatprep.subr.bf16.mxu0 0
    %2191 = vmatpush1.bf16.msra.mxu0 0
    %2192 = vmatprep.subr.bf16.mxu0 0
    %2193 = vmatpush1.bf16.msra.mxu0 0
    %2194 = vmatprep.subr.bf16.mxu0 0
    %2195 = vmatpush1.bf16.msra.mxu0 0
    %2196 = vmatprep.subr.bf16.mxu0 0
    %2197 = vmatpush1.bf16.msra.mxu0 0
    %2198 = vmatprep.subr.bf16.mxu0 0
    %2199 = vmatpush1.bf16.msra.mxu0 0
    %2200 = vmatprep.mubr.bf16.mxu0 0
    %2201 = vmatmul.mubr.bf16.gmra.mrb[0].mxu0 %v2163
    %v2202 = vpop.f32.mrb[0].mxu0
    %v2203 = vadd.f32 0.0, %v2202
    %v2204 = vpop.f32.mrb[0].mxu0
    %v2205 = vpop.f32.mrb[0].mxu0
    %v2206 = vadd.f32 0.0, %v2205
    %v2207 = vpop.f32.mrb[0].mxu0
    %2208 = vdwg.mxu0
    %v2209 = vadd.f32 %v2036, %v2203
    %v2210 = vadd.f32 %v2037, %v2206
    %s2211 = scalar_lea.vmem %s9, 1
    %v2212 = vld [vmem:[%s2211] sm:$0x1]
    %v2214 = vlaneseq
    %v2215 = vshrl.u32 %v2214, 7
    %v2216 = vsub.s32 0, %v2215
    %v2217 = vrot.slane %v2212, %v2216
    %v2219 = vadd.f32 %v2209, %v2217
    %v2220 = vadd.f32 %v2210, %v2217
    %v2221 = vadd.f32 %v1294, %v2219
    %v2222 = vadd.f32 %v1295, %v2220
    %s2223 = scalar_lea.vmem %s10, 1
    %v2224 = vld [vmem:[%s2223] sm:$0x1]
    %s2225 = scalar_lea.vmem %s11, 1
    %v2226 = vld [vmem:[%s2225] sm:$0x1]
    %v2227 = vsel %vm67, %v2221, 0.0
    %2228 = vadd.xlane.f32.xlu0 %v2227
    %v2229 = vpop.xlane.xlu0 %2228
    %v2230 = vsel %vm67, %v2222, 0.0
    %2231 = vadd.xlane.f32.xlu0 %v2230
    %v2232 = vpop.xlane.xlu0 %2231
    %v2233 = vmul.f32 %v2229, %v74
    %v2234 = vmul.f32 %v2232, %v74
    %v2235 = vsub.f32 %v2221, %v2233
    %v2236 = vsub.f32 %v2222, %v2234
    %v2237 = vmul.f32 %v2235, %v2235
    %v2238 = vmul.f32 %v2236, %v2236
    %v2239 = vsel %vm67, %v2237, 0.0
    %2240 = vadd.xlane.f32.xlu0 %v2239
    %v2241 = vpop.xlane.xlu0 %2240
    %v2242 = vsel %vm67, %v2238, 0.0
    %2243 = vadd.xlane.f32.xlu0 %v2242
    %v2244 = vpop.xlane.xlu0 %2243
    %v2245 = vmul.f32 %v2241, %v74
    %v2246 = vmul.f32 %v2244, %v74
    %v2247 = vadd.f32 %v2245, 1e-12
    %v2248 = vadd.f32 %v2246, 1e-12
    %v2249 = vrsqrt.pop %v2247
    %v2250 = vrsqrt.pop %v2248
    %v2251 = vmul.f32 %v2235, %v2249
    %v2252 = vmul.f32 %v2236, %v2250
    %v2254 = vlaneseq
    %v2255 = vshrl.u32 %v2254, 7
    %v2256 = vsub.s32 0, %v2255
    %v2257 = vrot.slane %v2224, %v2256
    %v2259 = vmul.f32 %v2251, %v2257
    %v2260 = vmul.f32 %v2252, %v2257
    %v2262 = vlaneseq
    %v2263 = vshrl.u32 %v2262, 7
    %v2264 = vsub.s32 0, %v2263
    %v2265 = vrot.slane %v2226, %v2264
    %v2267 = vadd.f32 %v2259, %v2265
    %v2268 = vadd.f32 %v2260, %v2265
    %v2269 = vpack.c.bf16 %v2268, %v2267
    %s2270 = scalar_lea.vmem %s12, 16
    %v2271 = vld [vmem:[%s2270] sm:$0xf]
    %v2272 = vld [vmem:[%s2270 + $0x4] sm:$0xf]
    %v2273 = vld [vmem:[%s2270 + $0x8] sm:$0xf]
    %v2274 = vld [vmem:[%s2270 + $0xc] sm:$0xf]
    %s2275 = scalar_lea.vmem %s13, 1
    %v2276 = vld [vmem:[%s2275] sm:$0x1]
    %v2278 = vlaneseq
    %v2279 = vshrl.u32 %v2278, 7
    %v2280 = vsub.s32 0, %v2279
    %v2281 = vrot.slane %v2276, %v2280
    %v2287 = vunpack.c.l.b16 %v2271
    %v2288 = vunpack.c.l.b16 %v2272
    %v2289 = vunpack.c.l.b16 %v2273
    %v2290 = vunpack.c.l.b16 %v2274
    %v2291 = vpack.c.b16 %v2288, %v2287
    %v2292 = vpack.c.b16 %v2290, %v2289
    %v2296 = vsel %vm67, %v2269, 0
    %2298 = vmatprep.subr.bf16.mxu0 0
    %2299 = vmatpush1.bf16.msra.mxu0 %v2291
    %2300 = vmatprep.subr.bf16.mxu0 0
    %2301 = vmatpush1.bf16.msra.mxu0 %v2292
    %2302 = vmatprep.subr.bf16.mxu0 0
    %2303 = vmatpush1.bf16.msra.mxu0 0
    %2304 = vmatprep.subr.bf16.mxu0 0
    %2305 = vmatpush1.bf16.msra.mxu0 0
    %2306 = vmatprep.subr.bf16.mxu0 0
    %2307 = vmatpush1.bf16.msra.mxu0 0
    %2308 = vmatprep.subr.bf16.mxu0 0
    %2309 = vmatpush1.bf16.msra.mxu0 0
    %2310 = vmatprep.subr.bf16.mxu0 0
    %2311 = vmatpush1.bf16.msra.mxu0 0
    %2312 = vmatprep.subr.bf16.mxu0 0
    %2313 = vmatpush1.bf16.msra.mxu0 0
    %2314 = vmatprep.subr.bf16.mxu0 0
    %2315 = vmatpush1.bf16.msra.mxu0 0
    %2316 = vmatprep.subr.bf16.mxu0 0
    %2317 = vmatpush1.bf16.msra.mxu0 0
    %2318 = vmatprep.subr.bf16.mxu0 0
    %2319 = vmatpush1.bf16.msra.mxu0 0
    %2320 = vmatprep.subr.bf16.mxu0 0
    %2321 = vmatpush1.bf16.msra.mxu0 0
    %2322 = vmatprep.subr.bf16.mxu0 0
    %2323 = vmatpush1.bf16.msra.mxu0 0
    %2324 = vmatprep.subr.bf16.mxu0 0
    %2325 = vmatpush1.bf16.msra.mxu0 0
    %2326 = vmatprep.subr.bf16.mxu0 0
    %2327 = vmatpush1.bf16.msra.mxu0 0
    %2328 = vmatprep.subr.bf16.mxu0 0
    %2329 = vmatpush1.bf16.msra.mxu0 0
    %2330 = vmatprep.mubr.bf16.mxu0 0
    %2331 = vmatmul.mubr.bf16.gmra.mrb[0].mxu0 %v2296
    %v2332 = vpop.f32.mrb[0].mxu0
    %v2333 = vadd.f32 %v2281, %v2332
    %v2334 = vpop.f32.mrb[0].mxu0
    %v2335 = vpop.f32.mrb[0].mxu0
    %v2336 = vadd.f32 %v2281, %v2335
    %v2337 = vpop.f32.mrb[0].mxu0
    %2338 = vdwg.mxu0
    %v2339 = vmul.f32 %v2333, 0.5
    %v2340 = vmul.f32 %v2336, 0.5
    %v2341 = vmul.f32 %v2333, 0.044715
    %v2342 = vmul.f32 %v2336, 0.044715
    %v2343 = vmul.f32 %v2341, %v2333
    %v2344 = vmul.f32 %v2342, %v2336
    %v2345 = vmul.f32 %v2343, %v2333
    %v2346 = vmul.f32 %v2344, %v2336
    %v2347 = vadd.f32 %v2333, %v2345
    %v2348 = vadd.f32 %v2336, %v2346
    %v2349 = vmul.f32 %v2347, 0.7978846
    %v2350 = vmul.f32 %v2348, 0.7978846
    %v2351 = vtanh.pop %v2349
    %v2352 = vtanh.pop %v2350
    %v2353 = vadd.f32 %v2351, 1.0
    %v2354 = vadd.f32 %v2352, 1.0
    %v2355 = vmul.f32 %v2339, %v2353
    %v2356 = vmul.f32 %v2340, %v2354
    %v2357 = vpack.c.bf16 %v2356, %v2355
    %s2358 = scalar_lea.vmem %s14, 32
    %v2359 = vld [vmem:[%s2358] sm:$0xf]
    %v2360 = vld [vmem:[%s2358 + $0x4] sm:$0xf]
    %v2361 = vld [vmem:[%s2358 + $0x8] sm:$0xf]
    %v2362 = vld [vmem:[%s2358 + $0xc] sm:$0xf]
    %v2363 = vld [vmem:[%s2358 + $0x10] sm:$0xf]
    %v2364 = vld [vmem:[%s2358 + $0x14] sm:$0xf]
    %v2365 = vld [vmem:[%s2358 + $0x18] sm:$0xf]
    %v2366 = vld [vmem:[%s2358 + $0x1c] sm:$0xf]
    %s2367 = scalar_lea.vmem %s15, 1
    %v2368 = vld [vmem:[%s2367] sm:$0x1]
    %v2370 = vlaneseq
    %v2371 = vshrl.u32 %v2370, 7
    %v2372 = vsub.s32 0, %v2371
    %v2373 = vrot.slane %v2368, %v2372
    %v2383 = vunpack.c.l.b16 %v2359
    %v2384 = vunpack.c.l.b16 %v2360
    %v2385 = vunpack.c.l.b16 %v2361
    %v2386 = vunpack.c.l.b16 %v2362
    %v2387 = vunpack.c.l.b16 %v2363
    %v2388 = vunpack.c.l.b16 %v2364
    %v2389 = vunpack.c.l.b16 %v2365
    %v2390 = vunpack.c.l.b16 %v2366
    %v2391 = vpack.c.b16 %v2384, %v2383
    %v2392 = vpack.c.b16 %v2386, %v2385
    %v2393 = vpack.c.b16 %v2388, %v2387
    %v2394 = vpack.c.b16 %v2390, %v2389
    %v2400 = vsel %vm1205, %v2357, 0
    %2402 = vmatprep.subr.bf16.mxu0 0
    %2403 = vmatpush1.bf16.msra.mxu0 %v2391
    %2404 = vmatprep.subr.bf16.mxu0 0
    %2405 = vmatpush1.bf16.msra.mxu0 %v2392
    %2406 = vmatprep.subr.bf16.mxu0 0
    %2407 = vmatpush1.bf16.msra.mxu0 %v2393
    %2408 = vmatprep.subr.bf16.mxu0 0
    %2409 = vmatpush1.bf16.msra.mxu0 %v2394
    %2410 = vmatprep.subr.bf16.mxu0 0
    %2411 = vmatpush1.bf16.msra.mxu0 0
    %2412 = vmatprep.subr.bf16.mxu0 0
    %2413 = vmatpush1.bf16.msra.mxu0 0
    %2414 = vmatprep.subr.bf16.mxu0 0
    %2415 = vmatpush1.bf16.msra.mxu0 0
    %2416 = vmatprep.subr.bf16.mxu0 0
    %2417 = vmatpush1.bf16.msra.mxu0 0
    %2418 = vmatprep.subr.bf16.mxu0 0
    %2419 = vmatpush1.bf16.msra.mxu0 0
    %2420 = vmatprep.subr.bf16.mxu0 0
    %2421 = vmatpush1.bf16.msra.mxu0 0
    %2422 = vmatprep.subr.bf16.mxu0 0
    %2423 = vmatpush1.bf16.msra.mxu0 0
    %2424 = vmatprep.subr.bf16.mxu0 0
    %2425 = vmatpush1.bf16.msra.mxu0 0
    %2426 = vmatprep.subr.bf16.mxu0 0
    %2427 = vmatpush1.bf16.msra.mxu0 0
    %2428 = vmatprep.subr.bf16.mxu0 0
    %2429 = vmatpush1.bf16.msra.mxu0 0
    %2430 = vmatprep.subr.bf16.mxu0 0
    %2431 = vmatpush1.bf16.msra.mxu0 0
    %2432 = vmatprep.subr.bf16.mxu0 0
    %2433 = vmatpush1.bf16.msra.mxu0 0
    %2434 = vmatprep.mubr.bf16.mxu0 0
    %2435 = vmatmul.mubr.bf16.gmra.mrb[0].mxu0 %v2400
    %v2436 = vpop.f32.mrb[0].mxu0
    %v2437 = vadd.f32 %v2373, %v2436
    %v2438 = vpop.f32.mrb[0].mxu0
    %v2439 = vpop.f32.mrb[0].mxu0
    %v2440 = vadd.f32 %v2373, %v2439
    %v2441 = vpop.f32.mrb[0].mxu0
    %2442 = vdwg.mxu0
    %v2443 = vadd.f32 %v2267, %v2437
    %v2444 = vadd.f32 %v2268, %v2440
    %s2445 = scalar_lea.vmem %s16, 1
    %v2446 = vld [vmem:[%s2445] sm:$0x1]
    %s2447 = scalar_lea.vmem %s17, 1
    %v2448 = vld [vmem:[%s2447] sm:$0x1]
    %v2449 = vsel %vm67, %v2443, 0.0
    %2450 = vadd.xlane.f32.xlu0 %v2449
    %v2451 = vpop.xlane.xlu0 %2450
    %v2452 = vsel %vm67, %v2444, 0.0
    %2453 = vadd.xlane.f32.xlu0 %v2452
    %v2454 = vpop.xlane.xlu0 %2453
    %v2455 = vmul.f32 %v2451, %v74
    %v2456 = vmul.f32 %v2454, %v74
    %v2457 = vsub.f32 %v2443, %v2455
    %v2458 = vsub.f32 %v2444, %v2456
    %v2459 = vmul.f32 %v2457, %v2457
    %v2460 = vmul.f32 %v2458, %v2458
    %v2461 = vsel %vm67, %v2459, 0.0
    %2462 = vadd.xlane.f32.xlu0 %v2461
    %v2463 = vpop.xlane.xlu0 %2462
    %v2464 = vsel %vm67, %v2460, 0.0
    %2465 = vadd.xlane.f32.xlu0 %v2464
    %v2466 = vpop.xlane.xlu0 %2465
    %v2467 = vmul.f32 %v2463, %v74
    %v2468 = vmul.f32 %v2466, %v74
    %v2469 = vadd.f32 %v2467, 1e-12
    %v2470 = vadd.f32 %v2468, 1e-12
    %v2471 = vrsqrt.pop %v2469
    %v2472 = vrsqrt.pop %v2470
    %v2473 = vmul.f32 %v2457, %v2471
    %v2474 = vmul.f32 %v2458, %v2472
    %v2476 = vlaneseq
    %v2477 = vshrl.u32 %v2476, 7
    %v2478 = vsub.s32 0, %v2477
    %v2479 = vrot.slane %v2446, %v2478
    %v2481 = vmul.f32 %v2473, %v2479
    %v2482 = vmul.f32 %v2474, %v2479
    %v2484 = vlaneseq
    %v2485 = vshrl.u32 %v2484, 7
    %v2486 = vsub.s32 0, %v2485
    %v2487 = vrot.slane %v2448, %v2486
    %v2489 = vadd.f32 %v2481, %v2487
    %v2490 = vadd.f32 %v2482, %v2487
    %vm2491 = vcmask 253952
    %2492 = vst.msk [vmem:[#allocation2] sm:$0x1] %vm2491, %v2489
    %2493 = vst.msk [vmem:[#allocation2 + $0x1] sm:$0x1] %vm2491, %v2490
    // Predicated region
    $region74: #{text_encoder_forward.1} parent=1 // pred_check
      _
    $region75: #{text_encoder_forward.1} parent=1 // pred_check_branch
      %2495 = sbr.rel (0) target = $region77
    $region76: #{text_encoder_forward.1} parent=1 // pred_region
      %s2497 = ssub.s32 32, 32
      %2498 = vsyncadd [#allocation3], %s2497
      %s2500 = sshll.u32 [#allocation2], 4
      %s2501 = int_to_ptr.vmem [resolvable:$true] %s2500
      %2503 = dma.vmem_to_hbm [thread:$0]  %s2501, 32, %s18, [#allocation3]
    $region77: #{text_encoder_forward.1} parent=1 // pred_fallthru
      _
    // Predicated region
    $region78: #{text_encoder_forward.1} parent=1 // pred_check
      _
    $region79: #{text_encoder_forward.1} parent=1 // pred_check_branch
      %2505 = sbr.rel (0) target = $region81
    $region80: #{text_encoder_forward.1} parent=1 // pred_region
      %2506 = dma.done [#allocation3], 32
    $region81: #{text_encoder_forward.1} parent=1 // pred_fallthru
      _
    %2507 = vsyncpa [#allocation3], 1

</llo_original>
